<compile_context>
chip_gen: v7x
topology: tpu7x:2x2x1
jax: 0.10.0
libtpu: 0.0.40
codegen_flags: <defaults>
</compile_context>

<pallas_src>
import functools

import numpy as np
import jax
import jax.numpy as jnp
from jax.experimental import pallas as pl
from jax.experimental.pallas import tpu as pltpu

# ------------------------------------------------------------------ configuration
DIM = 2
CHANNELS = 2                 # == hyper_dims[-1] = DIM * hyper_dims_mults[-1]
PRIOR_DIMS = (3, 3, 3)       # FlexiblePrior hidden dims -> chain 1-3-3-3-1
LIK_MIN = 1e-9               # LowerBound used by likelihood()
LANES = 128

# packed per-channel prior parameters (offsets along the PACK axis)
M0, B0, F0 = 0, 3, 6
M1, B1, F1 = 9, 18, 21
M2, B2, F2 = 24, 33, 36
M3, B3, MED = 39, 42, 43
PACK = 44                    # raw pack width (params + medians)
HM0 = 44                     # 0.5*softplus(m0) columns appended by cook_prior_pack
PACK_COOKED = 47

_INV_SQRT2 = 0.7071067811865476


# ------------------------------------------------------------------ shared math
def _std_cdf(z):
    return 0.5 * (1.0 + jax.lax.erf(z * _INV_SQRT2))


# ------------------------------------------------------------------ kernel-side helpers
def _sigmoid_stable(a):
    # one exp + one divide on the EUP, no overflow for large |a|
    e = jnp.exp(-jnp.abs(a))
    r = 1.0 / (1.0 + e)
    return jnp.where(a >= 0.0, r, 1.0 - r)


def _prior_likelihood_k(v32, pk, c, cdt):
    """Factorized (Balle) prior likelihood: sigmoid(chain(v+.5)) - sigmoid(chain(v-.5)).

    The 1-3-3-3-1 cumulative-logit chain (the VALU-bound matvec + tanh work) runs in
    `cdt` (bf16 on v6e/v7x, f32 on v5e).  The final sigmoid / CDF difference / clamp
    stay in f32: the difference of two near-saturated sigmoids is cancellation-
    sensitive and collapses to the 1e-9 clamp with only 8 mantissa bits.
    `pk` is an SMEM ref holding the *cooked* pack (softplus(weights), tanh(factors)
    and 0.5*softplus(w0) precomputed on the host).
    """
    v = v32.astype(cdt)

    def P(i):
        return pk[c, i].astype(cdt)

    # layer 1: a(v +/- 0.5) = a(v) +/- 0.5*softplus(w0)  (precooked scalar)
    h = []
    for j in range(3):
        a = P(M0 + j) * v + P(B0 + j)                       # (T, 128)
        hm = P(HM0 + j)
        aa = jnp.stack([a + hm, a - hm], axis=0)            # (2, T, 128)
        h.append(aa + P(F0 + j) * jnp.tanh(aa))
    for (mo, bo, fo) in ((M1, B1, F1), (M2, B2, F2)):
        hn = []
        for j in range(3):
            a = (P(mo + 3 * j + 0) * h[0]
                 + P(mo + 3 * j + 1) * h[1]
                 + P(mo + 3 * j + 2) * h[2]
                 + P(bo + j))
            hn.append(a + P(fo + j) * jnp.tanh(a))
        h = hn
    logits = (P(M3 + 0) * h[0] + P(M3 + 1) * h[1]
              + P(M3 + 2) * h[2] + P(B3)).astype(jnp.float32)
    cdf = _sigmoid_stable(logits)
    return jnp.maximum(cdf[0] - cdf[1], LIK_MIN)


def _normal_likelihood_k(v, mean, inv_scale_h):
    # Phi(zu) - Phi(zl) factored as 0.5*(erf - erf); inv_scale_h = 1/(scale*sqrt(2)).
    d = jnp.abs(v - mean)
    u = jax.lax.erf((0.5 - d) * inv_scale_h)
    l = jax.lax.erf((-0.5 - d) * inv_scale_h)
    return jnp.maximum(0.5 * (u - l), LIK_MIN)


# ------------------------------------------------------------------ fused Pallas kernel
def _compressor_kernel(x_ref, y_ref, pkx_ref, pky_ref,
                       qlat_ref, qhyp_ref, bppx_ref, bppy_ref, *,
                       tiles_per_split, tile_rows, valid_rows, padded_rows,
                       compute_dtype):
    s = pl.program_id(1)
    t = pl.program_id(2)
    cdt = compute_dtype

    # bpp outputs are resident accumulators across the HW-tile ("arbitrary") axis
    @pl.when(t == 0)
    def _init():
        bppx_ref[...] = jnp.zeros_like(bppx_ref)
        bppy_ref[...] = jnp.zeros_like(bppy_ref)

    # --------------------- x stream: quantize + rates (eval mode) ---------------------
    # quantization / quantized outputs stay in f32 regardless of compute_dtype
    x0 = x_ref[0, 0]                         # (T, 128) dense sublane/lane tile
    x1 = x_ref[0, 1]
    med0 = pkx_ref[0, MED]
    med1 = pkx_ref[1, MED]
    qh0 = jnp.round(x0 - med0) + med0        # quantize(hyper_latent, 'dequantize', medians)
    qh1 = jnp.round(x1 - med1) + med1
    mean_x = qh0                             # chunk(2, 1) of the (identity) hyper decoder
    scale_x = jnp.maximum(qh1, 0.1)          # scale.clamp(min=0.1)
    ql0 = jnp.round(x0 - mean_x) + mean_x    # quantize(latent, 'dequantize', mean)
    ql1 = jnp.round(x1 - mean_x) + mean_x

    qhyp_ref[0, 0] = qh0
    qhyp_ref[0, 1] = qh1
    qlat_ref[0, 0] = ql0
    qlat_ref[0, 1] = ql1

    inv_sx_h = _INV_SQRT2 / scale_x          # one divide per stream, 1/sqrt(2) folded in
    p0 = _prior_likelihood_k(qh0, pkx_ref, 0, cdt)
    p1 = _prior_likelihood_k(qh1, pkx_ref, 1, cdt)
    n0 = _normal_likelihood_k(ql0, mean_x, inv_sx_h)
    n1 = _normal_likelihood_k(ql1, mean_x, inv_sx_h)
    # single fused rate per stream: product floor is 1e-36, still a normal f32
    rate_x = -jnp.log2((p0 * n0) * (p1 * n1))

    # --------------------- y stream: rates on the un-quantized latent -----------------
    y0 = y_ref[0, 0]
    y1 = y_ref[0, 1]
    scale_y = jnp.maximum(y1, 0.1)
    inv_sy_h = _INV_SQRT2 / scale_y
    py0 = _prior_likelihood_k(y0, pky_ref, 0, cdt)
    py1 = _prior_likelihood_k(y1, pky_ref, 1, cdt)
    # mean_y == y0 exactly -> d == 0 -> Phi(.5/s)-Phi(-.5/s) == erf(.5/(s*sqrt(2)))
    ny0 = jnp.maximum(jax.lax.erf(0.5 * inv_sy_h), LIK_MIN)
    ny1 = _normal_likelihood_k(y1, y0, inv_sy_h)
    rate_y = -jnp.log2((py0 * ny0) * (py1 * ny1))

    # --------------------- mask out host-side row padding -----------------------------
    if padded_rows != valid_rows:
        tile_lin = s * tiles_per_split + t
        g = (tile_lin * tile_rows
             + jax.lax.broadcasted_iota(jnp.int32, (tile_rows, LANES), 0))
        keep = g < valid_rows
        rate_x = jnp.where(keep, rate_x, 0.0)
        rate_y = jnp.where(keep, rate_y, 0.0)

    # --------------------- dense (8,128) partial-sum slabs ----------------------------
    if tile_rows % 8 == 0:
        bppx_ref[0] += rate_x.reshape(tile_rows // 8, 8, LANES).sum(axis=0)
        bppy_ref[0] += rate_y.reshape(tile_rows // 8, 8, LANES).sum(axis=0)
    else:
        bppx_ref[0, 0:1, :] += jnp.sum(rate_x, axis=0, keepdims=True)
        bppy_ref[0, 0:1, :] += jnp.sum(rate_y, axis=0, keepdims=True)


# ------------------------------------------------------------------ wrapper helpers
def _default_compute_dtype():
    """bf16 chain on bf16-capable VPU/EUP generations (v6e/v7x), f32 otherwise."""
    try:
        dev = jax.devices()[0]
        if dev.platform != "tpu":
            return jnp.float32
        kind = dev.device_kind.lower()
    except Exception:
        return jnp.float32
    if ("v6" in kind) or ("v7" in kind) or ("trillium" in kind):
        return jnp.bfloat16
    return jnp.float32


def _plan_tiles(rows, max_tile_rows):
    """Return (tile_rows, padded_rows).  Never emits an unbounded monolithic block:
    if no multiple-of-8 tile divides `rows`, rows are padded up to a tile multiple."""
    if rows <= max_tile_rows:
        return rows, rows                      # single full-extent tile
    t_max = max(8, (max_tile_rows // 8) * 8)
    for cand in range(t_max, 7, -8):           # multiples of 8 satisfy the (8,128) rule
        if rows % cand == 0:
            return cand, rows
    padded = ((rows + t_max - 1) // t_max) * t_max
    return t_max, padded


def cook_prior_pack(pack):
    """Hoist parameter-only transcendentals (softplus of weights, tanh of factors) and
    the layer-1 half-offset 0.5*softplus(w0) out of the kernel; inside the kernel they
    are plain SMEM scalars."""
    pk = pack.astype(jnp.float32)
    cooked = pk
    for off, n in ((M0, 3), (M1, 9), (M2, 9), (M3, 3)):
        cooked = cooked.at[:, off:off + n].set(jax.nn.softplus(pk[:, off:off + n]))
    for off, n in ((F0, 3), (F1, 3), (F2, 3)):
        cooked = cooked.at[:, off:off + n].set(jnp.tanh(pk[:, off:off + n]))
    half_m0 = 0.5 * cooked[:, M0:M0 + 3]
    return jnp.concatenate([cooked, half_m0], axis=1)        # (C, PACK_COOKED)


def compressor_forward(input_x, input_y, pack_x, pack_y, *,
                       max_tile_rows=512, compute_dtype=None):
    if compute_dtype is None:
        compute_dtype = _default_compute_dtype()

    B, C, H, W = input_x.shape
    assert C == CHANNELS
    HW = H * W
    # TODO(synk): H*W not divisible by 128 would need lane padding + rate masking.
    assert HW % LANES == 0, "H*W must be a multiple of 128"
    rows = HW // LANES
    T, rows_p = _plan_tiles(rows, max_tile_rows)
    n_tiles = rows_p // T
    # split the tile axis in two for the 2-TC v7x parts (harmless elsewhere)
    n_split = 2 if (n_tiles >= 2 and n_tiles % 2 == 0) else 1
    tps = n_tiles // n_split

    xf = input_x.reshape(B, C, rows, LANES).astype(jnp.float32)
    yf = input_y.reshape(B, C, rows, LANES).astype(jnp.float32)
    if rows_p != rows:
        pad = ((0, 0), (0, 0), (0, rows_p - rows), (0, 0))
        xf = jnp.pad(xf, pad)
        yf = jnp.pad(yf, pad)
    cpx = cook_prior_pack(pack_x)
    cpy = cook_prior_pack(pack_y)

    data_spec = pl.BlockSpec((1, C, T, LANES), lambda b, s, t: (b, 0, s * tps + t, 0))
    pack_spec = pl.BlockSpec((C, PACK_COOKED), lambda b, s, t: (0, 0),
                             memory_space=pltpu.MemorySpace.SMEM)
    bpp_spec = pl.BlockSpec((1, 8, LANES), lambda b, s, t: (b, s, 0))

    kernel = functools.partial(
        _compressor_kernel,
        tiles_per_split=tps, tile_rows=T, valid_rows=rows, padded_rows=rows_p,
        compute_dtype=compute_dtype)

    q_latent, q_hyper, bppx_buf, bppy_buf = pl.pallas_call(
        kernel,
        out_shape=(
            jax.ShapeDtypeStruct((B, C, rows_p, LANES), jnp.float32),   # q_latent
            jax.ShapeDtypeStruct((B, C, rows_p, LANES), jnp.float32),   # q_hyper_latent
            jax.ShapeDtypeStruct((B, n_split * 8, LANES), jnp.float32), # bpp_x partials
            jax.ShapeDtypeStruct((B, n_split * 8, LANES), jnp.float32), # bpp_y partials
        ),
        grid_spec=pltpu.PrefetchScalarGridSpec(
            num_scalar_prefetch=0,
            grid=(B, n_split, tps),
            in_specs=[data_spec, data_spec, pack_spec, pack_spec],
            out_specs=[data_spec, data_spec, bpp_spec, bpp_spec],
        ),
        compiler_params=pltpu.CompilerParams(
            dimension_semantics=("parallel", "parallel", "arbitrary"),
            vmem_limit_bytes=48 * 1024 * 1024,
        ),
    )(xf, yf, cpx, cpy)

    bpp_x = jnp.sum(bppx_buf, axis=(1, 2)) / HW
    bpp_y = jnp.sum(bppy_buf, axis=(1, 2)) / HW
    q_latent = q_latent[:, :, :rows, :].reshape(B, C, H, W)
    q_hyper = q_hyper[:, :, :rows, :].reshape(B, C, H, W)

    # decode_xy / decode_x: dec_xy, dec_y are empty ModuleLists and dec_x is never
    # created by the base class -> empty lists, exactly as the reference forward.
    # TODO(synk): enc_*/dec_*/hyper_* conv stacks are only populated by subclasses
    # (build_network leaves them empty), so they act as identity here.
    return {
        "output": [],
        "output_cond": [],
        "bpp": bpp_x,
        "bpp_y": bpp_y,
        "q_latent": q_latent,
        "q_hyper_latent": q_hyper,
        "output_y": [],
    }


compressor_forward_jit = jax.jit(
    compressor_forward, static_argnames=("max_tile_rows", "compute_dtype"))


# ------------------------------------------------------------------ parameter init
def init_flexible_prior_pack(key, channels, dims=PRIOR_DIMS, init_scale=10.0):
    """Deterministic FlexiblePrior parameters, packed per channel along the PACK axis."""
    filt = (1,) + tuple(dims) + (1,)
    chain = len(filt) - 1
    scale = init_scale ** (1.0 / chain)
    k_bias, k_med = jax.random.split(key)
    bkeys = jax.random.split(k_bias, chain)
    cols = []
    for i in range(chain):
        init = float(np.log(np.expm1(1.0 / scale / filt[i + 1])))
        cols.append(jnp.full((channels, filt[i + 1] * filt[i]), init, jnp.float32))
        cols.append(jax.random.uniform(bkeys[i], (channels, filt[i + 1]),
                                       jnp.float32, -0.5, 0.5))
        if i < chain - 1:
            cols.append(jnp.zeros((channels, filt[i + 1]), jnp.float32))
    cols.append(0.25 * jax.random.normal(k_med, (channels, 1), jnp.float32))  # medians
    pack = jnp.concatenate(cols, axis=1)
    assert pack.shape == (channels, PACK)
    return pack


# ------------------------------------------------------------------ pure-JAX reference
def _col(pk, i):
    return pk[:, i:i + 1]


def _softplus_ref(w):
    return jnp.log1p(jnp.exp(w))


def _sigmoid_ref(a):
    return 1.0 / (1.0 + jnp.exp(-a))


def _prior_logits_ref(v, pk):
    h = []
    for j in range(3):
        a = _softplus_ref(_col(pk, M0 + j)) * v + _col(pk, B0 + j)
        h.append(a + jnp.tanh(_col(pk, F0 + j)) * jnp.tanh(a))
    for (mo, bo, fo) in ((M1, B1, F1), (M2, B2, F2)):
        hn = []
        for j in range(3):
            a = _col(pk, bo + j)
            for k in range(3):
                a = a + _softplus_ref(_col(pk, mo + 3 * j + k)) * h[k]
            hn.append(a + jnp.tanh(_col(pk, fo + j)) * jnp.tanh(a))
        h = hn
    a = _col(pk, B3)
    for k in range(3):
        a = a + _softplus_ref(_col(pk, M3 + k)) * h[k]
    return a


def _prior_likelihood_ref(v, pk):
    upper = _sigmoid_ref(_prior_logits_ref(v + 0.5, pk))
    lower = _sigmoid_ref(_prior_logits_ref(v - 0.5, pk))
    return jnp.maximum(upper - lower, LIK_MIN)


def _normal_likelihood_ref(v, mean, scale):
    d = jnp.abs(v - mean)
    upper = _std_cdf((0.5 - d) / scale)
    lower = _std_cdf((-0.5 - d) / scale)
    return jnp.maximum(upper - lower, LIK_MIN)


def _ref_forward(xf, yf, pack_x, pack_y, H, W):
    B = xf.shape[0]
    half = CHANNELS // 2
    q_lat, q_hyp, bx, by = [], [], [], []
    for b in range(B):
        x, y = xf[b], yf[b]
        med = _col(pack_x, MED)
        qh = jnp.round(x - med) + med
        mean = qh[:half]
        scl = jnp.maximum(qh[half:], 0.1)
        ql = jnp.round(x - mean) + mean
        hr = -jnp.log2(_prior_likelihood_ref(qh, pack_x))
        cr = -jnp.log2(_normal_likelihood_ref(ql, mean, scl))
        bx.append((jnp.sum(hr) + jnp.sum(cr)) / (H * W))
        q_lat.append(ql)
        q_hyp.append(qh)

        mean_y = y[:half]
        scl_y = jnp.maximum(y[half:], 0.1)
        hry = -jnp.log2(_prior_likelihood_ref(y, pack_y))
        cry = -jnp.log2(_normal_likelihood_ref(y, mean_y, scl_y))
        by.append((jnp.sum(hry) + jnp.sum(cry)) / (H * W))
    return jnp.stack(q_lat), jnp.stack(q_hyp), jnp.stack(bx), jnp.stack(by)


def _check(out, input_x, input_y, pack_x, pack_y, H, W, bpp_tol):
    B = input_x.shape[0]
    xf = input_x.reshape(B, CHANNELS, H * W)
    yf = input_y.reshape(B, CHANNELS, H * W)
    ql_ref, qh_ref, bx_ref, by_ref = _ref_forward(xf, yf, pack_x, pack_y, H, W)
    np.testing.assert_allclose(np.asarray(out["q_latent"]).reshape(B, CHANNELS, H * W),
                               np.asarray(ql_ref), rtol=1e-4, atol=1e-4)
    np.testing.assert_allclose(np.asarray(out["q_hyper_latent"]).reshape(B, CHANNELS, H * W),
                               np.asarray(qh_ref), rtol=1e-4, atol=1e-4)
    np.testing.assert_allclose(np.asarray(out["bpp"]), np.asarray(bx_ref),
                               rtol=bpp_tol, atol=bpp_tol)
    np.testing.assert_allclose(np.asarray(out["bpp_y"]), np.asarray(by_ref),
                               rtol=bpp_tol, atol=bpp_tol)


# ------------------------------------------------------------------ main
if __name__ == "__main__":
    key = jax.random.PRNGKey(0)
    kx, ky, kpx, kpy, kx2, ky2, kx3, ky3 = jax.random.split(key, 8)
    B, C = 2, CHANNELS
    pack_x = init_flexible_prior_pack(kpx, C)   # prior_x params + medians
    pack_y = init_flexible_prior_pack(kpy, C)   # prior_y params + medians
    f32 = jnp.float32

    # ---------------- small example (single HW tile per image), f32 ----------------
    H, W = 16, 16
    input_x = 2.0 * jax.random.normal(kx, (B, C, H, W), jnp.float32)
    input_y = 2.0 * jax.random.normal(ky, (B, C, H, W), jnp.float32)
    out = compressor_forward_jit(input_x, input_y, pack_x, pack_y, compute_dtype=f32)
    jax.block_until_ready(out)
    _check(out, input_x, input_y, pack_x, pack_y, H, W, bpp_tol=2e-3)

    # ---------------- larger spatial size: tiled grid + 2-way split axis, f32 ------
    H2, W2 = 64, 32                                   # rows = 16 -> 2 tiles of 8
    input_x2 = 2.0 * jax.random.normal(kx2, (B, C, H2, W2), jnp.float32)
    input_y2 = 2.0 * jax.random.normal(ky2, (B, C, H2, W2), jnp.float32)
    out2 = compressor_forward_jit(input_x2, input_y2, pack_x, pack_y,
                                  max_tile_rows=8, compute_dtype=f32)
    jax.block_until_ready(out2)
    _check(out2, input_x2, input_y2, pack_x, pack_y, H2, W2, bpp_tol=2e-3)

    # ---------------- non-divisible rows: exercises padding + rate masking, f32 ----
    H3, W3 = 16, 80                                   # rows = 10 -> padded to 16
    input_x3 = 2.0 * jax.random.normal(kx3, (B, C, H3, W3), jnp.float32)
    input_y3 = 2.0 * jax.random.normal(ky3, (B, C, H3, W3), jnp.float32)
    out3 = compressor_forward_jit(input_x3, input_y3, pack_x, pack_y,
                                  max_tile_rows=8, compute_dtype=f32)
    jax.block_until_ready(out3)
    _check(out3, input_x3, input_y3, pack_x, pack_y, H3, W3, bpp_tol=2e-3)

    # ---------------- auto compute dtype (bf16 chain on v6e/v7x, f32 on v5e) -------
    out4 = compressor_forward_jit(input_x2, input_y2, pack_x, pack_y)
    jax.block_until_ready(out4)
    _check(out4, input_x2, input_y2, pack_x, pack_y, H2, W2, bpp_tol=5e-2)

    print("KERNEL_OK")
</pallas_src>

<mosaic_0001>
module attributes {stable_mosaic.version = 11 : i64} {
  func.func @_compressor_kernel(%arg0: i32, %arg1: i32, %arg2: i32, %arg3: memref<1x2x2x128xf32, #tpu.memory_space<vmem>>, %arg4: memref<1x2x2x128xf32, #tpu.memory_space<vmem>>, %arg5: memref<2x47xf32, #tpu.memory_space<smem>>, %arg6: memref<2x47xf32, #tpu.memory_space<smem>>, %arg7: memref<1x2x2x128xf32, #tpu.memory_space<vmem>>, %arg8: memref<1x2x2x128xf32, #tpu.memory_space<vmem>>, %arg9: memref<1x8x128xf32, #tpu.memory_space<vmem>>, %arg10: memref<1x8x128xf32, #tpu.memory_space<vmem>>) attributes {dimension_semantics = [#tpu.dimension_semantics<parallel>, #tpu.dimension_semantics<parallel>, #tpu.dimension_semantics<arbitrary>], iteration_bounds = array<i64: 2, 1, 1>, scalar_prefetch = 0 : i64, scratch_operands = 0 : i64, tpu.core_type = #tpu.core_type<tc>, window_params = [{transform_indices = @transform_0, window_bounds = array<i64: 1, 2, 2, 128>}, {transform_indices = @transform_1, window_bounds = array<i64: 1, 2, 2, 128>}, {transform_indices = @transform_2, window_bounds = array<i64: 2, 47>}, {transform_indices = @transform_3, window_bounds = array<i64: 2, 47>}, {transform_indices = @transform_4, window_bounds = array<i64: 1, 2, 2, 128>}, {transform_indices = @transform_5, window_bounds = array<i64: 1, 2, 2, 128>}, {transform_indices = @transform_6, window_bounds = array<i64: 1, 8, 128>}, {transform_indices = @transform_7, window_bounds = array<i64: 1, 8, 128>}]} {
    %c0_i32 = arith.constant 0 : i32
    %0 = arith.cmpi eq, %arg2, %c0_i32 : i32
    %1 = arith.extui %0 : i1 to i32
    %c0_i32_0 = arith.constant 0 : i32
    %2 = arith.cmpi ne, %1, %c0_i32_0 : i32
    scf.if %2 {
      %cst_417 = arith.constant 0.000000e+00 : f32
      %953 = vector.broadcast %cst_417 : f32 to vector<1x8x128xf32>
      %c0_418 = arith.constant 0 : index
      %c0_419 = arith.constant 0 : index
      %c0_420 = arith.constant 0 : index
      %954 = vector.load %arg9[%c0_418, %c0_419, %c0_420] : memref<1x8x128xf32, #tpu.memory_space<vmem>>, vector<1x8x128xf32>
      tpu.vector_store %arg9[%c0_418, %c0_419, %c0_420], %953 {strides = array<i32>} : memref<1x8x128xf32, #tpu.memory_space<vmem>>, vector<1x8x128xf32>,
      %cst_421 = arith.constant 0.000000e+00 : f32
      %955 = vector.broadcast %cst_421 : f32 to vector<1x8x128xf32>
      %c0_422 = arith.constant 0 : index
      %c0_423 = arith.constant 0 : index
      %c0_424 = arith.constant 0 : index
      %956 = vector.load %arg10[%c0_422, %c0_423, %c0_424] : memref<1x8x128xf32, #tpu.memory_space<vmem>>, vector<1x8x128xf32>
      tpu.vector_store %arg10[%c0_422, %c0_423, %c0_424], %955 {strides = array<i32>} : memref<1x8x128xf32, #tpu.memory_space<vmem>>, vector<1x8x128xf32>,
    } else {
    }
    %c0 = arith.constant 0 : index
    %c0_1 = arith.constant 0 : index
    %c0_2 = arith.constant 0 : index
    %c0_3 = arith.constant 0 : index
    %3 = vector.load %arg3[%c0, %c0_1, %c0_2, %c0_3] : memref<1x2x2x128xf32, #tpu.memory_space<vmem>>, vector<1x1x2x128xf32>
    %4 = vector.shape_cast %3 : vector<1x1x2x128xf32> to vector<2x128xf32>
    %c0_4 = arith.constant 0 : index
    %c1 = arith.constant 1 : index
    %c0_5 = arith.constant 0 : index
    %c0_6 = arith.constant 0 : index
    %5 = vector.load %arg3[%c0_4, %c1, %c0_5, %c0_6] : memref<1x2x2x128xf32, #tpu.memory_space<vmem>>, vector<1x1x2x128xf32>
    %6 = vector.shape_cast %5 : vector<1x1x2x128xf32> to vector<2x128xf32>
    %c0_7 = arith.constant 0 : index
    %c43 = arith.constant 43 : index
    %7 = memref.load %arg5[%c0_7, %c43] : memref<2x47xf32, #tpu.memory_space<smem>>
    %c1_8 = arith.constant 1 : index
    %c43_9 = arith.constant 43 : index
    %8 = memref.load %arg5[%c1_8, %c43_9] : memref<2x47xf32, #tpu.memory_space<smem>>
    %9 = vector.broadcast %7 : f32 to vector<2x128xf32>
    %10 = arith.subf %4, %9 : vector<2x128xf32>
    %11 = math.roundeven %10 : vector<2x128xf32>
    %12 = vector.broadcast %7 : f32 to vector<2x128xf32>
    %13 = arith.addf %11, %12 : vector<2x128xf32>
    %14 = vector.broadcast %8 : f32 to vector<2x128xf32>
    %15 = arith.subf %6, %14 : vector<2x128xf32>
    %16 = math.roundeven %15 : vector<2x128xf32>
    %17 = vector.broadcast %8 : f32 to vector<2x128xf32>
    %18 = arith.addf %16, %17 : vector<2x128xf32>
    %cst = arith.constant 1.000000e-01 : f32
    %19 = vector.broadcast %cst : f32 to vector<2x128xf32>
    %20 = arith.maximumf %18, %19 : vector<2x128xf32>
    %21 = arith.subf %4, %13 : vector<2x128xf32>
    %22 = math.roundeven %21 : vector<2x128xf32>
    %23 = arith.addf %22, %13 : vector<2x128xf32>
    %24 = arith.subf %6, %13 : vector<2x128xf32>
    %25 = math.roundeven %24 : vector<2x128xf32>
    %26 = arith.addf %25, %13 : vector<2x128xf32>
    %c0_10 = arith.constant 0 : index
    %c0_11 = arith.constant 0 : index
    %c0_12 = arith.constant 0 : index
    %c0_13 = arith.constant 0 : index
    %27 = vector.load %arg8[%c0_10, %c0_11, %c0_12, %c0_13] : memref<1x2x2x128xf32, #tpu.memory_space<vmem>>, vector<1x1x2x128xf32>
    %28 = vector.shape_cast %27 : vector<1x1x2x128xf32> to vector<2x128xf32>
    %29 = vector.shape_cast %13 : vector<2x128xf32> to vector<1x1x2x128xf32>
    tpu.vector_store %arg8[%c0_10, %c0_11, %c0_12, %c0_13], %29 {strides = array<i32>} : memref<1x2x2x128xf32, #tpu.memory_space<vmem>>, vector<1x1x2x128xf32>,
    %c0_14 = arith.constant 0 : index
    %c1_15 = arith.constant 1 : index
    %c0_16 = arith.constant 0 : index
    %c0_17 = arith.constant 0 : index
    %30 = vector.load %arg8[%c0_14, %c1_15, %c0_16, %c0_17] : memref<1x2x2x128xf32, #tpu.memory_space<vmem>>, vector<1x1x2x128xf32>
    %31 = vector.shape_cast %30 : vector<1x1x2x128xf32> to vector<2x128xf32>
    %32 = vector.shape_cast %18 : vector<2x128xf32> to vector<1x1x2x128xf32>
    tpu.vector_store %arg8[%c0_14, %c1_15, %c0_16, %c0_17], %32 {strides = array<i32>} : memref<1x2x2x128xf32, #tpu.memory_space<vmem>>, vector<1x1x2x128xf32>,
    %c0_18 = arith.constant 0 : index
    %c0_19 = arith.constant 0 : index
    %c0_20 = arith.constant 0 : index
    %c0_21 = arith.constant 0 : index
    %33 = vector.load %arg7[%c0_18, %c0_19, %c0_20, %c0_21] : memref<1x2x2x128xf32, #tpu.memory_space<vmem>>, vector<1x1x2x128xf32>
    %34 = vector.shape_cast %33 : vector<1x1x2x128xf32> to vector<2x128xf32>
    %35 = vector.shape_cast %23 : vector<2x128xf32> to vector<1x1x2x128xf32>
    tpu.vector_store %arg7[%c0_18, %c0_19, %c0_20, %c0_21], %35 {strides = array<i32>} : memref<1x2x2x128xf32, #tpu.memory_space<vmem>>, vector<1x1x2x128xf32>,
    %c0_22 = arith.constant 0 : index
    %c1_23 = arith.constant 1 : index
    %c0_24 = arith.constant 0 : index
    %c0_25 = arith.constant 0 : index
    %36 = vector.load %arg7[%c0_22, %c1_23, %c0_24, %c0_25] : memref<1x2x2x128xf32, #tpu.memory_space<vmem>>, vector<1x1x2x128xf32>
    %37 = vector.shape_cast %36 : vector<1x1x2x128xf32> to vector<2x128xf32>
    %38 = vector.shape_cast %26 : vector<2x128xf32> to vector<1x1x2x128xf32>
    tpu.vector_store %arg7[%c0_22, %c1_23, %c0_24, %c0_25], %38 {strides = array<i32>} : memref<1x2x2x128xf32, #tpu.memory_space<vmem>>, vector<1x1x2x128xf32>,
    %cst_26 = arith.constant 0.707106769 : f32
    %39 = vector.broadcast %cst_26 : f32 to vector<2x128xf32>
    %40 = arith.divf %39, %20 : vector<2x128xf32>
    %c0_27 = arith.constant 0 : index
    %c0_28 = arith.constant 0 : index
    %41 = memref.load %arg5[%c0_27, %c0_28] : memref<2x47xf32, #tpu.memory_space<smem>>
    %42 = vector.broadcast %41 : f32 to vector<2x128xf32>
    %43 = arith.mulf %42, %13 : vector<2x128xf32>
    %c0_29 = arith.constant 0 : index
    %c3 = arith.constant 3 : index
    %44 = memref.load %arg5[%c0_29, %c3] : memref<2x47xf32, #tpu.memory_space<smem>>
    %45 = vector.broadcast %44 : f32 to vector<2x128xf32>
    %46 = arith.addf %43, %45 : vector<2x128xf32>
    %c0_30 = arith.constant 0 : index
    %c44 = arith.constant 44 : index
    %47 = memref.load %arg5[%c0_30, %c44] : memref<2x47xf32, #tpu.memory_space<smem>>
    %48 = vector.broadcast %47 : f32 to vector<2x128xf32>
    %49 = arith.addf %46, %48 : vector<2x128xf32>
    %50 = vector.broadcast %47 : f32 to vector<2x128xf32>
    %51 = arith.subf %46, %50 : vector<2x128xf32>
    %52 = vector.shape_cast %49 : vector<2x128xf32> to vector<1x2x128xf32>
    %53 = vector.shape_cast %51 : vector<2x128xf32> to vector<1x2x128xf32>
    %54 = tpu.concatenate %52, %53 in 0 : vector<1x2x128xf32>, vector<1x2x128xf32> -> vector<2x2x128xf32>
    %c0_31 = arith.constant 0 : index
    %c6 = arith.constant 6 : index
    %55 = memref.load %arg5[%c0_31, %c6] : memref<2x47xf32, #tpu.memory_space<smem>>
    %56 = math.tanh %54 : vector<2x2x128xf32>
    %57 = vector.broadcast %55 : f32 to vector<2x2x128xf32>
    %58 = arith.mulf %57, %56 : vector<2x2x128xf32>
    %59 = arith.addf %54, %58 : vector<2x2x128xf32>
    %c0_32 = arith.constant 0 : index
    %c1_33 = arith.constant 1 : index
    %60 = memref.load %arg5[%c0_32, %c1_33] : memref<2x47xf32, #tpu.memory_space<smem>>
    %61 = vector.broadcast %60 : f32 to vector<2x128xf32>
    %62 = arith.mulf %61, %13 : vector<2x128xf32>
    %c0_34 = arith.constant 0 : index
    %c4 = arith.constant 4 : index
    %63 = memref.load %arg5[%c0_34, %c4] : memref<2x47xf32, #tpu.memory_space<smem>>
    %64 = vector.broadcast %63 : f32 to vector<2x128xf32>
    %65 = arith.addf %62, %64 : vector<2x128xf32>
    %c0_35 = arith.constant 0 : index
    %c45 = arith.constant 45 : index
    %66 = memref.load %arg5[%c0_35, %c45] : memref<2x47xf32, #tpu.memory_space<smem>>
    %67 = vector.broadcast %66 : f32 to vector<2x128xf32>
    %68 = arith.addf %65, %67 : vector<2x128xf32>
    %69 = vector.broadcast %66 : f32 to vector<2x128xf32>
    %70 = arith.subf %65, %69 : vector<2x128xf32>
    %71 = vector.shape_cast %68 : vector<2x128xf32> to vector<1x2x128xf32>
    %72 = vector.shape_cast %70 : vector<2x128xf32> to vector<1x2x128xf32>
    %73 = tpu.concatenate %71, %72 in 0 : vector<1x2x128xf32>, vector<1x2x128xf32> -> vector<2x2x128xf32>
    %c0_36 = arith.constant 0 : index
    %c7 = arith.constant 7 : index
    %74 = memref.load %arg5[%c0_36, %c7] : memref<2x47xf32, #tpu.memory_space<smem>>
    %75 = math.tanh %73 : vector<2x2x128xf32>
    %76 = vector.broadcast %74 : f32 to vector<2x2x128xf32>
    %77 = arith.mulf %76, %75 : vector<2x2x128xf32>
    %78 = arith.addf %73, %77 : vector<2x2x128xf32>
    %c0_37 = arith.constant 0 : index
    %c2 = arith.constant 2 : index
    %79 = memref.load %arg5[%c0_37, %c2] : memref<2x47xf32, #tpu.memory_space<smem>>
    %80 = vector.broadcast %79 : f32 to vector<2x128xf32>
    %81 = arith.mulf %80, %13 : vector<2x128xf32>
    %c0_38 = arith.constant 0 : index
    %c5 = arith.constant 5 : index
    %82 = memref.load %arg5[%c0_38, %c5] : memref<2x47xf32, #tpu.memory_space<smem>>
    %83 = vector.broadcast %82 : f32 to vector<2x128xf32>
    %84 = arith.addf %81, %83 : vector<2x128xf32>
    %c0_39 = arith.constant 0 : index
    %c46 = arith.constant 46 : index
    %85 = memref.load %arg5[%c0_39, %c46] : memref<2x47xf32, #tpu.memory_space<smem>>
    %86 = vector.broadcast %85 : f32 to vector<2x128xf32>
    %87 = arith.addf %84, %86 : vector<2x128xf32>
    %88 = vector.broadcast %85 : f32 to vector<2x128xf32>
    %89 = arith.subf %84, %88 : vector<2x128xf32>
    %90 = vector.shape_cast %87 : vector<2x128xf32> to vector<1x2x128xf32>
    %91 = vector.shape_cast %89 : vector<2x128xf32> to vector<1x2x128xf32>
    %92 = tpu.concatenate %90, %91 in 0 : vector<1x2x128xf32>, vector<1x2x128xf32> -> vector<2x2x128xf32>
    %c0_40 = arith.constant 0 : index
    %c8 = arith.constant 8 : index
    %93 = memref.load %arg5[%c0_40, %c8] : memref<2x47xf32, #tpu.memory_space<smem>>
    %94 = math.tanh %92 : vector<2x2x128xf32>
    %95 = vector.broadcast %93 : f32 to vector<2x2x128xf32>
    %96 = arith.mulf %95, %94 : vector<2x2x128xf32>
    %97 = arith.addf %92, %96 : vector<2x2x128xf32>
    %c0_41 = arith.constant 0 : index
    %c9 = arith.constant 9 : index
    %98 = memref.load %arg5[%c0_41, %c9] : memref<2x47xf32, #tpu.memory_space<smem>>
    %99 = vector.broadcast %98 : f32 to vector<2x2x128xf32>
    %100 = arith.mulf %99, %59 : vector<2x2x128xf32>
    %c0_42 = arith.constant 0 : index
    %c10 = arith.constant 10 : index
    %101 = memref.load %arg5[%c0_42, %c10] : memref<2x47xf32, #tpu.memory_space<smem>>
    %102 = vector.broadcast %101 : f32 to vector<2x2x128xf32>
    %103 = arith.mulf %102, %78 : vector<2x2x128xf32>
    %104 = arith.addf %100, %103 : vector<2x2x128xf32>
    %c0_43 = arith.constant 0 : index
    %c11 = arith.constant 11 : index
    %105 = memref.load %arg5[%c0_43, %c11] : memref<2x47xf32, #tpu.memory_space<smem>>
    %106 = vector.broadcast %105 : f32 to vector<2x2x128xf32>
    %107 = arith.mulf %106, %97 : vector<2x2x128xf32>
    %108 = arith.addf %104, %107 : vector<2x2x128xf32>
    %c0_44 = arith.constant 0 : index
    %c18 = arith.constant 18 : index
    %109 = memref.load %arg5[%c0_44, %c18] : memref<2x47xf32, #tpu.memory_space<smem>>
    %110 = vector.broadcast %109 : f32 to vector<2x2x128xf32>
    %111 = arith.addf %108, %110 : vector<2x2x128xf32>
    %c0_45 = arith.constant 0 : index
    %c21 = arith.constant 21 : index
    %112 = memref.load %arg5[%c0_45, %c21] : memref<2x47xf32, #tpu.memory_space<smem>>
    %113 = math.tanh %111 : vector<2x2x128xf32>
    %114 = vector.broadcast %112 : f32 to vector<2x2x128xf32>
    %115 = arith.mulf %114, %113 : vector<2x2x128xf32>
    %116 = arith.addf %111, %115 : vector<2x2x128xf32>
    %c0_46 = arith.constant 0 : index
    %c12 = arith.constant 12 : index
    %117 = memref.load %arg5[%c0_46, %c12] : memref<2x47xf32, #tpu.memory_space<smem>>
    %118 = vector.broadcast %117 : f32 to vector<2x2x128xf32>
    %119 = arith.mulf %118, %59 : vector<2x2x128xf32>
    %c0_47 = arith.constant 0 : index
    %c13 = arith.constant 13 : index
    %120 = memref.load %arg5[%c0_47, %c13] : memref<2x47xf32, #tpu.memory_space<smem>>
    %121 = vector.broadcast %120 : f32 to vector<2x2x128xf32>
    %122 = arith.mulf %121, %78 : vector<2x2x128xf32>
    %123 = arith.addf %119, %122 : vector<2x2x128xf32>
    %c0_48 = arith.constant 0 : index
    %c14 = arith.constant 14 : index
    %124 = memref.load %arg5[%c0_48, %c14] : memref<2x47xf32, #tpu.memory_space<smem>>
    %125 = vector.broadcast %124 : f32 to vector<2x2x128xf32>
    %126 = arith.mulf %125, %97 : vector<2x2x128xf32>
    %127 = arith.addf %123, %126 : vector<2x2x128xf32>
    %c0_49 = arith.constant 0 : index
    %c19 = arith.constant 19 : index
    %128 = memref.load %arg5[%c0_49, %c19] : memref<2x47xf32, #tpu.memory_space<smem>>
    %129 = vector.broadcast %128 : f32 to vector<2x2x128xf32>
    %130 = arith.addf %127, %129 : vector<2x2x128xf32>
    %c0_50 = arith.constant 0 : index
    %c22 = arith.constant 22 : index
    %131 = memref.load %arg5[%c0_50, %c22] : memref<2x47xf32, #tpu.memory_space<smem>>
    %132 = math.tanh %130 : vector<2x2x128xf32>
    %133 = vector.broadcast %131 : f32 to vector<2x2x128xf32>
    %134 = arith.mulf %133, %132 : vector<2x2x128xf32>
    %135 = arith.addf %130, %134 : vector<2x2x128xf32>
    %c0_51 = arith.constant 0 : index
    %c15 = arith.constant 15 : index
    %136 = memref.load %arg5[%c0_51, %c15] : memref<2x47xf32, #tpu.memory_space<smem>>
    %137 = vector.broadcast %136 : f32 to vector<2x2x128xf32>
    %138 = arith.mulf %137, %59 : vector<2x2x128xf32>
    %c0_52 = arith.constant 0 : index
    %c16 = arith.constant 16 : index
    %139 = memref.load %arg5[%c0_52, %c16] : memref<2x47xf32, #tpu.memory_space<smem>>
    %140 = vector.broadcast %139 : f32 to vector<2x2x128xf32>
    %141 = arith.mulf %140, %78 : vector<2x2x128xf32>
    %142 = arith.addf %138, %141 : vector<2x2x128xf32>
    %c0_53 = arith.constant 0 : index
    %c17 = arith.constant 17 : index
    %143 = memref.load %arg5[%c0_53, %c17] : memref<2x47xf32, #tpu.memory_space<smem>>
    %144 = vector.broadcast %143 : f32 to vector<2x2x128xf32>
    %145 = arith.mulf %144, %97 : vector<2x2x128xf32>
    %146 = arith.addf %142, %145 : vector<2x2x128xf32>
    %c0_54 = arith.constant 0 : index
    %c20 = arith.constant 20 : index
    %147 = memref.load %arg5[%c0_54, %c20] : memref<2x47xf32, #tpu.memory_space<smem>>
    %148 = vector.broadcast %147 : f32 to vector<2x2x128xf32>
    %149 = arith.addf %146, %148 : vector<2x2x128xf32>
    %c0_55 = arith.constant 0 : index
    %c23 = arith.constant 23 : index
    %150 = memref.load %arg5[%c0_55, %c23] : memref<2x47xf32, #tpu.memory_space<smem>>
    %151 = math.tanh %149 : vector<2x2x128xf32>
    %152 = vector.broadcast %150 : f32 to vector<2x2x128xf32>
    %153 = arith.mulf %152, %151 : vector<2x2x128xf32>
    %154 = arith.addf %149, %153 : vector<2x2x128xf32>
    %c0_56 = arith.constant 0 : index
    %c24 = arith.constant 24 : index
    %155 = memref.load %arg5[%c0_56, %c24] : memref<2x47xf32, #tpu.memory_space<smem>>
    %156 = vector.broadcast %155 : f32 to vector<2x2x128xf32>
    %157 = arith.mulf %156, %116 : vector<2x2x128xf32>
    %c0_57 = arith.constant 0 : index
    %c25 = arith.constant 25 : index
    %158 = memref.load %arg5[%c0_57, %c25] : memref<2x47xf32, #tpu.memory_space<smem>>
    %159 = vector.broadcast %158 : f32 to vector<2x2x128xf32>
    %160 = arith.mulf %159, %135 : vector<2x2x128xf32>
    %161 = arith.addf %157, %160 : vector<2x2x128xf32>
    %c0_58 = arith.constant 0 : index
    %c26 = arith.constant 26 : index
    %162 = memref.load %arg5[%c0_58, %c26] : memref<2x47xf32, #tpu.memory_space<smem>>
    %163 = vector.broadcast %162 : f32 to vector<2x2x128xf32>
    %164 = arith.mulf %163, %154 : vector<2x2x128xf32>
    %165 = arith.addf %161, %164 : vector<2x2x128xf32>
    %c0_59 = arith.constant 0 : index
    %c33 = arith.constant 33 : index
    %166 = memref.load %arg5[%c0_59, %c33] : memref<2x47xf32, #tpu.memory_space<smem>>
    %167 = vector.broadcast %166 : f32 to vector<2x2x128xf32>
    %168 = arith.addf %165, %167 : vector<2x2x128xf32>
    %c0_60 = arith.constant 0 : index
    %c36 = arith.constant 36 : index
    %169 = memref.load %arg5[%c0_60, %c36] : memref<2x47xf32, #tpu.memory_space<smem>>
    %170 = math.tanh %168 : vector<2x2x128xf32>
    %171 = vector.broadcast %169 : f32 to vector<2x2x128xf32>
    %172 = arith.mulf %171, %170 : vector<2x2x128xf32>
    %173 = arith.addf %168, %172 : vector<2x2x128xf32>
    %c0_61 = arith.constant 0 : index
    %c27 = arith.constant 27 : index
    %174 = memref.load %arg5[%c0_61, %c27] : memref<2x47xf32, #tpu.memory_space<smem>>
    %175 = vector.broadcast %174 : f32 to vector<2x2x128xf32>
    %176 = arith.mulf %175, %116 : vector<2x2x128xf32>
    %c0_62 = arith.constant 0 : index
    %c28 = arith.constant 28 : index
    %177 = memref.load %arg5[%c0_62, %c28] : memref<2x47xf32, #tpu.memory_space<smem>>
    %178 = vector.broadcast %177 : f32 to vector<2x2x128xf32>
    %179 = arith.mulf %178, %135 : vector<2x2x128xf32>
    %180 = arith.addf %176, %179 : vector<2x2x128xf32>
    %c0_63 = arith.constant 0 : index
    %c29 = arith.constant 29 : index
    %181 = memref.load %arg5[%c0_63, %c29] : memref<2x47xf32, #tpu.memory_space<smem>>
    %182 = vector.broadcast %181 : f32 to vector<2x2x128xf32>
    %183 = arith.mulf %182, %154 : vector<2x2x128xf32>
    %184 = arith.addf %180, %183 : vector<2x2x128xf32>
    %c0_64 = arith.constant 0 : index
    %c34 = arith.constant 34 : index
    %185 = memref.load %arg5[%c0_64, %c34] : memref<2x47xf32, #tpu.memory_space<smem>>
    %186 = vector.broadcast %185 : f32 to vector<2x2x128xf32>
    %187 = arith.addf %184, %186 : vector<2x2x128xf32>
    %c0_65 = arith.constant 0 : index
    %c37 = arith.constant 37 : index
    %188 = memref.load %arg5[%c0_65, %c37] : memref<2x47xf32, #tpu.memory_space<smem>>
    %189 = math.tanh %187 : vector<2x2x128xf32>
    %190 = vector.broadcast %188 : f32 to vector<2x2x128xf32>
    %191 = arith.mulf %190, %189 : vector<2x2x128xf32>
    %192 = arith.addf %187, %191 : vector<2x2x128xf32>
    %c0_66 = arith.constant 0 : index
    %c30 = arith.constant 30 : index
    %193 = memref.load %arg5[%c0_66, %c30] : memref<2x47xf32, #tpu.memory_space<smem>>
    %194 = vector.broadcast %193 : f32 to vector<2x2x128xf32>
    %195 = arith.mulf %194, %116 : vector<2x2x128xf32>
    %c0_67 = arith.constant 0 : index
    %c31 = arith.constant 31 : index
    %196 = memref.load %arg5[%c0_67, %c31] : memref<2x47xf32, #tpu.memory_space<smem>>
    %197 = vector.broadcast %196 : f32 to vector<2x2x128xf32>
    %198 = arith.mulf %197, %135 : vector<2x2x128xf32>
    %199 = arith.addf %195, %198 : vector<2x2x128xf32>
    %c0_68 = arith.constant 0 : index
    %c32 = arith.constant 32 : index
    %200 = memref.load %arg5[%c0_68, %c32] : memref<2x47xf32, #tpu.memory_space<smem>>
    %201 = vector.broadcast %200 : f32 to vector<2x2x128xf32>
    %202 = arith.mulf %201, %154 : vector<2x2x128xf32>
    %203 = arith.addf %199, %202 : vector<2x2x128xf32>
    %c0_69 = arith.constant 0 : index
    %c35 = arith.constant 35 : index
    %204 = memref.load %arg5[%c0_69, %c35] : memref<2x47xf32, #tpu.memory_space<smem>>
    %205 = vector.broadcast %204 : f32 to vector<2x2x128xf32>
    %206 = arith.addf %203, %205 : vector<2x2x128xf32>
    %c0_70 = arith.constant 0 : index
    %c38 = arith.constant 38 : index
    %207 = memref.load %arg5[%c0_70, %c38] : memref<2x47xf32, #tpu.memory_space<smem>>
    %208 = math.tanh %206 : vector<2x2x128xf32>
    %209 = vector.broadcast %207 : f32 to vector<2x2x128xf32>
    %210 = arith.mulf %209, %208 : vector<2x2x128xf32>
    %211 = arith.addf %206, %210 : vector<2x2x128xf32>
    %c0_71 = arith.constant 0 : index
    %c39 = arith.constant 39 : index
    %212 = memref.load %arg5[%c0_71, %c39] : memref<2x47xf32, #tpu.memory_space<smem>>
    %213 = vector.broadcast %212 : f32 to vector<2x2x128xf32>
    %214 = arith.mulf %213, %173 : vector<2x2x128xf32>
    %c0_72 = arith.constant 0 : index
    %c40 = arith.constant 40 : index
    %215 = memref.load %arg5[%c0_72, %c40] : memref<2x47xf32, #tpu.memory_space<smem>>
    %216 = vector.broadcast %215 : f32 to vector<2x2x128xf32>
    %217 = arith.mulf %216, %192 : vector<2x2x128xf32>
    %218 = arith.addf %214, %217 : vector<2x2x128xf32>
    %c0_73 = arith.constant 0 : index
    %c41 = arith.constant 41 : index
    %219 = memref.load %arg5[%c0_73, %c41] : memref<2x47xf32, #tpu.memory_space<smem>>
    %220 = vector.broadcast %219 : f32 to vector<2x2x128xf32>
    %221 = arith.mulf %220, %211 : vector<2x2x128xf32>
    %222 = arith.addf %218, %221 : vector<2x2x128xf32>
    %c0_74 = arith.constant 0 : index
    %c42 = arith.constant 42 : index
    %223 = memref.load %arg5[%c0_74, %c42] : memref<2x47xf32, #tpu.memory_space<smem>>
    %224 = vector.broadcast %223 : f32 to vector<2x2x128xf32>
    %225 = arith.addf %222, %224 : vector<2x2x128xf32>
    %226 = math.absf %225 : vector<2x2x128xf32>
    %cst_75 = arith.constant 0.000000e+00 : f32
    %227 = vector.broadcast %cst_75 : f32 to vector<2x2x128xf32>
    %228 = arith.subf %227, %226 : vector<2x2x128xf32>
    %229 = math.exp %228 : vector<2x2x128xf32>
    %cst_76 = arith.constant 1.000000e+00 : f32
    %230 = vector.broadcast %cst_76 : f32 to vector<2x2x128xf32>
    %231 = arith.addf %230, %229 : vector<2x2x128xf32>
    %cst_77 = arith.constant 1.000000e+00 : f32
    %232 = vector.broadcast %cst_77 : f32 to vector<2x2x128xf32>
    %233 = arith.divf %232, %231 : vector<2x2x128xf32>
    %cst_78 = arith.constant 0.000000e+00 : f32
    %234 = vector.broadcast %cst_78 : f32 to vector<2x2x128xf32>
    %235 = arith.cmpf oge, %225, %234 : vector<2x2x128xf32>
    %cst_79 = arith.constant 1.000000e+00 : f32
    %236 = vector.broadcast %cst_79 : f32 to vector<2x2x128xf32>
    %237 = arith.subf %236, %233 : vector<2x2x128xf32>
    %238 = arith.select %235, %233, %237 : vector<2x2x128xi1>, vector<2x2x128xf32>
    %239 = vector.extract_strided_slice %238 {offsets = [0, 0, 0], sizes = [1, 2, 128], strides = [1, 1, 1]} : vector<2x2x128xf32> to vector<1x2x128xf32>
    %240 = vector.shape_cast %239 : vector<1x2x128xf32> to vector<2x128xf32>
    %241 = vector.extract_strided_slice %238 {offsets = [1, 0, 0], sizes = [1, 2, 128], strides = [1, 1, 1]} : vector<2x2x128xf32> to vector<1x2x128xf32>
    %242 = vector.shape_cast %241 : vector<1x2x128xf32> to vector<2x128xf32>
    %243 = arith.subf %240, %242 : vector<2x128xf32>
    %cst_80 = arith.constant 9.99999971E-10 : f32
    %244 = vector.broadcast %cst_80 : f32 to vector<2x128xf32>
    %245 = arith.maximumf %243, %244 : vector<2x128xf32>
    %c1_81 = arith.constant 1 : index
    %c0_82 = arith.constant 0 : index
    %246 = memref.load %arg5[%c1_81, %c0_82] : memref<2x47xf32, #tpu.memory_space<smem>>
    %247 = vector.broadcast %246 : f32 to vector<2x128xf32>
    %248 = arith.mulf %247, %18 : vector<2x128xf32>
    %c1_83 = arith.constant 1 : index
    %c3_84 = arith.constant 3 : index
    %249 = memref.load %arg5[%c1_83, %c3_84] : memref<2x47xf32, #tpu.memory_space<smem>>
    %250 = vector.broadcast %249 : f32 to vector<2x128xf32>
    %251 = arith.addf %248, %250 : vector<2x128xf32>
    %c1_85 = arith.constant 1 : index
    %c44_86 = arith.constant 44 : index
    %252 = memref.load %arg5[%c1_85, %c44_86] : memref<2x47xf32, #tpu.memory_space<smem>>
    %253 = vector.broadcast %252 : f32 to vector<2x128xf32>
    %254 = arith.addf %251, %253 : vector<2x128xf32>
    %255 = vector.broadcast %252 : f32 to vector<2x128xf32>
    %256 = arith.subf %251, %255 : vector<2x128xf32>
    %257 = vector.shape_cast %254 : vector<2x128xf32> to vector<1x2x128xf32>
    %258 = vector.shape_cast %256 : vector<2x128xf32> to vector<1x2x128xf32>
    %259 = tpu.concatenate %257, %258 in 0 : vector<1x2x128xf32>, vector<1x2x128xf32> -> vector<2x2x128xf32>
    %c1_87 = arith.constant 1 : index
    %c6_88 = arith.constant 6 : index
    %260 = memref.load %arg5[%c1_87, %c6_88] : memref<2x47xf32, #tpu.memory_space<smem>>
    %261 = math.tanh %259 : vector<2x2x128xf32>
    %262 = vector.broadcast %260 : f32 to vector<2x2x128xf32>
    %263 = arith.mulf %262, %261 : vector<2x2x128xf32>
    %264 = arith.addf %259, %263 : vector<2x2x128xf32>
    %c1_89 = arith.constant 1 : index
    %c1_90 = arith.constant 1 : index
    %265 = memref.load %arg5[%c1_89, %c1_90] : memref<2x47xf32, #tpu.memory_space<smem>>
    %266 = vector.broadcast %265 : f32 to vector<2x128xf32>
    %267 = arith.mulf %266, %18 : vector<2x128xf32>
    %c1_91 = arith.constant 1 : index
    %c4_92 = arith.constant 4 : index
    %268 = memref.load %arg5[%c1_91, %c4_92] : memref<2x47xf32, #tpu.memory_space<smem>>
    %269 = vector.broadcast %268 : f32 to vector<2x128xf32>
    %270 = arith.addf %267, %269 : vector<2x128xf32>
    %c1_93 = arith.constant 1 : index
    %c45_94 = arith.constant 45 : index
    %271 = memref.load %arg5[%c1_93, %c45_94] : memref<2x47xf32, #tpu.memory_space<smem>>
    %272 = vector.broadcast %271 : f32 to vector<2x128xf32>
    %273 = arith.addf %270, %272 : vector<2x128xf32>
    %274 = vector.broadcast %271 : f32 to vector<2x128xf32>
    %275 = arith.subf %270, %274 : vector<2x128xf32>
    %276 = vector.shape_cast %273 : vector<2x128xf32> to vector<1x2x128xf32>
    %277 = vector.shape_cast %275 : vector<2x128xf32> to vector<1x2x128xf32>
    %278 = tpu.concatenate %276, %277 in 0 : vector<1x2x128xf32>, vector<1x2x128xf32> -> vector<2x2x128xf32>
    %c1_95 = arith.constant 1 : index
    %c7_96 = arith.constant 7 : index
    %279 = memref.load %arg5[%c1_95, %c7_96] : memref<2x47xf32, #tpu.memory_space<smem>>
    %280 = math.tanh %278 : vector<2x2x128xf32>
    %281 = vector.broadcast %279 : f32 to vector<2x2x128xf32>
    %282 = arith.mulf %281, %280 : vector<2x2x128xf32>
    %283 = arith.addf %278, %282 : vector<2x2x128xf32>
    %c1_97 = arith.constant 1 : index
    %c2_98 = arith.constant 2 : index
    %284 = memref.load %arg5[%c1_97, %c2_98] : memref<2x47xf32, #tpu.memory_space<smem>>
    %285 = vector.broadcast %284 : f32 to vector<2x128xf32>
    %286 = arith.mulf %285, %18 : vector<2x128xf32>
    %c1_99 = arith.constant 1 : index
    %c5_100 = arith.constant 5 : index
    %287 = memref.load %arg5[%c1_99, %c5_100] : memref<2x47xf32, #tpu.memory_space<smem>>
    %288 = vector.broadcast %287 : f32 to vector<2x128xf32>
    %289 = arith.addf %286, %288 : vector<2x128xf32>
    %c1_101 = arith.constant 1 : index
    %c46_102 = arith.constant 46 : index
    %290 = memref.load %arg5[%c1_101, %c46_102] : memref<2x47xf32, #tpu.memory_space<smem>>
    %291 = vector.broadcast %290 : f32 to vector<2x128xf32>
    %292 = arith.addf %289, %291 : vector<2x128xf32>
    %293 = vector.broadcast %290 : f32 to vector<2x128xf32>
    %294 = arith.subf %289, %293 : vector<2x128xf32>
    %295 = vector.shape_cast %292 : vector<2x128xf32> to vector<1x2x128xf32>
    %296 = vector.shape_cast %294 : vector<2x128xf32> to vector<1x2x128xf32>
    %297 = tpu.concatenate %295, %296 in 0 : vector<1x2x128xf32>, vector<1x2x128xf32> -> vector<2x2x128xf32>
    %c1_103 = arith.constant 1 : index
    %c8_104 = arith.constant 8 : index
    %298 = memref.load %arg5[%c1_103, %c8_104] : memref<2x47xf32, #tpu.memory_space<smem>>
    %299 = math.tanh %297 : vector<2x2x128xf32>
    %300 = vector.broadcast %298 : f32 to vector<2x2x128xf32>
    %301 = arith.mulf %300, %299 : vector<2x2x128xf32>
    %302 = arith.addf %297, %301 : vector<2x2x128xf32>
    %c1_105 = arith.constant 1 : index
    %c9_106 = arith.constant 9 : index
    %303 = memref.load %arg5[%c1_105, %c9_106] : memref<2x47xf32, #tpu.memory_space<smem>>
    %304 = vector.broadcast %303 : f32 to vector<2x2x128xf32>
    %305 = arith.mulf %304, %264 : vector<2x2x128xf32>
    %c1_107 = arith.constant 1 : index
    %c10_108 = arith.constant 10 : index
    %306 = memref.load %arg5[%c1_107, %c10_108] : memref<2x47xf32, #tpu.memory_space<smem>>
    %307 = vector.broadcast %306 : f32 to vector<2x2x128xf32>
    %308 = arith.mulf %307, %283 : vector<2x2x128xf32>
    %309 = arith.addf %305, %308 : vector<2x2x128xf32>
    %c1_109 = arith.constant 1 : index
    %c11_110 = arith.constant 11 : index
    %310 = memref.load %arg5[%c1_109, %c11_110] : memref<2x47xf32, #tpu.memory_space<smem>>
    %311 = vector.broadcast %310 : f32 to vector<2x2x128xf32>
    %312 = arith.mulf %311, %302 : vector<2x2x128xf32>
    %313 = arith.addf %309, %312 : vector<2x2x128xf32>
    %c1_111 = arith.constant 1 : index
    %c18_112 = arith.constant 18 : index
    %314 = memref.load %arg5[%c1_111, %c18_112] : memref<2x47xf32, #tpu.memory_space<smem>>
    %315 = vector.broadcast %314 : f32 to vector<2x2x128xf32>
    %316 = arith.addf %313, %315 : vector<2x2x128xf32>
    %c1_113 = arith.constant 1 : index
    %c21_114 = arith.constant 21 : index
    %317 = memref.load %arg5[%c1_113, %c21_114] : memref<2x47xf32, #tpu.memory_space<smem>>
    %318 = math.tanh %316 : vector<2x2x128xf32>
    %319 = vector.broadcast %317 : f32 to vector<2x2x128xf32>
    %320 = arith.mulf %319, %318 : vector<2x2x128xf32>
    %321 = arith.addf %316, %320 : vector<2x2x128xf32>
    %c1_115 = arith.constant 1 : index
    %c12_116 = arith.constant 12 : index
    %322 = memref.load %arg5[%c1_115, %c12_116] : memref<2x47xf32, #tpu.memory_space<smem>>
    %323 = vector.broadcast %322 : f32 to vector<2x2x128xf32>
    %324 = arith.mulf %323, %264 : vector<2x2x128xf32>
    %c1_117 = arith.constant 1 : index
    %c13_118 = arith.constant 13 : index
    %325 = memref.load %arg5[%c1_117, %c13_118] : memref<2x47xf32, #tpu.memory_space<smem>>
    %326 = vector.broadcast %325 : f32 to vector<2x2x128xf32>
    %327 = arith.mulf %326, %283 : vector<2x2x128xf32>
    %328 = arith.addf %324, %327 : vector<2x2x128xf32>
    %c1_119 = arith.constant 1 : index
    %c14_120 = arith.constant 14 : index
    %329 = memref.load %arg5[%c1_119, %c14_120] : memref<2x47xf32, #tpu.memory_space<smem>>
    %330 = vector.broadcast %329 : f32 to vector<2x2x128xf32>
    %331 = arith.mulf %330, %302 : vector<2x2x128xf32>
    %332 = arith.addf %328, %331 : vector<2x2x128xf32>
    %c1_121 = arith.constant 1 : index
    %c19_122 = arith.constant 19 : index
    %333 = memref.load %arg5[%c1_121, %c19_122] : memref<2x47xf32, #tpu.memory_space<smem>>
    %334 = vector.broadcast %333 : f32 to vector<2x2x128xf32>
    %335 = arith.addf %332, %334 : vector<2x2x128xf32>
    %c1_123 = arith.constant 1 : index
    %c22_124 = arith.constant 22 : index
    %336 = memref.load %arg5[%c1_123, %c22_124] : memref<2x47xf32, #tpu.memory_space<smem>>
    %337 = math.tanh %335 : vector<2x2x128xf32>
    %338 = vector.broadcast %336 : f32 to vector<2x2x128xf32>
    %339 = arith.mulf %338, %337 : vector<2x2x128xf32>
    %340 = arith.addf %335, %339 : vector<2x2x128xf32>
    %c1_125 = arith.constant 1 : index
    %c15_126 = arith.constant 15 : index
    %341 = memref.load %arg5[%c1_125, %c15_126] : memref<2x47xf32, #tpu.memory_space<smem>>
    %342 = vector.broadcast %341 : f32 to vector<2x2x128xf32>
    %343 = arith.mulf %342, %264 : vector<2x2x128xf32>
    %c1_127 = arith.constant 1 : index
    %c16_128 = arith.constant 16 : index
    %344 = memref.load %arg5[%c1_127, %c16_128] : memref<2x47xf32, #tpu.memory_space<smem>>
    %345 = vector.broadcast %344 : f32 to vector<2x2x128xf32>
    %346 = arith.mulf %345, %283 : vector<2x2x128xf32>
    %347 = arith.addf %343, %346 : vector<2x2x128xf32>
    %c1_129 = arith.constant 1 : index
    %c17_130 = arith.constant 17 : index
    %348 = memref.load %arg5[%c1_129, %c17_130] : memref<2x47xf32, #tpu.memory_space<smem>>
    %349 = vector.broadcast %348 : f32 to vector<2x2x128xf32>
    %350 = arith.mulf %349, %302 : vector<2x2x128xf32>
    %351 = arith.addf %347, %350 : vector<2x2x128xf32>
    %c1_131 = arith.constant 1 : index
    %c20_132 = arith.constant 20 : index
    %352 = memref.load %arg5[%c1_131, %c20_132] : memref<2x47xf32, #tpu.memory_space<smem>>
    %353 = vector.broadcast %352 : f32 to vector<2x2x128xf32>
    %354 = arith.addf %351, %353 : vector<2x2x128xf32>
    %c1_133 = arith.constant 1 : index
    %c23_134 = arith.constant 23 : index
    %355 = memref.load %arg5[%c1_133, %c23_134] : memref<2x47xf32, #tpu.memory_space<smem>>
    %356 = math.tanh %354 : vector<2x2x128xf32>
    %357 = vector.broadcast %355 : f32 to vector<2x2x128xf32>
    %358 = arith.mulf %357, %356 : vector<2x2x128xf32>
    %359 = arith.addf %354, %358 : vector<2x2x128xf32>
    %c1_135 = arith.constant 1 : index
    %c24_136 = arith.constant 24 : index
    %360 = memref.load %arg5[%c1_135, %c24_136] : memref<2x47xf32, #tpu.memory_space<smem>>
    %361 = vector.broadcast %360 : f32 to vector<2x2x128xf32>
    %362 = arith.mulf %361, %321 : vector<2x2x128xf32>
    %c1_137 = arith.constant 1 : index
    %c25_138 = arith.constant 25 : index
    %363 = memref.load %arg5[%c1_137, %c25_138] : memref<2x47xf32, #tpu.memory_space<smem>>
    %364 = vector.broadcast %363 : f32 to vector<2x2x128xf32>
    %365 = arith.mulf %364, %340 : vector<2x2x128xf32>
    %366 = arith.addf %362, %365 : vector<2x2x128xf32>
    %c1_139 = arith.constant 1 : index
    %c26_140 = arith.constant 26 : index
    %367 = memref.load %arg5[%c1_139, %c26_140] : memref<2x47xf32, #tpu.memory_space<smem>>
    %368 = vector.broadcast %367 : f32 to vector<2x2x128xf32>
    %369 = arith.mulf %368, %359 : vector<2x2x128xf32>
    %370 = arith.addf %366, %369 : vector<2x2x128xf32>
    %c1_141 = arith.constant 1 : index
    %c33_142 = arith.constant 33 : index
    %371 = memref.load %arg5[%c1_141, %c33_142] : memref<2x47xf32, #tpu.memory_space<smem>>
    %372 = vector.broadcast %371 : f32 to vector<2x2x128xf32>
    %373 = arith.addf %370, %372 : vector<2x2x128xf32>
    %c1_143 = arith.constant 1 : index
    %c36_144 = arith.constant 36 : index
    %374 = memref.load %arg5[%c1_143, %c36_144] : memref<2x47xf32, #tpu.memory_space<smem>>
    %375 = math.tanh %373 : vector<2x2x128xf32>
    %376 = vector.broadcast %374 : f32 to vector<2x2x128xf32>
    %377 = arith.mulf %376, %375 : vector<2x2x128xf32>
    %378 = arith.addf %373, %377 : vector<2x2x128xf32>
    %c1_145 = arith.constant 1 : index
    %c27_146 = arith.constant 27 : index
    %379 = memref.load %arg5[%c1_145, %c27_146] : memref<2x47xf32, #tpu.memory_space<smem>>
    %380 = vector.broadcast %379 : f32 to vector<2x2x128xf32>
    %381 = arith.mulf %380, %321 : vector<2x2x128xf32>
    %c1_147 = arith.constant 1 : index
    %c28_148 = arith.constant 28 : index
    %382 = memref.load %arg5[%c1_147, %c28_148] : memref<2x47xf32, #tpu.memory_space<smem>>
    %383 = vector.broadcast %382 : f32 to vector<2x2x128xf32>
    %384 = arith.mulf %383, %340 : vector<2x2x128xf32>
    %385 = arith.addf %381, %384 : vector<2x2x128xf32>
    %c1_149 = arith.constant 1 : index
    %c29_150 = arith.constant 29 : index
    %386 = memref.load %arg5[%c1_149, %c29_150] : memref<2x47xf32, #tpu.memory_space<smem>>
    %387 = vector.broadcast %386 : f32 to vector<2x2x128xf32>
    %388 = arith.mulf %387, %359 : vector<2x2x128xf32>
    %389 = arith.addf %385, %388 : vector<2x2x128xf32>
    %c1_151 = arith.constant 1 : index
    %c34_152 = arith.constant 34 : index
    %390 = memref.load %arg5[%c1_151, %c34_152] : memref<2x47xf32, #tpu.memory_space<smem>>
    %391 = vector.broadcast %390 : f32 to vector<2x2x128xf32>
    %392 = arith.addf %389, %391 : vector<2x2x128xf32>
    %c1_153 = arith.constant 1 : index
    %c37_154 = arith.constant 37 : index
    %393 = memref.load %arg5[%c1_153, %c37_154] : memref<2x47xf32, #tpu.memory_space<smem>>
    %394 = math.tanh %392 : vector<2x2x128xf32>
    %395 = vector.broadcast %393 : f32 to vector<2x2x128xf32>
    %396 = arith.mulf %395, %394 : vector<2x2x128xf32>
    %397 = arith.addf %392, %396 : vector<2x2x128xf32>
    %c1_155 = arith.constant 1 : index
    %c30_156 = arith.constant 30 : index
    %398 = memref.load %arg5[%c1_155, %c30_156] : memref<2x47xf32, #tpu.memory_space<smem>>
    %399 = vector.broadcast %398 : f32 to vector<2x2x128xf32>
    %400 = arith.mulf %399, %321 : vector<2x2x128xf32>
    %c1_157 = arith.constant 1 : index
    %c31_158 = arith.constant 31 : index
    %401 = memref.load %arg5[%c1_157, %c31_158] : memref<2x47xf32, #tpu.memory_space<smem>>
    %402 = vector.broadcast %401 : f32 to vector<2x2x128xf32>
    %403 = arith.mulf %402, %340 : vector<2x2x128xf32>
    %404 = arith.addf %400, %403 : vector<2x2x128xf32>
    %c1_159 = arith.constant 1 : index
    %c32_160 = arith.constant 32 : index
    %405 = memref.load %arg5[%c1_159, %c32_160] : memref<2x47xf32, #tpu.memory_space<smem>>
    %406 = vector.broadcast %405 : f32 to vector<2x2x128xf32>
    %407 = arith.mulf %406, %359 : vector<2x2x128xf32>
    %408 = arith.addf %404, %407 : vector<2x2x128xf32>
    %c1_161 = arith.constant 1 : index
    %c35_162 = arith.constant 35 : index
    %409 = memref.load %arg5[%c1_161, %c35_162] : memref<2x47xf32, #tpu.memory_space<smem>>
    %410 = vector.broadcast %409 : f32 to vector<2x2x128xf32>
    %411 = arith.addf %408, %410 : vector<2x2x128xf32>
    %c1_163 = arith.constant 1 : index
    %c38_164 = arith.constant 38 : index
    %412 = memref.load %arg5[%c1_163, %c38_164] : memref<2x47xf32, #tpu.memory_space<smem>>
    %413 = math.tanh %411 : vector<2x2x128xf32>
    %414 = vector.broadcast %412 : f32 to vector<2x2x128xf32>
    %415 = arith.mulf %414, %413 : vector<2x2x128xf32>
    %416 = arith.addf %411, %415 : vector<2x2x128xf32>
    %c1_165 = arith.constant 1 : index
    %c39_166 = arith.constant 39 : index
    %417 = memref.load %arg5[%c1_165, %c39_166] : memref<2x47xf32, #tpu.memory_space<smem>>
    %418 = vector.broadcast %417 : f32 to vector<2x2x128xf32>
    %419 = arith.mulf %418, %378 : vector<2x2x128xf32>
    %c1_167 = arith.constant 1 : index
    %c40_168 = arith.constant 40 : index
    %420 = memref.load %arg5[%c1_167, %c40_168] : memref<2x47xf32, #tpu.memory_space<smem>>
    %421 = vector.broadcast %420 : f32 to vector<2x2x128xf32>
    %422 = arith.mulf %421, %397 : vector<2x2x128xf32>
    %423 = arith.addf %419, %422 : vector<2x2x128xf32>
    %c1_169 = arith.constant 1 : index
    %c41_170 = arith.constant 41 : index
    %424 = memref.load %arg5[%c1_169, %c41_170] : memref<2x47xf32, #tpu.memory_space<smem>>
    %425 = vector.broadcast %424 : f32 to vector<2x2x128xf32>
    %426 = arith.mulf %425, %416 : vector<2x2x128xf32>
    %427 = arith.addf %423, %426 : vector<2x2x128xf32>
    %c1_171 = arith.constant 1 : index
    %c42_172 = arith.constant 42 : index
    %428 = memref.load %arg5[%c1_171, %c42_172] : memref<2x47xf32, #tpu.memory_space<smem>>
    %429 = vector.broadcast %428 : f32 to vector<2x2x128xf32>
    %430 = arith.addf %427, %429 : vector<2x2x128xf32>
    %431 = math.absf %430 : vector<2x2x128xf32>
    %cst_173 = arith.constant 0.000000e+00 : f32
    %432 = vector.broadcast %cst_173 : f32 to vector<2x2x128xf32>
    %433 = arith.subf %432, %431 : vector<2x2x128xf32>
    %434 = math.exp %433 : vector<2x2x128xf32>
    %cst_174 = arith.constant 1.000000e+00 : f32
    %435 = vector.broadcast %cst_174 : f32 to vector<2x2x128xf32>
    %436 = arith.addf %435, %434 : vector<2x2x128xf32>
    %cst_175 = arith.constant 1.000000e+00 : f32
    %437 = vector.broadcast %cst_175 : f32 to vector<2x2x128xf32>
    %438 = arith.divf %437, %436 : vector<2x2x128xf32>
    %cst_176 = arith.constant 0.000000e+00 : f32
    %439 = vector.broadcast %cst_176 : f32 to vector<2x2x128xf32>
    %440 = arith.cmpf oge, %430, %439 : vector<2x2x128xf32>
    %cst_177 = arith.constant 1.000000e+00 : f32
    %441 = vector.broadcast %cst_177 : f32 to vector<2x2x128xf32>
    %442 = arith.subf %441, %438 : vector<2x2x128xf32>
    %443 = arith.select %440, %438, %442 : vector<2x2x128xi1>, vector<2x2x128xf32>
    %444 = vector.extract_strided_slice %443 {offsets = [0, 0, 0], sizes = [1, 2, 128], strides = [1, 1, 1]} : vector<2x2x128xf32> to vector<1x2x128xf32>
    %445 = vector.shape_cast %444 : vector<1x2x128xf32> to vector<2x128xf32>
    %446 = vector.extract_strided_slice %443 {offsets = [1, 0, 0], sizes = [1, 2, 128], strides = [1, 1, 1]} : vector<2x2x128xf32> to vector<1x2x128xf32>
    %447 = vector.shape_cast %446 : vector<1x2x128xf32> to vector<2x128xf32>
    %448 = arith.subf %445, %447 : vector<2x128xf32>
    %cst_178 = arith.constant 9.99999971E-10 : f32
    %449 = vector.broadcast %cst_178 : f32 to vector<2x128xf32>
    %450 = arith.maximumf %448, %449 : vector<2x128xf32>
    %451 = arith.subf %23, %13 : vector<2x128xf32>
    %452 = math.absf %451 : vector<2x128xf32>
    %cst_179 = arith.constant 5.000000e-01 : f32
    %453 = vector.broadcast %cst_179 : f32 to vector<2x128xf32>
    %454 = arith.subf %453, %452 : vector<2x128xf32>
    %455 = arith.mulf %454, %40 : vector<2x128xf32>
    %456 = math.erf %455 : vector<2x128xf32>
    %cst_180 = arith.constant -5.000000e-01 : f32
    %457 = vector.broadcast %cst_180 : f32 to vector<2x128xf32>
    %458 = arith.subf %457, %452 : vector<2x128xf32>
    %459 = arith.mulf %458, %40 : vector<2x128xf32>
    %460 = math.erf %459 : vector<2x128xf32>
    %461 = arith.subf %456, %460 : vector<2x128xf32>
    %cst_181 = arith.constant 5.000000e-01 : f32
    %462 = vector.broadcast %cst_181 : f32 to vector<2x128xf32>
    %463 = arith.mulf %462, %461 : vector<2x128xf32>
    %cst_182 = arith.constant 9.99999971E-10 : f32
    %464 = vector.broadcast %cst_182 : f32 to vector<2x128xf32>
    %465 = arith.maximumf %463, %464 : vector<2x128xf32>
    %466 = arith.subf %26, %13 : vector<2x128xf32>
    %467 = math.absf %466 : vector<2x128xf32>
    %cst_183 = arith.constant 5.000000e-01 : f32
    %468 = vector.broadcast %cst_183 : f32 to vector<2x128xf32>
    %469 = arith.subf %468, %467 : vector<2x128xf32>
    %470 = arith.mulf %469, %40 : vector<2x128xf32>
    %471 = math.erf %470 : vector<2x128xf32>
    %cst_184 = arith.constant -5.000000e-01 : f32
    %472 = vector.broadcast %cst_184 : f32 to vector<2x128xf32>
    %473 = arith.subf %472, %467 : vector<2x128xf32>
    %474 = arith.mulf %473, %40 : vector<2x128xf32>
    %475 = math.erf %474 : vector<2x128xf32>
    %476 = arith.subf %471, %475 : vector<2x128xf32>
    %cst_185 = arith.constant 5.000000e-01 : f32
    %477 = vector.broadcast %cst_185 : f32 to vector<2x128xf32>
    %478 = arith.mulf %477, %476 : vector<2x128xf32>
    %cst_186 = arith.constant 9.99999971E-10 : f32
    %479 = vector.broadcast %cst_186 : f32 to vector<2x128xf32>
    %480 = arith.maximumf %478, %479 : vector<2x128xf32>
    %481 = arith.mulf %245, %465 : vector<2x128xf32>
    %482 = arith.mulf %450, %480 : vector<2x128xf32>
    %483 = arith.mulf %481, %482 : vector<2x128xf32>
    %484 = math.log %483 : vector<2x128xf32>
    %cst_187 = arith.constant 2.000000e+00 : f32
    %485 = math.log %cst_187 : f32
    %486 = vector.broadcast %485 : f32 to vector<2x128xf32>
    %487 = arith.divf %484, %486 : vector<2x128xf32>
    %cst_188 = arith.constant 0.000000e+00 : f32
    %488 = vector.broadcast %cst_188 : f32 to vector<2x128xf32>
    %489 = arith.subf %488, %487 : vector<2x128xf32>
    %c0_189 = arith.constant 0 : index
    %c0_190 = arith.constant 0 : index
    %c0_191 = arith.constant 0 : index
    %c0_192 = arith.constant 0 : index
    %490 = vector.load %arg4[%c0_189, %c0_190, %c0_191, %c0_192] : memref<1x2x2x128xf32, #tpu.memory_space<vmem>>, vector<1x1x2x128xf32>
    %491 = vector.shape_cast %490 : vector<1x1x2x128xf32> to vector<2x128xf32>
    %c0_193 = arith.constant 0 : index
    %c1_194 = arith.constant 1 : index
    %c0_195 = arith.constant 0 : index
    %c0_196 = arith.constant 0 : index
    %492 = vector.load %arg4[%c0_193, %c1_194, %c0_195, %c0_196] : memref<1x2x2x128xf32, #tpu.memory_space<vmem>>, vector<1x1x2x128xf32>
    %493 = vector.shape_cast %492 : vector<1x1x2x128xf32> to vector<2x128xf32>
    %cst_197 = arith.constant 1.000000e-01 : f32
    %494 = vector.broadcast %cst_197 : f32 to vector<2x128xf32>
    %495 = arith.maximumf %493, %494 : vector<2x128xf32>
    %cst_198 = arith.constant 0.707106769 : f32
    %496 = vector.broadcast %cst_198 : f32 to vector<2x128xf32>
    %497 = arith.divf %496, %495 : vector<2x128xf32>
    %c0_199 = arith.constant 0 : index
    %c0_200 = arith.constant 0 : index
    %498 = memref.load %arg6[%c0_199, %c0_200] : memref<2x47xf32, #tpu.memory_space<smem>>
    %499 = vector.broadcast %498 : f32 to vector<2x128xf32>
    %500 = arith.mulf %499, %491 : vector<2x128xf32>
    %c0_201 = arith.constant 0 : index
    %c3_202 = arith.constant 3 : index
    %501 = memref.load %arg6[%c0_201, %c3_202] : memref<2x47xf32, #tpu.memory_space<smem>>
    %502 = vector.broadcast %501 : f32 to vector<2x128xf32>
    %503 = arith.addf %500, %502 : vector<2x128xf32>
    %c0_203 = arith.constant 0 : index
    %c44_204 = arith.constant 44 : index
    %504 = memref.load %arg6[%c0_203, %c44_204] : memref<2x47xf32, #tpu.memory_space<smem>>
    %505 = vector.broadcast %504 : f32 to vector<2x128xf32>
    %506 = arith.addf %503, %505 : vector<2x128xf32>
    %507 = vector.broadcast %504 : f32 to vector<2x128xf32>
    %508 = arith.subf %503, %507 : vector<2x128xf32>
    %509 = vector.shape_cast %506 : vector<2x128xf32> to vector<1x2x128xf32>
    %510 = vector.shape_cast %508 : vector<2x128xf32> to vector<1x2x128xf32>
    %511 = tpu.concatenate %509, %510 in 0 : vector<1x2x128xf32>, vector<1x2x128xf32> -> vector<2x2x128xf32>
    %c0_205 = arith.constant 0 : index
    %c6_206 = arith.constant 6 : index
    %512 = memref.load %arg6[%c0_205, %c6_206] : memref<2x47xf32, #tpu.memory_space<smem>>
    %513 = math.tanh %511 : vector<2x2x128xf32>
    %514 = vector.broadcast %512 : f32 to vector<2x2x128xf32>
    %515 = arith.mulf %514, %513 : vector<2x2x128xf32>
    %516 = arith.addf %511, %515 : vector<2x2x128xf32>
    %c0_207 = arith.constant 0 : index
    %c1_208 = arith.constant 1 : index
    %517 = memref.load %arg6[%c0_207, %c1_208] : memref<2x47xf32, #tpu.memory_space<smem>>
    %518 = vector.broadcast %517 : f32 to vector<2x128xf32>
    %519 = arith.mulf %518, %491 : vector<2x128xf32>
    %c0_209 = arith.constant 0 : index
    %c4_210 = arith.constant 4 : index
    %520 = memref.load %arg6[%c0_209, %c4_210] : memref<2x47xf32, #tpu.memory_space<smem>>
    %521 = vector.broadcast %520 : f32 to vector<2x128xf32>
    %522 = arith.addf %519, %521 : vector<2x128xf32>
    %c0_211 = arith.constant 0 : index
    %c45_212 = arith.constant 45 : index
    %523 = memref.load %arg6[%c0_211, %c45_212] : memref<2x47xf32, #tpu.memory_space<smem>>
    %524 = vector.broadcast %523 : f32 to vector<2x128xf32>
    %525 = arith.addf %522, %524 : vector<2x128xf32>
    %526 = vector.broadcast %523 : f32 to vector<2x128xf32>
    %527 = arith.subf %522, %526 : vector<2x128xf32>
    %528 = vector.shape_cast %525 : vector<2x128xf32> to vector<1x2x128xf32>
    %529 = vector.shape_cast %527 : vector<2x128xf32> to vector<1x2x128xf32>
    %530 = tpu.concatenate %528, %529 in 0 : vector<1x2x128xf32>, vector<1x2x128xf32> -> vector<2x2x128xf32>
    %c0_213 = arith.constant 0 : index
    %c7_214 = arith.constant 7 : index
    %531 = memref.load %arg6[%c0_213, %c7_214] : memref<2x47xf32, #tpu.memory_space<smem>>
    %532 = math.tanh %530 : vector<2x2x128xf32>
    %533 = vector.broadcast %531 : f32 to vector<2x2x128xf32>
    %534 = arith.mulf %533, %532 : vector<2x2x128xf32>
    %535 = arith.addf %530, %534 : vector<2x2x128xf32>
    %c0_215 = arith.constant 0 : index
    %c2_216 = arith.constant 2 : index
    %536 = memref.load %arg6[%c0_215, %c2_216] : memref<2x47xf32, #tpu.memory_space<smem>>
    %537 = vector.broadcast %536 : f32 to vector<2x128xf32>
    %538 = arith.mulf %537, %491 : vector<2x128xf32>
    %c0_217 = arith.constant 0 : index
    %c5_218 = arith.constant 5 : index
    %539 = memref.load %arg6[%c0_217, %c5_218] : memref<2x47xf32, #tpu.memory_space<smem>>
    %540 = vector.broadcast %539 : f32 to vector<2x128xf32>
    %541 = arith.addf %538, %540 : vector<2x128xf32>
    %c0_219 = arith.constant 0 : index
    %c46_220 = arith.constant 46 : index
    %542 = memref.load %arg6[%c0_219, %c46_220] : memref<2x47xf32, #tpu.memory_space<smem>>
    %543 = vector.broadcast %542 : f32 to vector<2x128xf32>
    %544 = arith.addf %541, %543 : vector<2x128xf32>
    %545 = vector.broadcast %542 : f32 to vector<2x128xf32>
    %546 = arith.subf %541, %545 : vector<2x128xf32>
    %547 = vector.shape_cast %544 : vector<2x128xf32> to vector<1x2x128xf32>
    %548 = vector.shape_cast %546 : vector<2x128xf32> to vector<1x2x128xf32>
    %549 = tpu.concatenate %547, %548 in 0 : vector<1x2x128xf32>, vector<1x2x128xf32> -> vector<2x2x128xf32>
    %c0_221 = arith.constant 0 : index
    %c8_222 = arith.constant 8 : index
    %550 = memref.load %arg6[%c0_221, %c8_222] : memref<2x47xf32, #tpu.memory_space<smem>>
    %551 = math.tanh %549 : vector<2x2x128xf32>
    %552 = vector.broadcast %550 : f32 to vector<2x2x128xf32>
    %553 = arith.mulf %552, %551 : vector<2x2x128xf32>
    %554 = arith.addf %549, %553 : vector<2x2x128xf32>
    %c0_223 = arith.constant 0 : index
    %c9_224 = arith.constant 9 : index
    %555 = memref.load %arg6[%c0_223, %c9_224] : memref<2x47xf32, #tpu.memory_space<smem>>
    %556 = vector.broadcast %555 : f32 to vector<2x2x128xf32>
    %557 = arith.mulf %556, %516 : vector<2x2x128xf32>
    %c0_225 = arith.constant 0 : index
    %c10_226 = arith.constant 10 : index
    %558 = memref.load %arg6[%c0_225, %c10_226] : memref<2x47xf32, #tpu.memory_space<smem>>
    %559 = vector.broadcast %558 : f32 to vector<2x2x128xf32>
    %560 = arith.mulf %559, %535 : vector<2x2x128xf32>
    %561 = arith.addf %557, %560 : vector<2x2x128xf32>
    %c0_227 = arith.constant 0 : index
    %c11_228 = arith.constant 11 : index
    %562 = memref.load %arg6[%c0_227, %c11_228] : memref<2x47xf32, #tpu.memory_space<smem>>
    %563 = vector.broadcast %562 : f32 to vector<2x2x128xf32>
    %564 = arith.mulf %563, %554 : vector<2x2x128xf32>
    %565 = arith.addf %561, %564 : vector<2x2x128xf32>
    %c0_229 = arith.constant 0 : index
    %c18_230 = arith.constant 18 : index
    %566 = memref.load %arg6[%c0_229, %c18_230] : memref<2x47xf32, #tpu.memory_space<smem>>
    %567 = vector.broadcast %566 : f32 to vector<2x2x128xf32>
    %568 = arith.addf %565, %567 : vector<2x2x128xf32>
    %c0_231 = arith.constant 0 : index
    %c21_232 = arith.constant 21 : index
    %569 = memref.load %arg6[%c0_231, %c21_232] : memref<2x47xf32, #tpu.memory_space<smem>>
    %570 = math.tanh %568 : vector<2x2x128xf32>
    %571 = vector.broadcast %569 : f32 to vector<2x2x128xf32>
    %572 = arith.mulf %571, %570 : vector<2x2x128xf32>
    %573 = arith.addf %568, %572 : vector<2x2x128xf32>
    %c0_233 = arith.constant 0 : index
    %c12_234 = arith.constant 12 : index
    %574 = memref.load %arg6[%c0_233, %c12_234] : memref<2x47xf32, #tpu.memory_space<smem>>
    %575 = vector.broadcast %574 : f32 to vector<2x2x128xf32>
    %576 = arith.mulf %575, %516 : vector<2x2x128xf32>
    %c0_235 = arith.constant 0 : index
    %c13_236 = arith.constant 13 : index
    %577 = memref.load %arg6[%c0_235, %c13_236] : memref<2x47xf32, #tpu.memory_space<smem>>
    %578 = vector.broadcast %577 : f32 to vector<2x2x128xf32>
    %579 = arith.mulf %578, %535 : vector<2x2x128xf32>
    %580 = arith.addf %576, %579 : vector<2x2x128xf32>
    %c0_237 = arith.constant 0 : index
    %c14_238 = arith.constant 14 : index
    %581 = memref.load %arg6[%c0_237, %c14_238] : memref<2x47xf32, #tpu.memory_space<smem>>
    %582 = vector.broadcast %581 : f32 to vector<2x2x128xf32>
    %583 = arith.mulf %582, %554 : vector<2x2x128xf32>
    %584 = arith.addf %580, %583 : vector<2x2x128xf32>
    %c0_239 = arith.constant 0 : index
    %c19_240 = arith.constant 19 : index
    %585 = memref.load %arg6[%c0_239, %c19_240] : memref<2x47xf32, #tpu.memory_space<smem>>
    %586 = vector.broadcast %585 : f32 to vector<2x2x128xf32>
    %587 = arith.addf %584, %586 : vector<2x2x128xf32>
    %c0_241 = arith.constant 0 : index
    %c22_242 = arith.constant 22 : index
    %588 = memref.load %arg6[%c0_241, %c22_242] : memref<2x47xf32, #tpu.memory_space<smem>>
    %589 = math.tanh %587 : vector<2x2x128xf32>
    %590 = vector.broadcast %588 : f32 to vector<2x2x128xf32>
    %591 = arith.mulf %590, %589 : vector<2x2x128xf32>
    %592 = arith.addf %587, %591 : vector<2x2x128xf32>
    %c0_243 = arith.constant 0 : index
    %c15_244 = arith.constant 15 : index
    %593 = memref.load %arg6[%c0_243, %c15_244] : memref<2x47xf32, #tpu.memory_space<smem>>
    %594 = vector.broadcast %593 : f32 to vector<2x2x128xf32>
    %595 = arith.mulf %594, %516 : vector<2x2x128xf32>
    %c0_245 = arith.constant 0 : index
    %c16_246 = arith.constant 16 : index
    %596 = memref.load %arg6[%c0_245, %c16_246] : memref<2x47xf32, #tpu.memory_space<smem>>
    %597 = vector.broadcast %596 : f32 to vector<2x2x128xf32>
    %598 = arith.mulf %597, %535 : vector<2x2x128xf32>
    %599 = arith.addf %595, %598 : vector<2x2x128xf32>
    %c0_247 = arith.constant 0 : index
    %c17_248 = arith.constant 17 : index
    %600 = memref.load %arg6[%c0_247, %c17_248] : memref<2x47xf32, #tpu.memory_space<smem>>
    %601 = vector.broadcast %600 : f32 to vector<2x2x128xf32>
    %602 = arith.mulf %601, %554 : vector<2x2x128xf32>
    %603 = arith.addf %599, %602 : vector<2x2x128xf32>
    %c0_249 = arith.constant 0 : index
    %c20_250 = arith.constant 20 : index
    %604 = memref.load %arg6[%c0_249, %c20_250] : memref<2x47xf32, #tpu.memory_space<smem>>
    %605 = vector.broadcast %604 : f32 to vector<2x2x128xf32>
    %606 = arith.addf %603, %605 : vector<2x2x128xf32>
    %c0_251 = arith.constant 0 : index
    %c23_252 = arith.constant 23 : index
    %607 = memref.load %arg6[%c0_251, %c23_252] : memref<2x47xf32, #tpu.memory_space<smem>>
    %608 = math.tanh %606 : vector<2x2x128xf32>
    %609 = vector.broadcast %607 : f32 to vector<2x2x128xf32>
    %610 = arith.mulf %609, %608 : vector<2x2x128xf32>
    %611 = arith.addf %606, %610 : vector<2x2x128xf32>
    %c0_253 = arith.constant 0 : index
    %c24_254 = arith.constant 24 : index
    %612 = memref.load %arg6[%c0_253, %c24_254] : memref<2x47xf32, #tpu.memory_space<smem>>
    %613 = vector.broadcast %612 : f32 to vector<2x2x128xf32>
    %614 = arith.mulf %613, %573 : vector<2x2x128xf32>
    %c0_255 = arith.constant 0 : index
    %c25_256 = arith.constant 25 : index
    %615 = memref.load %arg6[%c0_255, %c25_256] : memref<2x47xf32, #tpu.memory_space<smem>>
    %616 = vector.broadcast %615 : f32 to vector<2x2x128xf32>
    %617 = arith.mulf %616, %592 : vector<2x2x128xf32>
    %618 = arith.addf %614, %617 : vector<2x2x128xf32>
    %c0_257 = arith.constant 0 : index
    %c26_258 = arith.constant 26 : index
    %619 = memref.load %arg6[%c0_257, %c26_258] : memref<2x47xf32, #tpu.memory_space<smem>>
    %620 = vector.broadcast %619 : f32 to vector<2x2x128xf32>
    %621 = arith.mulf %620, %611 : vector<2x2x128xf32>
    %622 = arith.addf %618, %621 : vector<2x2x128xf32>
    %c0_259 = arith.constant 0 : index
    %c33_260 = arith.constant 33 : index
    %623 = memref.load %arg6[%c0_259, %c33_260] : memref<2x47xf32, #tpu.memory_space<smem>>
    %624 = vector.broadcast %623 : f32 to vector<2x2x128xf32>
    %625 = arith.addf %622, %624 : vector<2x2x128xf32>
    %c0_261 = arith.constant 0 : index
    %c36_262 = arith.constant 36 : index
    %626 = memref.load %arg6[%c0_261, %c36_262] : memref<2x47xf32, #tpu.memory_space<smem>>
    %627 = math.tanh %625 : vector<2x2x128xf32>
    %628 = vector.broadcast %626 : f32 to vector<2x2x128xf32>
    %629 = arith.mulf %628, %627 : vector<2x2x128xf32>
    %630 = arith.addf %625, %629 : vector<2x2x128xf32>
    %c0_263 = arith.constant 0 : index
    %c27_264 = arith.constant 27 : index
    %631 = memref.load %arg6[%c0_263, %c27_264] : memref<2x47xf32, #tpu.memory_space<smem>>
    %632 = vector.broadcast %631 : f32 to vector<2x2x128xf32>
    %633 = arith.mulf %632, %573 : vector<2x2x128xf32>
    %c0_265 = arith.constant 0 : index
    %c28_266 = arith.constant 28 : index
    %634 = memref.load %arg6[%c0_265, %c28_266] : memref<2x47xf32, #tpu.memory_space<smem>>
    %635 = vector.broadcast %634 : f32 to vector<2x2x128xf32>
    %636 = arith.mulf %635, %592 : vector<2x2x128xf32>
    %637 = arith.addf %633, %636 : vector<2x2x128xf32>
    %c0_267 = arith.constant 0 : index
    %c29_268 = arith.constant 29 : index
    %638 = memref.load %arg6[%c0_267, %c29_268] : memref<2x47xf32, #tpu.memory_space<smem>>
    %639 = vector.broadcast %638 : f32 to vector<2x2x128xf32>
    %640 = arith.mulf %639, %611 : vector<2x2x128xf32>
    %641 = arith.addf %637, %640 : vector<2x2x128xf32>
    %c0_269 = arith.constant 0 : index
    %c34_270 = arith.constant 34 : index
    %642 = memref.load %arg6[%c0_269, %c34_270] : memref<2x47xf32, #tpu.memory_space<smem>>
    %643 = vector.broadcast %642 : f32 to vector<2x2x128xf32>
    %644 = arith.addf %641, %643 : vector<2x2x128xf32>
    %c0_271 = arith.constant 0 : index
    %c37_272 = arith.constant 37 : index
    %645 = memref.load %arg6[%c0_271, %c37_272] : memref<2x47xf32, #tpu.memory_space<smem>>
    %646 = math.tanh %644 : vector<2x2x128xf32>
    %647 = vector.broadcast %645 : f32 to vector<2x2x128xf32>
    %648 = arith.mulf %647, %646 : vector<2x2x128xf32>
    %649 = arith.addf %644, %648 : vector<2x2x128xf32>
    %c0_273 = arith.constant 0 : index
    %c30_274 = arith.constant 30 : index
    %650 = memref.load %arg6[%c0_273, %c30_274] : memref<2x47xf32, #tpu.memory_space<smem>>
    %651 = vector.broadcast %650 : f32 to vector<2x2x128xf32>
    %652 = arith.mulf %651, %573 : vector<2x2x128xf32>
    %c0_275 = arith.constant 0 : index
    %c31_276 = arith.constant 31 : index
    %653 = memref.load %arg6[%c0_275, %c31_276] : memref<2x47xf32, #tpu.memory_space<smem>>
    %654 = vector.broadcast %653 : f32 to vector<2x2x128xf32>
    %655 = arith.mulf %654, %592 : vector<2x2x128xf32>
    %656 = arith.addf %652, %655 : vector<2x2x128xf32>
    %c0_277 = arith.constant 0 : index
    %c32_278 = arith.constant 32 : index
    %657 = memref.load %arg6[%c0_277, %c32_278] : memref<2x47xf32, #tpu.memory_space<smem>>
    %658 = vector.broadcast %657 : f32 to vector<2x2x128xf32>
    %659 = arith.mulf %658, %611 : vector<2x2x128xf32>
    %660 = arith.addf %656, %659 : vector<2x2x128xf32>
    %c0_279 = arith.constant 0 : index
    %c35_280 = arith.constant 35 : index
    %661 = memref.load %arg6[%c0_279, %c35_280] : memref<2x47xf32, #tpu.memory_space<smem>>
    %662 = vector.broadcast %661 : f32 to vector<2x2x128xf32>
    %663 = arith.addf %660, %662 : vector<2x2x128xf32>
    %c0_281 = arith.constant 0 : index
    %c38_282 = arith.constant 38 : index
    %664 = memref.load %arg6[%c0_281, %c38_282] : memref<2x47xf32, #tpu.memory_space<smem>>
    %665 = math.tanh %663 : vector<2x2x128xf32>
    %666 = vector.broadcast %664 : f32 to vector<2x2x128xf32>
    %667 = arith.mulf %666, %665 : vector<2x2x128xf32>
    %668 = arith.addf %663, %667 : vector<2x2x128xf32>
    %c0_283 = arith.constant 0 : index
    %c39_284 = arith.constant 39 : index
    %669 = memref.load %arg6[%c0_283, %c39_284] : memref<2x47xf32, #tpu.memory_space<smem>>
    %670 = vector.broadcast %669 : f32 to vector<2x2x128xf32>
    %671 = arith.mulf %670, %630 : vector<2x2x128xf32>
    %c0_285 = arith.constant 0 : index
    %c40_286 = arith.constant 40 : index
    %672 = memref.load %arg6[%c0_285, %c40_286] : memref<2x47xf32, #tpu.memory_space<smem>>
    %673 = vector.broadcast %672 : f32 to vector<2x2x128xf32>
    %674 = arith.mulf %673, %649 : vector<2x2x128xf32>
    %675 = arith.addf %671, %674 : vector<2x2x128xf32>
    %c0_287 = arith.constant 0 : index
    %c41_288 = arith.constant 41 : index
    %676 = memref.load %arg6[%c0_287, %c41_288] : memref<2x47xf32, #tpu.memory_space<smem>>
    %677 = vector.broadcast %676 : f32 to vector<2x2x128xf32>
    %678 = arith.mulf %677, %668 : vector<2x2x128xf32>
    %679 = arith.addf %675, %678 : vector<2x2x128xf32>
    %c0_289 = arith.constant 0 : index
    %c42_290 = arith.constant 42 : index
    %680 = memref.load %arg6[%c0_289, %c42_290] : memref<2x47xf32, #tpu.memory_space<smem>>
    %681 = vector.broadcast %680 : f32 to vector<2x2x128xf32>
    %682 = arith.addf %679, %681 : vector<2x2x128xf32>
    %683 = math.absf %682 : vector<2x2x128xf32>
    %cst_291 = arith.constant 0.000000e+00 : f32
    %684 = vector.broadcast %cst_291 : f32 to vector<2x2x128xf32>
    %685 = arith.subf %684, %683 : vector<2x2x128xf32>
    %686 = math.exp %685 : vector<2x2x128xf32>
    %cst_292 = arith.constant 1.000000e+00 : f32
    %687 = vector.broadcast %cst_292 : f32 to vector<2x2x128xf32>
    %688 = arith.addf %687, %686 : vector<2x2x128xf32>
    %cst_293 = arith.constant 1.000000e+00 : f32
    %689 = vector.broadcast %cst_293 : f32 to vector<2x2x128xf32>
    %690 = arith.divf %689, %688 : vector<2x2x128xf32>
    %cst_294 = arith.constant 0.000000e+00 : f32
    %691 = vector.broadcast %cst_294 : f32 to vector<2x2x128xf32>
    %692 = arith.cmpf oge, %682, %691 : vector<2x2x128xf32>
    %cst_295 = arith.constant 1.000000e+00 : f32
    %693 = vector.broadcast %cst_295 : f32 to vector<2x2x128xf32>
    %694 = arith.subf %693, %690 : vector<2x2x128xf32>
    %695 = arith.select %692, %690, %694 : vector<2x2x128xi1>, vector<2x2x128xf32>
    %696 = vector.extract_strided_slice %695 {offsets = [0, 0, 0], sizes = [1, 2, 128], strides = [1, 1, 1]} : vector<2x2x128xf32> to vector<1x2x128xf32>
    %697 = vector.shape_cast %696 : vector<1x2x128xf32> to vector<2x128xf32>
    %698 = vector.extract_strided_slice %695 {offsets = [1, 0, 0], sizes = [1, 2, 128], strides = [1, 1, 1]} : vector<2x2x128xf32> to vector<1x2x128xf32>
    %699 = vector.shape_cast %698 : vector<1x2x128xf32> to vector<2x128xf32>
    %700 = arith.subf %697, %699 : vector<2x128xf32>
    %cst_296 = arith.constant 9.99999971E-10 : f32
    %701 = vector.broadcast %cst_296 : f32 to vector<2x128xf32>
    %702 = arith.maximumf %700, %701 : vector<2x128xf32>
    %c1_297 = arith.constant 1 : index
    %c0_298 = arith.constant 0 : index
    %703 = memref.load %arg6[%c1_297, %c0_298] : memref<2x47xf32, #tpu.memory_space<smem>>
    %704 = vector.broadcast %703 : f32 to vector<2x128xf32>
    %705 = arith.mulf %704, %493 : vector<2x128xf32>
    %c1_299 = arith.constant 1 : index
    %c3_300 = arith.constant 3 : index
    %706 = memref.load %arg6[%c1_299, %c3_300] : memref<2x47xf32, #tpu.memory_space<smem>>
    %707 = vector.broadcast %706 : f32 to vector<2x128xf32>
    %708 = arith.addf %705, %707 : vector<2x128xf32>
    %c1_301 = arith.constant 1 : index
    %c44_302 = arith.constant 44 : index
    %709 = memref.load %arg6[%c1_301, %c44_302] : memref<2x47xf32, #tpu.memory_space<smem>>
    %710 = vector.broadcast %709 : f32 to vector<2x128xf32>
    %711 = arith.addf %708, %710 : vector<2x128xf32>
    %712 = vector.broadcast %709 : f32 to vector<2x128xf32>
    %713 = arith.subf %708, %712 : vector<2x128xf32>
    %714 = vector.shape_cast %711 : vector<2x128xf32> to vector<1x2x128xf32>
    %715 = vector.shape_cast %713 : vector<2x128xf32> to vector<1x2x128xf32>
    %716 = tpu.concatenate %714, %715 in 0 : vector<1x2x128xf32>, vector<1x2x128xf32> -> vector<2x2x128xf32>
    %c1_303 = arith.constant 1 : index
    %c6_304 = arith.constant 6 : index
    %717 = memref.load %arg6[%c1_303, %c6_304] : memref<2x47xf32, #tpu.memory_space<smem>>
    %718 = math.tanh %716 : vector<2x2x128xf32>
    %719 = vector.broadcast %717 : f32 to vector<2x2x128xf32>
    %720 = arith.mulf %719, %718 : vector<2x2x128xf32>
    %721 = arith.addf %716, %720 : vector<2x2x128xf32>
    %c1_305 = arith.constant 1 : index
    %c1_306 = arith.constant 1 : index
    %722 = memref.load %arg6[%c1_305, %c1_306] : memref<2x47xf32, #tpu.memory_space<smem>>
    %723 = vector.broadcast %722 : f32 to vector<2x128xf32>
    %724 = arith.mulf %723, %493 : vector<2x128xf32>
    %c1_307 = arith.constant 1 : index
    %c4_308 = arith.constant 4 : index
    %725 = memref.load %arg6[%c1_307, %c4_308] : memref<2x47xf32, #tpu.memory_space<smem>>
    %726 = vector.broadcast %725 : f32 to vector<2x128xf32>
    %727 = arith.addf %724, %726 : vector<2x128xf32>
    %c1_309 = arith.constant 1 : index
    %c45_310 = arith.constant 45 : index
    %728 = memref.load %arg6[%c1_309, %c45_310] : memref<2x47xf32, #tpu.memory_space<smem>>
    %729 = vector.broadcast %728 : f32 to vector<2x128xf32>
    %730 = arith.addf %727, %729 : vector<2x128xf32>
    %731 = vector.broadcast %728 : f32 to vector<2x128xf32>
    %732 = arith.subf %727, %731 : vector<2x128xf32>
    %733 = vector.shape_cast %730 : vector<2x128xf32> to vector<1x2x128xf32>
    %734 = vector.shape_cast %732 : vector<2x128xf32> to vector<1x2x128xf32>
    %735 = tpu.concatenate %733, %734 in 0 : vector<1x2x128xf32>, vector<1x2x128xf32> -> vector<2x2x128xf32>
    %c1_311 = arith.constant 1 : index
    %c7_312 = arith.constant 7 : index
    %736 = memref.load %arg6[%c1_311, %c7_312] : memref<2x47xf32, #tpu.memory_space<smem>>
    %737 = math.tanh %735 : vector<2x2x128xf32>
    %738 = vector.broadcast %736 : f32 to vector<2x2x128xf32>
    %739 = arith.mulf %738, %737 : vector<2x2x128xf32>
    %740 = arith.addf %735, %739 : vector<2x2x128xf32>
    %c1_313 = arith.constant 1 : index
    %c2_314 = arith.constant 2 : index
    %741 = memref.load %arg6[%c1_313, %c2_314] : memref<2x47xf32, #tpu.memory_space<smem>>
    %742 = vector.broadcast %741 : f32 to vector<2x128xf32>
    %743 = arith.mulf %742, %493 : vector<2x128xf32>
    %c1_315 = arith.constant 1 : index
    %c5_316 = arith.constant 5 : index
    %744 = memref.load %arg6[%c1_315, %c5_316] : memref<2x47xf32, #tpu.memory_space<smem>>
    %745 = vector.broadcast %744 : f32 to vector<2x128xf32>
    %746 = arith.addf %743, %745 : vector<2x128xf32>
    %c1_317 = arith.constant 1 : index
    %c46_318 = arith.constant 46 : index
    %747 = memref.load %arg6[%c1_317, %c46_318] : memref<2x47xf32, #tpu.memory_space<smem>>
    %748 = vector.broadcast %747 : f32 to vector<2x128xf32>
    %749 = arith.addf %746, %748 : vector<2x128xf32>
    %750 = vector.broadcast %747 : f32 to vector<2x128xf32>
    %751 = arith.subf %746, %750 : vector<2x128xf32>
    %752 = vector.shape_cast %749 : vector<2x128xf32> to vector<1x2x128xf32>
    %753 = vector.shape_cast %751 : vector<2x128xf32> to vector<1x2x128xf32>
    %754 = tpu.concatenate %752, %753 in 0 : vector<1x2x128xf32>, vector<1x2x128xf32> -> vector<2x2x128xf32>
    %c1_319 = arith.constant 1 : index
    %c8_320 = arith.constant 8 : index
    %755 = memref.load %arg6[%c1_319, %c8_320] : memref<2x47xf32, #tpu.memory_space<smem>>
    %756 = math.tanh %754 : vector<2x2x128xf32>
    %757 = vector.broadcast %755 : f32 to vector<2x2x128xf32>
    %758 = arith.mulf %757, %756 : vector<2x2x128xf32>
    %759 = arith.addf %754, %758 : vector<2x2x128xf32>
    %c1_321 = arith.constant 1 : index
    %c9_322 = arith.constant 9 : index
    %760 = memref.load %arg6[%c1_321, %c9_322] : memref<2x47xf32, #tpu.memory_space<smem>>
    %761 = vector.broadcast %760 : f32 to vector<2x2x128xf32>
    %762 = arith.mulf %761, %721 : vector<2x2x128xf32>
    %c1_323 = arith.constant 1 : index
    %c10_324 = arith.constant 10 : index
    %763 = memref.load %arg6[%c1_323, %c10_324] : memref<2x47xf32, #tpu.memory_space<smem>>
    %764 = vector.broadcast %763 : f32 to vector<2x2x128xf32>
    %765 = arith.mulf %764, %740 : vector<2x2x128xf32>
    %766 = arith.addf %762, %765 : vector<2x2x128xf32>
    %c1_325 = arith.constant 1 : index
    %c11_326 = arith.constant 11 : index
    %767 = memref.load %arg6[%c1_325, %c11_326] : memref<2x47xf32, #tpu.memory_space<smem>>
    %768 = vector.broadcast %767 : f32 to vector<2x2x128xf32>
    %769 = arith.mulf %768, %759 : vector<2x2x128xf32>
    %770 = arith.addf %766, %769 : vector<2x2x128xf32>
    %c1_327 = arith.constant 1 : index
    %c18_328 = arith.constant 18 : index
    %771 = memref.load %arg6[%c1_327, %c18_328] : memref<2x47xf32, #tpu.memory_space<smem>>
    %772 = vector.broadcast %771 : f32 to vector<2x2x128xf32>
    %773 = arith.addf %770, %772 : vector<2x2x128xf32>
    %c1_329 = arith.constant 1 : index
    %c21_330 = arith.constant 21 : index
    %774 = memref.load %arg6[%c1_329, %c21_330] : memref<2x47xf32, #tpu.memory_space<smem>>
    %775 = math.tanh %773 : vector<2x2x128xf32>
    %776 = vector.broadcast %774 : f32 to vector<2x2x128xf32>
    %777 = arith.mulf %776, %775 : vector<2x2x128xf32>
    %778 = arith.addf %773, %777 : vector<2x2x128xf32>
    %c1_331 = arith.constant 1 : index
    %c12_332 = arith.constant 12 : index
    %779 = memref.load %arg6[%c1_331, %c12_332] : memref<2x47xf32, #tpu.memory_space<smem>>
    %780 = vector.broadcast %779 : f32 to vector<2x2x128xf32>
    %781 = arith.mulf %780, %721 : vector<2x2x128xf32>
    %c1_333 = arith.constant 1 : index
    %c13_334 = arith.constant 13 : index
    %782 = memref.load %arg6[%c1_333, %c13_334] : memref<2x47xf32, #tpu.memory_space<smem>>
    %783 = vector.broadcast %782 : f32 to vector<2x2x128xf32>
    %784 = arith.mulf %783, %740 : vector<2x2x128xf32>
    %785 = arith.addf %781, %784 : vector<2x2x128xf32>
    %c1_335 = arith.constant 1 : index
    %c14_336 = arith.constant 14 : index
    %786 = memref.load %arg6[%c1_335, %c14_336] : memref<2x47xf32, #tpu.memory_space<smem>>
    %787 = vector.broadcast %786 : f32 to vector<2x2x128xf32>
    %788 = arith.mulf %787, %759 : vector<2x2x128xf32>
    %789 = arith.addf %785, %788 : vector<2x2x128xf32>
    %c1_337 = arith.constant 1 : index
    %c19_338 = arith.constant 19 : index
    %790 = memref.load %arg6[%c1_337, %c19_338] : memref<2x47xf32, #tpu.memory_space<smem>>
    %791 = vector.broadcast %790 : f32 to vector<2x2x128xf32>
    %792 = arith.addf %789, %791 : vector<2x2x128xf32>
    %c1_339 = arith.constant 1 : index
    %c22_340 = arith.constant 22 : index
    %793 = memref.load %arg6[%c1_339, %c22_340] : memref<2x47xf32, #tpu.memory_space<smem>>
    %794 = math.tanh %792 : vector<2x2x128xf32>
    %795 = vector.broadcast %793 : f32 to vector<2x2x128xf32>
    %796 = arith.mulf %795, %794 : vector<2x2x128xf32>
    %797 = arith.addf %792, %796 : vector<2x2x128xf32>
    %c1_341 = arith.constant 1 : index
    %c15_342 = arith.constant 15 : index
    %798 = memref.load %arg6[%c1_341, %c15_342] : memref<2x47xf32, #tpu.memory_space<smem>>
    %799 = vector.broadcast %798 : f32 to vector<2x2x128xf32>
    %800 = arith.mulf %799, %721 : vector<2x2x128xf32>
    %c1_343 = arith.constant 1 : index
    %c16_344 = arith.constant 16 : index
    %801 = memref.load %arg6[%c1_343, %c16_344] : memref<2x47xf32, #tpu.memory_space<smem>>
    %802 = vector.broadcast %801 : f32 to vector<2x2x128xf32>
    %803 = arith.mulf %802, %740 : vector<2x2x128xf32>
    %804 = arith.addf %800, %803 : vector<2x2x128xf32>
    %c1_345 = arith.constant 1 : index
    %c17_346 = arith.constant 17 : index
    %805 = memref.load %arg6[%c1_345, %c17_346] : memref<2x47xf32, #tpu.memory_space<smem>>
    %806 = vector.broadcast %805 : f32 to vector<2x2x128xf32>
    %807 = arith.mulf %806, %759 : vector<2x2x128xf32>
    %808 = arith.addf %804, %807 : vector<2x2x128xf32>
    %c1_347 = arith.constant 1 : index
    %c20_348 = arith.constant 20 : index
    %809 = memref.load %arg6[%c1_347, %c20_348] : memref<2x47xf32, #tpu.memory_space<smem>>
    %810 = vector.broadcast %809 : f32 to vector<2x2x128xf32>
    %811 = arith.addf %808, %810 : vector<2x2x128xf32>
    %c1_349 = arith.constant 1 : index
    %c23_350 = arith.constant 23 : index
    %812 = memref.load %arg6[%c1_349, %c23_350] : memref<2x47xf32, #tpu.memory_space<smem>>
    %813 = math.tanh %811 : vector<2x2x128xf32>
    %814 = vector.broadcast %812 : f32 to vector<2x2x128xf32>
    %815 = arith.mulf %814, %813 : vector<2x2x128xf32>
    %816 = arith.addf %811, %815 : vector<2x2x128xf32>
    %c1_351 = arith.constant 1 : index
    %c24_352 = arith.constant 24 : index
    %817 = memref.load %arg6[%c1_351, %c24_352] : memref<2x47xf32, #tpu.memory_space<smem>>
    %818 = vector.broadcast %817 : f32 to vector<2x2x128xf32>
    %819 = arith.mulf %818, %778 : vector<2x2x128xf32>
    %c1_353 = arith.constant 1 : index
    %c25_354 = arith.constant 25 : index
    %820 = memref.load %arg6[%c1_353, %c25_354] : memref<2x47xf32, #tpu.memory_space<smem>>
    %821 = vector.broadcast %820 : f32 to vector<2x2x128xf32>
    %822 = arith.mulf %821, %797 : vector<2x2x128xf32>
    %823 = arith.addf %819, %822 : vector<2x2x128xf32>
    %c1_355 = arith.constant 1 : index
    %c26_356 = arith.constant 26 : index
    %824 = memref.load %arg6[%c1_355, %c26_356] : memref<2x47xf32, #tpu.memory_space<smem>>
    %825 = vector.broadcast %824 : f32 to vector<2x2x128xf32>
    %826 = arith.mulf %825, %816 : vector<2x2x128xf32>
    %827 = arith.addf %823, %826 : vector<2x2x128xf32>
    %c1_357 = arith.constant 1 : index
    %c33_358 = arith.constant 33 : index
    %828 = memref.load %arg6[%c1_357, %c33_358] : memref<2x47xf32, #tpu.memory_space<smem>>
    %829 = vector.broadcast %828 : f32 to vector<2x2x128xf32>
    %830 = arith.addf %827, %829 : vector<2x2x128xf32>
    %c1_359 = arith.constant 1 : index
    %c36_360 = arith.constant 36 : index
    %831 = memref.load %arg6[%c1_359, %c36_360] : memref<2x47xf32, #tpu.memory_space<smem>>
    %832 = math.tanh %830 : vector<2x2x128xf32>
    %833 = vector.broadcast %831 : f32 to vector<2x2x128xf32>
    %834 = arith.mulf %833, %832 : vector<2x2x128xf32>
    %835 = arith.addf %830, %834 : vector<2x2x128xf32>
    %c1_361 = arith.constant 1 : index
    %c27_362 = arith.constant 27 : index
    %836 = memref.load %arg6[%c1_361, %c27_362] : memref<2x47xf32, #tpu.memory_space<smem>>
    %837 = vector.broadcast %836 : f32 to vector<2x2x128xf32>
    %838 = arith.mulf %837, %778 : vector<2x2x128xf32>
    %c1_363 = arith.constant 1 : index
    %c28_364 = arith.constant 28 : index
    %839 = memref.load %arg6[%c1_363, %c28_364] : memref<2x47xf32, #tpu.memory_space<smem>>
    %840 = vector.broadcast %839 : f32 to vector<2x2x128xf32>
    %841 = arith.mulf %840, %797 : vector<2x2x128xf32>
    %842 = arith.addf %838, %841 : vector<2x2x128xf32>
    %c1_365 = arith.constant 1 : index
    %c29_366 = arith.constant 29 : index
    %843 = memref.load %arg6[%c1_365, %c29_366] : memref<2x47xf32, #tpu.memory_space<smem>>
    %844 = vector.broadcast %843 : f32 to vector<2x2x128xf32>
    %845 = arith.mulf %844, %816 : vector<2x2x128xf32>
    %846 = arith.addf %842, %845 : vector<2x2x128xf32>
    %c1_367 = arith.constant 1 : index
    %c34_368 = arith.constant 34 : index
    %847 = memref.load %arg6[%c1_367, %c34_368] : memref<2x47xf32, #tpu.memory_space<smem>>
    %848 = vector.broadcast %847 : f32 to vector<2x2x128xf32>
    %849 = arith.addf %846, %848 : vector<2x2x128xf32>
    %c1_369 = arith.constant 1 : index
    %c37_370 = arith.constant 37 : index
    %850 = memref.load %arg6[%c1_369, %c37_370] : memref<2x47xf32, #tpu.memory_space<smem>>
    %851 = math.tanh %849 : vector<2x2x128xf32>
    %852 = vector.broadcast %850 : f32 to vector<2x2x128xf32>
    %853 = arith.mulf %852, %851 : vector<2x2x128xf32>
    %854 = arith.addf %849, %853 : vector<2x2x128xf32>
    %c1_371 = arith.constant 1 : index
    %c30_372 = arith.constant 30 : index
    %855 = memref.load %arg6[%c1_371, %c30_372] : memref<2x47xf32, #tpu.memory_space<smem>>
    %856 = vector.broadcast %855 : f32 to vector<2x2x128xf32>
    %857 = arith.mulf %856, %778 : vector<2x2x128xf32>
    %c1_373 = arith.constant 1 : index
    %c31_374 = arith.constant 31 : index
    %858 = memref.load %arg6[%c1_373, %c31_374] : memref<2x47xf32, #tpu.memory_space<smem>>
    %859 = vector.broadcast %858 : f32 to vector<2x2x128xf32>
    %860 = arith.mulf %859, %797 : vector<2x2x128xf32>
    %861 = arith.addf %857, %860 : vector<2x2x128xf32>
    %c1_375 = arith.constant 1 : index
    %c32_376 = arith.constant 32 : index
    %862 = memref.load %arg6[%c1_375, %c32_376] : memref<2x47xf32, #tpu.memory_space<smem>>
    %863 = vector.broadcast %862 : f32 to vector<2x2x128xf32>
    %864 = arith.mulf %863, %816 : vector<2x2x128xf32>
    %865 = arith.addf %861, %864 : vector<2x2x128xf32>
    %c1_377 = arith.constant 1 : index
    %c35_378 = arith.constant 35 : index
    %866 = memref.load %arg6[%c1_377, %c35_378] : memref<2x47xf32, #tpu.memory_space<smem>>
    %867 = vector.broadcast %866 : f32 to vector<2x2x128xf32>
    %868 = arith.addf %865, %867 : vector<2x2x128xf32>
    %c1_379 = arith.constant 1 : index
    %c38_380 = arith.constant 38 : index
    %869 = memref.load %arg6[%c1_379, %c38_380] : memref<2x47xf32, #tpu.memory_space<smem>>
    %870 = math.tanh %868 : vector<2x2x128xf32>
    %871 = vector.broadcast %869 : f32 to vector<2x2x128xf32>
    %872 = arith.mulf %871, %870 : vector<2x2x128xf32>
    %873 = arith.addf %868, %872 : vector<2x2x128xf32>
    %c1_381 = arith.constant 1 : index
    %c39_382 = arith.constant 39 : index
    %874 = memref.load %arg6[%c1_381, %c39_382] : memref<2x47xf32, #tpu.memory_space<smem>>
    %875 = vector.broadcast %874 : f32 to vector<2x2x128xf32>
    %876 = arith.mulf %875, %835 : vector<2x2x128xf32>
    %c1_383 = arith.constant 1 : index
    %c40_384 = arith.constant 40 : index
    %877 = memref.load %arg6[%c1_383, %c40_384] : memref<2x47xf32, #tpu.memory_space<smem>>
    %878 = vector.broadcast %877 : f32 to vector<2x2x128xf32>
    %879 = arith.mulf %878, %854 : vector<2x2x128xf32>
    %880 = arith.addf %876, %879 : vector<2x2x128xf32>
    %c1_385 = arith.constant 1 : index
    %c41_386 = arith.constant 41 : index
    %881 = memref.load %arg6[%c1_385, %c41_386] : memref<2x47xf32, #tpu.memory_space<smem>>
    %882 = vector.broadcast %881 : f32 to vector<2x2x128xf32>
    %883 = arith.mulf %882, %873 : vector<2x2x128xf32>
    %884 = arith.addf %880, %883 : vector<2x2x128xf32>
    %c1_387 = arith.constant 1 : index
    %c42_388 = arith.constant 42 : index
    %885 = memref.load %arg6[%c1_387, %c42_388] : memref<2x47xf32, #tpu.memory_space<smem>>
    %886 = vector.broadcast %885 : f32 to vector<2x2x128xf32>
    %887 = arith.addf %884, %886 : vector<2x2x128xf32>
    %888 = math.absf %887 : vector<2x2x128xf32>
    %cst_389 = arith.constant 0.000000e+00 : f32
    %889 = vector.broadcast %cst_389 : f32 to vector<2x2x128xf32>
    %890 = arith.subf %889, %888 : vector<2x2x128xf32>
    %891 = math.exp %890 : vector<2x2x128xf32>
    %cst_390 = arith.constant 1.000000e+00 : f32
    %892 = vector.broadcast %cst_390 : f32 to vector<2x2x128xf32>
    %893 = arith.addf %892, %891 : vector<2x2x128xf32>
    %cst_391 = arith.constant 1.000000e+00 : f32
    %894 = vector.broadcast %cst_391 : f32 to vector<2x2x128xf32>
    %895 = arith.divf %894, %893 : vector<2x2x128xf32>
    %cst_392 = arith.constant 0.000000e+00 : f32
    %896 = vector.broadcast %cst_392 : f32 to vector<2x2x128xf32>
    %897 = arith.cmpf oge, %887, %896 : vector<2x2x128xf32>
    %cst_393 = arith.constant 1.000000e+00 : f32
    %898 = vector.broadcast %cst_393 : f32 to vector<2x2x128xf32>
    %899 = arith.subf %898, %895 : vector<2x2x128xf32>
    %900 = arith.select %897, %895, %899 : vector<2x2x128xi1>, vector<2x2x128xf32>
    %901 = vector.extract_strided_slice %900 {offsets = [0, 0, 0], sizes = [1, 2, 128], strides = [1, 1, 1]} : vector<2x2x128xf32> to vector<1x2x128xf32>
    %902 = vector.shape_cast %901 : vector<1x2x128xf32> to vector<2x128xf32>
    %903 = vector.extract_strided_slice %900 {offsets = [1, 0, 0], sizes = [1, 2, 128], strides = [1, 1, 1]} : vector<2x2x128xf32> to vector<1x2x128xf32>
    %904 = vector.shape_cast %903 : vector<1x2x128xf32> to vector<2x128xf32>
    %905 = arith.subf %902, %904 : vector<2x128xf32>
    %cst_394 = arith.constant 9.99999971E-10 : f32
    %906 = vector.broadcast %cst_394 : f32 to vector<2x128xf32>
    %907 = arith.maximumf %905, %906 : vector<2x128xf32>
    %cst_395 = arith.constant 5.000000e-01 : f32
    %908 = vector.broadcast %cst_395 : f32 to vector<2x128xf32>
    %909 = arith.mulf %908, %497 : vector<2x128xf32>
    %910 = math.erf %909 : vector<2x128xf32>
    %cst_396 = arith.constant 9.99999971E-10 : f32
    %911 = vector.broadcast %cst_396 : f32 to vector<2x128xf32>
    %912 = arith.maximumf %910, %911 : vector<2x128xf32>
    %913 = arith.subf %493, %491 : vector<2x128xf32>
    %914 = math.absf %913 : vector<2x128xf32>
    %cst_397 = arith.constant 5.000000e-01 : f32
    %915 = vector.broadcast %cst_397 : f32 to vector<2x128xf32>
    %916 = arith.subf %915, %914 : vector<2x128xf32>
    %917 = arith.mulf %916, %497 : vector<2x128xf32>
    %918 = math.erf %917 : vector<2x128xf32>
    %cst_398 = arith.constant -5.000000e-01 : f32
    %919 = vector.broadcast %cst_398 : f32 to vector<2x128xf32>
    %920 = arith.subf %919, %914 : vector<2x128xf32>
    %921 = arith.mulf %920, %497 : vector<2x128xf32>
    %922 = math.erf %921 : vector<2x128xf32>
    %923 = arith.subf %918, %922 : vector<2x128xf32>
    %cst_399 = arith.constant 5.000000e-01 : f32
    %924 = vector.broadcast %cst_399 : f32 to vector<2x128xf32>
    %925 = arith.mulf %924, %923 : vector<2x128xf32>
    %cst_400 = arith.constant 9.99999971E-10 : f32
    %926 = vector.broadcast %cst_400 : f32 to vector<2x128xf32>
    %927 = arith.maximumf %925, %926 : vector<2x128xf32>
    %928 = arith.mulf %702, %912 : vector<2x128xf32>
    %929 = arith.mulf %907, %927 : vector<2x128xf32>
    %930 = arith.mulf %928, %929 : vector<2x128xf32>
    %931 = math.log %930 : vector<2x128xf32>
    %cst_401 = arith.constant 2.000000e+00 : f32
    %932 = math.log %cst_401 : f32
    %933 = vector.broadcast %932 : f32 to vector<2x128xf32>
    %934 = arith.divf %931, %933 : vector<2x128xf32>
    %cst_402 = arith.constant 0.000000e+00 : f32
    %935 = vector.broadcast %cst_402 : f32 to vector<2x128xf32>
    %936 = arith.subf %935, %934 : vector<2x128xf32>
    %c0_403 = arith.constant 0 : index
    %c0_404 = arith.constant 0 : index
    %c0_405 = arith.constant 0 : index
    %937 = vector.load %arg9[%c0_403, %c0_404, %c0_405] : memref<1x8x128xf32, #tpu.memory_space<vmem>>, vector<1x1x128xf32>
    %938 = vector.shape_cast %937 : vector<1x1x128xf32> to vector<1x128xf32>
    %cst_406 = arith.constant dense<0.000000e+00> : vector<128xf32>
    %939 = vector.multi_reduction <add>, %489, %cst_406 [0] : vector<2x128xf32> to vector<128xf32>
    %940 = vector.shape_cast %939 : vector<128xf32> to vector<1x128xf32>
    %941 = arith.addf %938, %940 : vector<1x128xf32>
    %c0_407 = arith.constant 0 : index
    %c0_408 = arith.constant 0 : index
    %c0_409 = arith.constant 0 : index
    %942 = vector.load %arg9[%c0_407, %c0_408, %c0_409] : memref<1x8x128xf32, #tpu.memory_space<vmem>>, vector<1x1x128xf32>
    %943 = vector.shape_cast %942 : vector<1x1x128xf32> to vector<1x128xf32>
    %944 = vector.shape_cast %941 : vector<1x128xf32> to vector<1x1x128xf32>
    tpu.vector_store %arg9[%c0_407, %c0_408, %c0_409], %944 {strides = array<i32>} : memref<1x8x128xf32, #tpu.memory_space<vmem>>, vector<1x1x128xf32>,
    %c0_410 = arith.constant 0 : index
    %c0_411 = arith.constant 0 : index
    %c0_412 = arith.constant 0 : index
    %945 = vector.load %arg10[%c0_410, %c0_411, %c0_412] : memref<1x8x128xf32, #tpu.memory_space<vmem>>, vector<1x1x128xf32>
    %946 = vector.shape_cast %945 : vector<1x1x128xf32> to vector<1x128xf32>
    %cst_413 = arith.constant dense<0.000000e+00> : vector<128xf32>
    %947 = vector.multi_reduction <add>, %936, %cst_413 [0] : vector<2x128xf32> to vector<128xf32>
    %948 = vector.shape_cast %947 : vector<128xf32> to vector<1x128xf32>
    %949 = arith.addf %946, %948 : vector<1x128xf32>
    %c0_414 = arith.constant 0 : index
    %c0_415 = arith.constant 0 : index
    %c0_416 = arith.constant 0 : index
    %950 = vector.load %arg10[%c0_414, %c0_415, %c0_416] : memref<1x8x128xf32, #tpu.memory_space<vmem>>, vector<1x1x128xf32>
    %951 = vector.shape_cast %950 : vector<1x1x128xf32> to vector<1x128xf32>
    %952 = vector.shape_cast %949 : vector<1x128xf32> to vector<1x1x128xf32>
    tpu.vector_store %arg10[%c0_414, %c0_415, %c0_416], %952 {strides = array<i32>} : memref<1x8x128xf32, #tpu.memory_space<vmem>>, vector<1x1x128xf32>,
    return
  }
  func.func @transform_0(%arg0: i32, %arg1: i32, %arg2: i32) -> (i32, i32, i32, i32) {
    %c1_i32 = arith.constant 1 : i32
    %0 = arith.muli %arg1, %c1_i32 : i32
    %1 = arith.addi %0, %arg2 : i32
    %c0_i32 = arith.constant 0 : i32
    %c0_i32_0 = arith.constant 0 : i32
    %c0_i32_1 = arith.constant 0 : i32
    return %arg0, %c0_i32, %1, %c0_i32_0 : i32, i32, i32, i32
  }
  func.func @transform_1(%arg0: i32, %arg1: i32, %arg2: i32) -> (i32, i32, i32, i32) {
    %c1_i32 = arith.constant 1 : i32
    %0 = arith.muli %arg1, %c1_i32 : i32
    %1 = arith.addi %0, %arg2 : i32
    %c0_i32 = arith.constant 0 : i32
    %c0_i32_0 = arith.constant 0 : i32
    %c0_i32_1 = arith.constant 0 : i32
    return %arg0, %c0_i32, %1, %c0_i32_0 : i32, i32, i32, i32
  }
  func.func @transform_2(%arg0: i32, %arg1: i32, %arg2: i32) -> (i32, i32) {
    %c0_i32 = arith.constant 0 : i32
    %c0_i32_0 = arith.constant 0 : i32
    %c0_i32_1 = arith.constant 0 : i32
    return %c0_i32, %c0_i32_0 : i32, i32
  }
  func.func @transform_3(%arg0: i32, %arg1: i32, %arg2: i32) -> (i32, i32) {
    %c0_i32 = arith.constant 0 : i32
    %c0_i32_0 = arith.constant 0 : i32
    %c0_i32_1 = arith.constant 0 : i32
    return %c0_i32, %c0_i32_0 : i32, i32
  }
  func.func @transform_4(%arg0: i32, %arg1: i32, %arg2: i32) -> (i32, i32, i32, i32) {
    %c1_i32 = arith.constant 1 : i32
    %0 = arith.muli %arg1, %c1_i32 : i32
    %1 = arith.addi %0, %arg2 : i32
    %c0_i32 = arith.constant 0 : i32
    %c0_i32_0 = arith.constant 0 : i32
    %c0_i32_1 = arith.constant 0 : i32
    return %arg0, %c0_i32, %1, %c0_i32_0 : i32, i32, i32, i32
  }
  func.func @transform_5(%arg0: i32, %arg1: i32, %arg2: i32) -> (i32, i32, i32, i32) {
    %c1_i32 = arith.constant 1 : i32
    %0 = arith.muli %arg1, %c1_i32 : i32
    %1 = arith.addi %0, %arg2 : i32
    %c0_i32 = arith.constant 0 : i32
    %c0_i32_0 = arith.constant 0 : i32
    %c0_i32_1 = arith.constant 0 : i32
    return %arg0, %c0_i32, %1, %c0_i32_0 : i32, i32, i32, i32
  }
  func.func @transform_6(%arg0: i32, %arg1: i32, %arg2: i32) -> (i32, i32, i32) {
    %c0_i32 = arith.constant 0 : i32
    %c0_i32_0 = arith.constant 0 : i32
    return %arg0, %arg1, %c0_i32 : i32, i32, i32
  }
  func.func @transform_7(%arg0: i32, %arg1: i32, %arg2: i32) -> (i32, i32, i32) {
    %c0_i32 = arith.constant 0 : i32
    %c0_i32_0 = arith.constant 0 : i32
    return %arg0, %arg1, %c0_i32 : i32, i32, i32
  }
}

</mosaic_0001>

<llo_original>
// kernel: compressor_forward.1
$region0: #{compressor_forward.1}
  #allocation0 [shape = 'u32[]', space=smem, size = 0x4, offset = 0x4, fixed_abs, tag = 'smem constant byte address 0x4 - core index']
  #allocation1 [shape = 'u32[144,128]{1,0:T(1,128)}', space=vmem, size = 0x12000, scoped, tag = 'internal scratch']
  %s0 = inlined_call_operand.vmem [shape: f32[2,2,2,128], index: 0, kind: input, shape index: {}]
  %s1 = inlined_call_operand.vmem [shape: f32[2,2,2,128], index: 1, kind: input, shape index: {}]
  %s2 = inlined_call_operand.vmem [shape: f32[2,47], index: 2, kind: input, shape index: {}]
  %s3 = inlined_call_operand.vmem [shape: f32[2,47], index: 3, kind: input, shape index: {}]
  %s4 = inlined_call_operand.vmem [shape: f32[2,2,2,128], index: 4, kind: output, shape index: {0}]
  %s5 = inlined_call_operand.vmem [shape: f32[2,2,2,128], index: 5, kind: output, shape index: {1}]
  %s6 = inlined_call_operand.vmem [shape: f32[2,8,128], index: 6, kind: output, shape index: {2}]
  %s7 = inlined_call_operand.vmem [shape: f32[2,8,128], index: 7, kind: output, shape index: {3}]
  %8 = xla_tuple %s4, %s5, %s6, %s7
  %s9 = sld [smem:[#allocation0]]
  $region85: #{compressor_forward.1} parent=0
    _
  %s11 = ssub.s32 1, %s9
  %s12 = scalar_select 0, %s11, %s9
  $region1: #{compressor_forward.1} parent=0
    #allocation2 [shape = 'u8[1024]{0}', space=smem, size = 0x400, scoped, tag = 'input window, operand 2, single buffered']
    #allocation3 [shape = 's32[2]{0}', space=sflag, size = 0x8, scoped, tag = 'scoped memory for compressor_forward.1']
    #allocation4 [shape = 'u8[1024]{0}', space=smem, size = 0x400, scoped, tag = 'input window, operand 3, single buffered']
    #allocation5 [shape = 's32[1]{0}', space=sflag, size = 0x4, scoped, tag = 'scoped memory for compressor_forward.1']
    %13 = vsyncpa [#allocation3], 0
    %14 = vsyncpa [#allocation5], 0
    loop: start=0, step=1, limit=4
    $region2: #{compressor_forward.1} parent=1 // loop_pre_header
      _
    $region3: #{compressor_forward.1} parent=1 // loop_header
      %s16 = sphi 0, %s20
      %p17 = scmp.ge.s32.totalorder %s16, 4
      %s23 = sphi 0, %s42
      %s24 = sphi 0, %s38
      %s25 = sphi 0, %s34
      %s26 = sphi 0, %s23
      %s27 = sphi 0, %s24
      %s28 = sphi 0, %s25
      %s29 = sphi 0, %s26
      %s30 = sphi 0, %s27
      %s31 = sphi 0, %s28
      %s49 = sphi 0, %s51
      %s52 = sphi 0, %s49
      %s53 = sphi 0, %s52
      %s69 = sphi 0, %s53
      %s79 = sphi 0, %s81
      %s82 = sphi 0, %s79
      %s83 = sphi 0, %s82
      %s99 = sphi 0, %s83
      %s103 = sphi 0, %s103
      %s105 = sphi 0, %s103
      %s106 = sphi 0, %s105
      %s120 = sphi 0, %s106
      %s124 = sphi 0, %s124
      %s126 = sphi 0, %s124
      %s127 = sphi 0, %s126
      %s141 = sphi 0, %s127
      %s151 = sphi 0, %s153
      %s154 = sphi 0, %s151
      %s155 = sphi 0, %s154
      %s171 = sphi 0, %s155
      %s181 = sphi 0, %s183
      %s184 = sphi 0, %s181
      %s185 = sphi 0, %s184
      %s201 = sphi 0, %s185
      %s209 = sphi 0, %s211
      %s212 = sphi 0, %s209
      %s213 = sphi 0, %s212
      %s229 = sphi 0, %s213
      %s237 = sphi 0, %s239
      %s240 = sphi 0, %s237
      %s241 = sphi 0, %s240
      %s257 = sphi 0, %s241
    $region4: #{compressor_forward.1} parent=1 // loop_header_branch
      %19 = sbr.rel (%p17) target = $region8
    $region5: #{compressor_forward.1} parent=1 // loop_body
      %s21 = ssub.s32 %s16, 1
      %s22 = ssub.s32 %s16, 2
      %s32 = sadd.s32 1, %s25
      %p33 = scmp.ge.s32.totalorder %s32, 1
      %s34 = scalar_select %p33, 0, %s32
      %s35 = sadd.s32 1, %s24
      %s36 = scalar_select %p33, %s35, %s24
      %p37 = scmp.ge.s32.totalorder %s36, 1
      %s38 = scalar_select %p37, 0, %s36
      %s39 = sadd.s32 1, %s23
      %s40 = scalar_select %p37, %s39, %s23
      %p41 = scmp.ge.s32.totalorder %s40, 2
      %s42 = scalar_select %p41, 0, %s40
      %s43 = sadd.s32 %s24, %s25
      %s44 = sadd.s32 %s38, %s34
      %s45 = ssub.s32 %s23, %s42
      %s46 = ssub.s32 %s43, %s44
      %s47 = sor.u32 %s45, %s46
      %p48 = scmp.eq.s32.totalorder %s47, 0
      %s50 = sadd.s32 %s49, 1
      %s51 = scalar_select %p48, %s49, %s50
      %p54 = pneg %p48
      %p55 = scmp.eq.s32.totalorder %s16, 1
      %p56 = por %p54, %p55
      %p57 = scmp.ne.s32.totalorder %s49, %s52
      %p58 = scmp.eq.s32.totalorder %s16, 0
      %p59 = por %p57, %p58
      %p60 = scmp.ne.s32.totalorder %s49, %s52
      %p61 = scmp.eq.s32.totalorder %s21, 1
      %p62 = por %p60, %p61
      %p63 = scmp.ne.s32.totalorder %s52, %s53
      %p64 = scmp.eq.s32.totalorder %s21, 0
      %p65 = por %p63, %p64
      %p66 = scmp.ne.s32.totalorder %s52, %s53
      %p67 = scmp.eq.s32.totalorder %s22, 1
      %p68 = por %p66, %p67
      %p70 = scmp.ne.s32.totalorder %s53, %s69
      %p71 = scmp.eq.s32.totalorder %s22, 0
      %p72 = por %p70, %p71
      %s73 = sadd.s32 %s24, %s25
      %s74 = sadd.s32 %s38, %s34
      %s75 = ssub.s32 %s23, %s42
      %s76 = ssub.s32 %s73, %s74
      %s77 = sor.u32 %s75, %s76
      %p78 = scmp.eq.s32.totalorder %s77, 0
      %s80 = sadd.s32 %s79, 1
      %s81 = scalar_select %p78, %s79, %s80
      %p84 = pneg %p78
      %p85 = scmp.eq.s32.totalorder %s16, 1
      %p86 = por %p84, %p85
      %p87 = scmp.ne.s32.totalorder %s79, %s82
      %p88 = scmp.eq.s32.totalorder %s16, 0
      %p89 = por %p87, %p88
      %p90 = scmp.ne.s32.totalorder %s79, %s82
      %p91 = scmp.eq.s32.totalorder %s21, 1
      %p92 = por %p90, %p91
      %p93 = scmp.ne.s32.totalorder %s82, %s83
      %p94 = scmp.eq.s32.totalorder %s21, 0
      %p95 = por %p93, %p94
      %p96 = scmp.ne.s32.totalorder %s82, %s83
      %p97 = scmp.eq.s32.totalorder %s22, 1
      %p98 = por %p96, %p97
      %p100 = scmp.ne.s32.totalorder %s83, %s99
      %p101 = scmp.eq.s32.totalorder %s22, 0
      %p102 = por %p100, %p101
      %s104 = sadd.s32 %s103, 1
      %p107 = scmp.eq.s32.totalorder %s16, 1
      %p108 = scmp.ne.s32.totalorder %s103, %s105
      %p109 = scmp.eq.s32.totalorder %s16, 0
      %p110 = por %p108, %p109
      %p111 = scmp.ne.s32.totalorder %s103, %s105
      %p112 = scmp.eq.s32.totalorder %s21, 1
      %p113 = por %p111, %p112
      %p114 = scmp.ne.s32.totalorder %s105, %s106
      %p115 = scmp.eq.s32.totalorder %s21, 0
      %p116 = por %p114, %p115
      %p117 = scmp.ne.s32.totalorder %s105, %s106
      %p118 = scmp.eq.s32.totalorder %s22, 1
      %p119 = por %p117, %p118
      %p121 = scmp.ne.s32.totalorder %s106, %s120
      %p122 = scmp.eq.s32.totalorder %s22, 0
      %p123 = por %p121, %p122
      %s125 = sadd.s32 %s124, 1
      %p128 = scmp.eq.s32.totalorder %s16, 1
      %p129 = scmp.ne.s32.totalorder %s124, %s126
      %p130 = scmp.eq.s32.totalorder %s16, 0
      %p131 = por %p129, %p130
      %p132 = scmp.ne.s32.totalorder %s124, %s126
      %p133 = scmp.eq.s32.totalorder %s21, 1
      %p134 = por %p132, %p133
      %p135 = scmp.ne.s32.totalorder %s126, %s127
      %p136 = scmp.eq.s32.totalorder %s21, 0
      %p137 = por %p135, %p136
      %p138 = scmp.ne.s32.totalorder %s126, %s127
      %p139 = scmp.eq.s32.totalorder %s22, 1
      %p140 = por %p138, %p139
      %p142 = scmp.ne.s32.totalorder %s127, %s141
      %p143 = scmp.eq.s32.totalorder %s22, 0
      %p144 = por %p142, %p143
      %s145 = sadd.s32 %s24, %s25
      %s146 = sadd.s32 %s38, %s34
      %s147 = ssub.s32 %s23, %s42
      %s148 = ssub.s32 %s145, %s146
      %s149 = sor.u32 %s147, %s148
      %p150 = scmp.eq.s32.totalorder %s149, 0
      %s152 = sadd.s32 %s151, 1
      %s153 = scalar_select %p150, %s151, %s152
      %p156 = pneg %p150
      %p157 = scmp.eq.s32.totalorder %s16, 1
      %p158 = por %p156, %p157
      %p159 = scmp.ne.s32.totalorder %s151, %s154
      %p160 = scmp.eq.s32.totalorder %s16, 0
      %p161 = por %p159, %p160
      %p162 = scmp.ne.s32.totalorder %s151, %s154
      %p163 = scmp.eq.s32.totalorder %s21, 1
      %p164 = por %p162, %p163
      %p165 = scmp.ne.s32.totalorder %s154, %s155
      %p166 = scmp.eq.s32.totalorder %s21, 0
      %p167 = por %p165, %p166
      %p168 = scmp.ne.s32.totalorder %s154, %s155
      %p169 = scmp.eq.s32.totalorder %s22, 1
      %p170 = por %p168, %p169
      %p172 = scmp.ne.s32.totalorder %s155, %s171
      %p173 = scmp.eq.s32.totalorder %s22, 0
      %p174 = por %p172, %p173
      %s175 = sadd.s32 %s24, %s25
      %s176 = sadd.s32 %s38, %s34
      %s177 = ssub.s32 %s23, %s42
      %s178 = ssub.s32 %s175, %s176
      %s179 = sor.u32 %s177, %s178
      %p180 = scmp.eq.s32.totalorder %s179, 0
      %s182 = sadd.s32 %s181, 1
      %s183 = scalar_select %p180, %s181, %s182
      %p186 = pneg %p180
      %p187 = scmp.eq.s32.totalorder %s16, 1
      %p188 = por %p186, %p187
      %p189 = scmp.ne.s32.totalorder %s181, %s184
      %p190 = scmp.eq.s32.totalorder %s16, 0
      %p191 = por %p189, %p190
      %p192 = scmp.ne.s32.totalorder %s181, %s184
      %p193 = scmp.eq.s32.totalorder %s21, 1
      %p194 = por %p192, %p193
      %p195 = scmp.ne.s32.totalorder %s184, %s185
      %p196 = scmp.eq.s32.totalorder %s21, 0
      %p197 = por %p195, %p196
      %p198 = scmp.ne.s32.totalorder %s184, %s185
      %p199 = scmp.eq.s32.totalorder %s22, 1
      %p200 = por %p198, %p199
      %p202 = scmp.ne.s32.totalorder %s185, %s201
      %p203 = scmp.eq.s32.totalorder %s22, 0
      %p204 = por %p202, %p203
      %s205 = ssub.s32 %s23, %s42
      %s206 = ssub.s32 %s24, %s38
      %s207 = sor.u32 %s205, %s206
      %p208 = scmp.eq.s32.totalorder %s207, 0
      %s210 = sadd.s32 %s209, 1
      %s211 = scalar_select %p208, %s209, %s210
      %p214 = pneg %p208
      %p215 = scmp.eq.s32.totalorder %s16, 1
      %p216 = por %p214, %p215
      %p217 = scmp.ne.s32.totalorder %s209, %s212
      %p218 = scmp.eq.s32.totalorder %s16, 0
      %p219 = por %p217, %p218
      %p220 = scmp.ne.s32.totalorder %s209, %s212
      %p221 = scmp.eq.s32.totalorder %s21, 1
      %p222 = por %p220, %p221
      %p223 = scmp.ne.s32.totalorder %s212, %s213
      %p224 = scmp.eq.s32.totalorder %s21, 0
      %p225 = por %p223, %p224
      %p226 = scmp.ne.s32.totalorder %s212, %s213
      %p227 = scmp.eq.s32.totalorder %s22, 1
      %p228 = por %p226, %p227
      %p230 = scmp.ne.s32.totalorder %s213, %s229
      %p231 = scmp.eq.s32.totalorder %s22, 0
      %p232 = por %p230, %p231
      %s233 = ssub.s32 %s23, %s42
      %s234 = ssub.s32 %s24, %s38
      %s235 = sor.u32 %s233, %s234
      %p236 = scmp.eq.s32.totalorder %s235, 0
      %s238 = sadd.s32 %s237, 1
      %s239 = scalar_select %p236, %s237, %s238
      %p242 = pneg %p236
      %p243 = scmp.eq.s32.totalorder %s16, 1
      %p244 = por %p242, %p243
      %p245 = scmp.ne.s32.totalorder %s237, %s240
      %p246 = scmp.eq.s32.totalorder %s16, 0
      %p247 = por %p245, %p246
      %p248 = scmp.ne.s32.totalorder %s237, %s240
      %p249 = scmp.eq.s32.totalorder %s21, 1
      %p250 = por %p248, %p249
      %p251 = scmp.ne.s32.totalorder %s240, %s241
      %p252 = scmp.eq.s32.totalorder %s21, 0
      %p253 = por %p251, %p252
      %p254 = scmp.ne.s32.totalorder %s240, %s241
      %p255 = scmp.eq.s32.totalorder %s22, 1
      %p256 = por %p254, %p255
      %p258 = scmp.ne.s32.totalorder %s241, %s257
      %p259 = scmp.eq.s32.totalorder %s22, 0
      %p260 = por %p258, %p259
      %p261 = scmp.le.s32.totalorder 1, %s16
      %p262 = scmp.lt.s32.totalorder %s16, 3
      %p263 = pnand %p261, %p262
      %p264 = pneg %p263
      // Predicated region
      $region9: #{compressor_forward.1} parent=5 // pred_check
        _
      $region10: #{compressor_forward.1} parent=5 // pred_check_branch
        %266 = sbr.rel (%p263) target = $region12
      $region11: #{compressor_forward.1} parent=5 // pred_region
        %s267 = ssub.s32 %s16, 1
        // Predicated region
        $region13: #{compressor_forward.1} parent=11 // pred_check
          %p268 = pneg %p116
        $region14: #{compressor_forward.1} parent=11 // pred_check_branch
          %270 = sbr.rel (%p268) target = $region16
        $region15: #{compressor_forward.1} parent=11 // pred_region
          %s272 = ssub.s32 32, 32
          %273 = vsyncadd [#allocation3], %s272
          %s275 = sshll.u32 %s2, 4
          %s276 = int_to_ptr.vmem [resolvable:$true] %s275
          %278 = dma.vmem_to_smem %s276, 32, [#allocation2], [#allocation3]
        $region16: #{compressor_forward.1} parent=11 // pred_fallthru
          _
        // Predicated region
        $region17: #{compressor_forward.1} parent=11 // pred_check
          %p279 = pneg %p137
        $region18: #{compressor_forward.1} parent=11 // pred_check_branch
          %281 = sbr.rel (%p279) target = $region20
        $region19: #{compressor_forward.1} parent=11 // pred_region
          %s283 = ssub.s32 32, 32
          %284 = vsyncadd [#allocation5], %s283
          %s286 = sshll.u32 %s3, 4
          %s287 = int_to_ptr.vmem [resolvable:$true] %s286
          %289 = dma.vmem_to_smem %s287, 32, [#allocation4], [#allocation5]
        $region20: #{compressor_forward.1} parent=11 // pred_fallthru
          _
      $region12: #{compressor_forward.1} parent=5 // pred_fallthru
        _
      %p290 = scmp.lt.s32.totalorder %s16, 2
      // Predicated region
      $region21: #{compressor_forward.1} parent=5 // pred_check
        %p291 = pneg %p290
      $region22: #{compressor_forward.1} parent=5 // pred_check_branch
        %293 = sbr.rel (%p291) target = $region24
      $region23: #{compressor_forward.1} parent=5 // pred_region
        // Predicated region
        $region25: #{compressor_forward.1} parent=23 // pred_check
          %p294 = pneg %p59
        $region26: #{compressor_forward.1} parent=23 // pred_check_branch
          %296 = sbr.rel (%p294) target = $region28
        $region27: #{compressor_forward.1} parent=23 // pred_region
          %s297 = sadd.s32 %s24, %s25
          %p298 = scmp.lt.s32.totalorder %s23, 1
          %s299 = scalar_select %p298, %s23, 1
          %p300 = scmp.lt.s32.totalorder %s297, 0
          %s301 = scalar_select %p300, %s297, 0
          %s302 = smul.addr %s299, 2
          %s303 = sadd.s32 %s301, %s302
          %s304 = smul.addr %s303, 2
          %s305 = scalar_lea.vmem %s0, %s304
          %s306 = sadd.s32 %s24, %s25
        $region28: #{compressor_forward.1} parent=23 // pred_fallthru
          _
        // Predicated region
        $region29: #{compressor_forward.1} parent=23 // pred_check
          %p307 = pneg %p89
        $region30: #{compressor_forward.1} parent=23 // pred_check_branch
          %309 = sbr.rel (%p307) target = $region32
        $region31: #{compressor_forward.1} parent=23 // pred_region
          %s310 = sadd.s32 %s24, %s25
          %p311 = scmp.lt.s32.totalorder %s23, 1
          %s312 = scalar_select %p311, %s23, 1
          %p313 = scmp.lt.s32.totalorder %s310, 0
          %s314 = scalar_select %p313, %s310, 0
          %s315 = smul.addr %s312, 2
          %s316 = sadd.s32 %s314, %s315
          %s317 = smul.addr %s316, 2
          %s318 = scalar_lea.vmem %s1, %s317
          %s319 = sadd.s32 %s24, %s25
        $region32: #{compressor_forward.1} parent=23 // pred_fallthru
          _
      $region24: #{compressor_forward.1} parent=5 // pred_fallthru
        _
      %p320 = scmp.le.s32.totalorder 1, %s16
      %p321 = scmp.lt.s32.totalorder %s16, 3
      %p322 = pnand %p320, %p321
      %p323 = pneg %p322
      // Predicated region
      $region33: #{compressor_forward.1} parent=5 // pred_check
        _
      $region34: #{compressor_forward.1} parent=5 // pred_check_branch
        %325 = sbr.rel (%p322) target = $region36
      $region35: #{compressor_forward.1} parent=5 // pred_region
        %s326 = ssub.s32 %s16, 1
        // Predicated region
        $region37: #{compressor_forward.1} parent=35 // pred_check
          %p327 = pneg %p116
        $region38: #{compressor_forward.1} parent=35 // pred_check_branch
          %329 = sbr.rel (%p327) target = $region40
        $region39: #{compressor_forward.1} parent=35 // pred_region
          %330 = dma.done [#allocation3], 32
        $region40: #{compressor_forward.1} parent=35 // pred_fallthru
          _
        // Predicated region
        $region41: #{compressor_forward.1} parent=35 // pred_check
          %p331 = pneg %p137
        $region42: #{compressor_forward.1} parent=35 // pred_check_branch
          %333 = sbr.rel (%p331) target = $region44
        $region43: #{compressor_forward.1} parent=35 // pred_region
          %334 = dma.done [#allocation5], 32
        $region44: #{compressor_forward.1} parent=35 // pred_fallthru
          _
        %335 = sfence
        %s336 = sadd.s32 %s27, %s28
        %p337 = scmp.lt.s32.totalorder %s26, 1
        %s338 = scalar_select %p337, %s26, 1
        %p339 = scmp.lt.s32.totalorder %s336, 0
        %s340 = scalar_select %p339, %s336, 0
        %s341 = smul.addr %s338, 2
        %s342 = sadd.s32 %s340, %s341
        %s343 = smul.addr %s342, 2
        %s344 = scalar_lea.vmem %s0, %s343
        %p345 = pneg %p65
        %p346 = pneg %p62
        %s347 = sadd.s32 %s27, %s28
        %p348 = scmp.lt.s32.totalorder %s26, 1
        %s349 = scalar_select %p348, %s26, 1
        %p350 = scmp.lt.s32.totalorder %s347, 0
        %s351 = scalar_select %p350, %s347, 0
        %s352 = smul.addr %s349, 2
        %s353 = sadd.s32 %s351, %s352
        %s354 = smul.addr %s353, 2
        %s355 = scalar_lea.vmem %s1, %s354
        %p356 = pneg %p95
        %p357 = pneg %p92
        %p358 = pneg %p116
        %p359 = pneg %p113
        %p360 = pneg %p137
        %p361 = pneg %p134
        %p362 = pneg %p167
        %p363 = pneg %p164
        %s364 = sadd.s32 %s27, %s28
        %p365 = scmp.lt.s32.totalorder %s26, 1
        %s366 = scalar_select %p365, %s26, 1
        %p367 = scmp.lt.s32.totalorder %s364, 0
        %s368 = scalar_select %p367, %s364, 0
        %s369 = smul.addr %s366, 2
        %s370 = sadd.s32 %s368, %s369
        %s371 = smul.addr %s370, 2
        %s372 = scalar_lea.vmem %s4, %s371
        %p373 = pneg %p197
        %p374 = pneg %p194
        %s375 = sadd.s32 %s27, %s28
        %p376 = scmp.lt.s32.totalorder %s26, 1
        %s377 = scalar_select %p376, %s26, 1
        %p378 = scmp.lt.s32.totalorder %s375, 0
        %s379 = scalar_select %p378, %s375, 0
        %s380 = smul.addr %s377, 2
        %s381 = sadd.s32 %s379, %s380
        %s382 = smul.addr %s381, 2
        %s383 = scalar_lea.vmem %s5, %s382
        %p384 = pneg %p225
        %p385 = pneg %p222
        %p386 = scmp.lt.s32.totalorder %s26, 1
        %s387 = scalar_select %p386, %s26, 1
        %p388 = scmp.lt.s32.totalorder %s27, 0
        %s389 = scalar_select %p388, %s27, 0
        %s390 = sadd.s32 %s389, %s387
        %s391 = smul.addr %s390, 8
        %s392 = scalar_lea.vmem %s6, %s391
        %p393 = pneg %p253
        %p394 = pneg %p250
        %p395 = scmp.lt.s32.totalorder %s26, 1
        %s396 = scalar_select %p395, %s26, 1
        %p397 = scmp.lt.s32.totalorder %s27, 0
        %s398 = scalar_select %p397, %s27, 0
        %s399 = sadd.s32 %s398, %s396
        %s400 = smul.addr %s399, 8
        %s401 = scalar_lea.vmem %s7, %s400
        %s402 = sadd.s32 %s27, %s28
        %p403 = scmp.lt.s32.totalorder %s26, 1
        %s404 = scalar_select %p403, %s26, 1
        %p405 = scmp.lt.s32.totalorder %s402, 0
        %s406 = scalar_select %p405, %s402, 0
        %s407 = smul.addr %s404, 2
        %s408 = sadd.s32 %s406, %s407
        %s409 = smul.addr %s408, 2
        %s410 = scalar_lea.vmem %s0, %s409
        %s411 = sadd.s32 %s27, %s28
        %s412 = sadd.s32 %s27, %s28
        %p413 = scmp.lt.s32.totalorder %s26, 1
        %s414 = scalar_select %p413, %s26, 1
        %p415 = scmp.lt.s32.totalorder %s412, 0
        %s416 = scalar_select %p415, %s412, 0
        %s417 = smul.addr %s414, 2
        %s418 = sadd.s32 %s416, %s417
        %s419 = smul.addr %s418, 2
        %s420 = scalar_lea.vmem %s1, %s419
        %s421 = sadd.s32 %s27, %s28
        %s422 = sadd.s32 %s27, %s28
        %p423 = scmp.lt.s32.totalorder %s26, 1
        %s424 = scalar_select %p423, %s26, 1
        %p425 = scmp.lt.s32.totalorder %s422, 0
        %s426 = scalar_select %p425, %s422, 0
        %s427 = smul.addr %s424, 2
        %s428 = sadd.s32 %s426, %s427
        %s429 = smul.addr %s428, 2
        %s430 = scalar_lea.vmem %s4, %s429
        %s431 = sadd.s32 %s27, %s28
        %s432 = sadd.s32 %s27, %s28
        %p433 = scmp.lt.s32.totalorder %s26, 1
        %s434 = scalar_select %p433, %s26, 1
        %p435 = scmp.lt.s32.totalorder %s432, 0
        %s436 = scalar_select %p435, %s432, 0
        %s437 = smul.addr %s434, 2
        %s438 = sadd.s32 %s436, %s437
        %s439 = smul.addr %s438, 2
        %s440 = scalar_lea.vmem %s5, %s439
        %s441 = sadd.s32 %s27, %s28
        %p442 = scmp.lt.s32.totalorder %s26, 1
        %s443 = scalar_select %p442, %s26, 1
        %p444 = scmp.lt.s32.totalorder %s27, 0
        %s445 = scalar_select %p444, %s27, 0
        %s446 = sadd.s32 %s445, %s443
        %s447 = smul.addr %s446, 8
        %s448 = scalar_lea.vmem %s6, %s447
        %p449 = scmp.lt.s32.totalorder %s26, 1
        %s450 = scalar_select %p449, %s26, 1
        %p451 = scmp.lt.s32.totalorder %s27, 0
        %s452 = scalar_select %p451, %s27, 0
        %s453 = sadd.s32 %s452, %s450
        %s454 = smul.addr %s453, 8
        %s455 = scalar_lea.vmem %s7, %s454
        %p456 = scmp.eq.s32.totalorder %s28, 0
        // Predicated region
        $region45: #{compressor_forward.1} parent=35 // pred_check
          %p457 = pneg %p456
        $region46: #{compressor_forward.1} parent=35 // pred_check_branch
          %459 = sbr.rel (%p457) target = $region48
        $region47: #{compressor_forward.1} parent=35 // pred_region
          %460 = vst [vmem:[%s448] sm:$0xff] 0.0
          %461 = vst [vmem:[%s455] sm:$0xff] 0.0
        $region48: #{compressor_forward.1} parent=35 // pred_fallthru
          _
        %v462 = vld [vmem:[%s410] sm:$0x3]
        %s463 = scalar_lea.vmem %s410, 2
        %v464 = vld [vmem:[%s463] sm:$0x3]
        %s465 = sld [smem:[#allocation2 + $0x2b]]
        %s466 = sld [smem:[#allocation2 + $0xab]]
        %v467 = vstv %s465
        %v468 = vsub.f32 %v462, %v467
        %v469 = vround.ne.pseudo %v468
        %v470 = vadd.f32 %v469, %v467
        %v471 = vstv %s466
        %v472 = vsub.f32 %v464, %v471
        %v473 = vround.ne.pseudo %v472
        %v474 = vadd.f32 %v473, %v471
        %v475 = vmax.f32 %v474, 0.1
        %v476 = vsub.f32 %v462, %v470
        %v477 = vround.ne.pseudo %v476
        %v478 = vadd.f32 %v477, %v470
        %v479 = vsub.f32 %v464, %v470
        %v480 = vround.ne.pseudo %v479
        %v481 = vadd.f32 %v480, %v470
        %482 = vst [vmem:[%s440] sm:$0x3] %v470
        %s483 = scalar_lea.vmem %s440, 2
        %484 = vst [vmem:[%s483] sm:$0x3] %v474
        %485 = vst [vmem:[%s430] sm:$0x3] %v478
        %s486 = scalar_lea.vmem %s430, 2
        %487 = vst [vmem:[%s486] sm:$0x3] %v481
        %v488 = vrcp.pop %v475
        %v489 = vmul.f32 0.70710677, %v488
        %s490 = sld [smem:[#allocation2]]
        %v491 = vstv %s490
        %v492 = vmul.f32 %v491, %v470
        %s493 = sld [smem:[#allocation2 + $0x3]]
        %v494 = vstv %s493
        %v495 = vadd.f32 %v492, %v494
        %s496 = sld [smem:[#allocation2 + $0x2c]]
        %v497 = vstv %s496
        %v498 = vadd.f32 %v495, %v497
        %v499 = vsub.f32 %v495, %v497
        %s500 = sld [smem:[#allocation2 + $0x6]]
        %v501 = vtanh.pop %v498
        %v502 = vtanh.pop %v499
        %v503 = vstv %s500
        %v504 = vmul.f32 %v503, %v501
        %v505 = vmul.f32 %v503, %v502
        %v506 = vadd.f32 %v498, %v504
        %v507 = vadd.f32 %v499, %v505
        %s508 = sld [smem:[#allocation2 + $0x1]]
        %v509 = vstv %s508
        %v510 = vmul.f32 %v509, %v470
        %s511 = sld [smem:[#allocation2 + $0x4]]
        %v512 = vstv %s511
        %v513 = vadd.f32 %v510, %v512
        %s514 = sld [smem:[#allocation2 + $0x2d]]
        %v515 = vstv %s514
        %v516 = vadd.f32 %v513, %v515
        %v517 = vsub.f32 %v513, %v515
        %s518 = sld [smem:[#allocation2 + $0x7]]
        %v519 = vtanh.pop %v516
        %v520 = vtanh.pop %v517
        %v521 = vstv %s518
        %v522 = vmul.f32 %v521, %v519
        %v523 = vmul.f32 %v521, %v520
        %v524 = vadd.f32 %v516, %v522
        %v525 = vadd.f32 %v517, %v523
        %s526 = sld [smem:[#allocation2 + $0x2]]
        %v527 = vstv %s526
        %v528 = vmul.f32 %v527, %v470
        %s529 = sld [smem:[#allocation2 + $0x5]]
        %v530 = vstv %s529
        %v531 = vadd.f32 %v528, %v530
        %s532 = sld [smem:[#allocation2 + $0x2e]]
        %v533 = vstv %s532
        %v534 = vadd.f32 %v531, %v533
        %v535 = vsub.f32 %v531, %v533
        %s536 = sld [smem:[#allocation2 + $0x8]]
        %v537 = vtanh.pop %v534
        %v538 = vtanh.pop %v535
        %v539 = vstv %s536
        %v540 = vmul.f32 %v539, %v537
        %v541 = vmul.f32 %v539, %v538
        %v542 = vadd.f32 %v534, %v540
        %v543 = vadd.f32 %v535, %v541
        %s544 = sld [smem:[#allocation2 + $0x9]]
        %v545 = vstv %s544
        %v546 = vmul.f32 %v545, %v506
        %v547 = vmul.f32 %v545, %v507
        %s548 = sld [smem:[#allocation2 + $0xa]]
        %v549 = vstv %s548
        %v550 = vmul.f32 %v549, %v524
        %v551 = vmul.f32 %v549, %v525
        %v552 = vadd.f32 %v546, %v550
        %v553 = vadd.f32 %v547, %v551
        %s554 = sld [smem:[#allocation2 + $0xb]]
        %v555 = vstv %s554
        %v556 = vmul.f32 %v555, %v542
        %v557 = vmul.f32 %v555, %v543
        %v558 = vadd.f32 %v552, %v556
        %v559 = vadd.f32 %v553, %v557
        %s560 = sld [smem:[#allocation2 + $0x12]]
        %v561 = vstv %s560
        %v562 = vadd.f32 %v558, %v561
        %v563 = vadd.f32 %v559, %v561
        %s564 = sld [smem:[#allocation2 + $0x15]]
        %v565 = vtanh.pop %v562
        %v566 = vtanh.pop %v563
        %v567 = vstv %s564
        %v568 = vmul.f32 %v567, %v565
        %v569 = vmul.f32 %v567, %v566
        %v570 = vadd.f32 %v562, %v568
        %v571 = vadd.f32 %v563, %v569
        %s572 = sld [smem:[#allocation2 + $0xc]]
        %v573 = vstv %s572
        %v574 = vmul.f32 %v573, %v506
        %v575 = vmul.f32 %v573, %v507
        %s576 = sld [smem:[#allocation2 + $0xd]]
        %v577 = vstv %s576
        %v578 = vmul.f32 %v577, %v524
        %v579 = vmul.f32 %v577, %v525
        %v580 = vadd.f32 %v574, %v578
        %v581 = vadd.f32 %v575, %v579
        %s582 = sld [smem:[#allocation2 + $0xe]]
        %v583 = vstv %s582
        %v584 = vmul.f32 %v583, %v542
        %v585 = vmul.f32 %v583, %v543
        %v586 = vadd.f32 %v580, %v584
        %v587 = vadd.f32 %v581, %v585
        %s588 = sld [smem:[#allocation2 + $0x13]]
        %v589 = vstv %s588
        %v590 = vadd.f32 %v586, %v589
        %v591 = vadd.f32 %v587, %v589
        %s592 = sld [smem:[#allocation2 + $0x16]]
        %v593 = vtanh.pop %v590
        %v594 = vtanh.pop %v591
        %v595 = vstv %s592
        %v596 = vmul.f32 %v595, %v593
        %v597 = vmul.f32 %v595, %v594
        %v598 = vadd.f32 %v590, %v596
        %v599 = vadd.f32 %v591, %v597
        %s600 = sld [smem:[#allocation2 + $0xf]]
        %v601 = vstv %s600
        %v602 = vmul.f32 %v601, %v506
        %v603 = vmul.f32 %v601, %v507
        %s604 = sld [smem:[#allocation2 + $0x10]]
        %v605 = vstv %s604
        %v606 = vmul.f32 %v605, %v524
        %v607 = vmul.f32 %v605, %v525
        %v608 = vadd.f32 %v602, %v606
        %v609 = vadd.f32 %v603, %v607
        %s610 = sld [smem:[#allocation2 + $0x11]]
        %v611 = vstv %s610
        %v612 = vmul.f32 %v611, %v542
        %v613 = vmul.f32 %v611, %v543
        %v614 = vadd.f32 %v608, %v612
        %v615 = vadd.f32 %v609, %v613
        %s616 = sld [smem:[#allocation2 + $0x14]]
        %v617 = vstv %s616
        %v618 = vadd.f32 %v614, %v617
        %v619 = vadd.f32 %v615, %v617
        %s620 = sld [smem:[#allocation2 + $0x17]]
        %v621 = vtanh.pop %v618
        %v622 = vtanh.pop %v619
        %v623 = vstv %s620
        %v624 = vmul.f32 %v623, %v621
        %v625 = vmul.f32 %v623, %v622
        %v626 = vadd.f32 %v618, %v624
        %v627 = vadd.f32 %v619, %v625
        %s628 = sld [smem:[#allocation2 + $0x18]]
        %v629 = vstv %s628
        %v630 = vmul.f32 %v629, %v570
        %v631 = vmul.f32 %v629, %v571
        %s632 = sld [smem:[#allocation2 + $0x19]]
        %v633 = vstv %s632
        %v634 = vmul.f32 %v633, %v598
        %v635 = vmul.f32 %v633, %v599
        %v636 = vadd.f32 %v630, %v634
        %v637 = vadd.f32 %v631, %v635
        %s638 = sld [smem:[#allocation2 + $0x1a]]
        %v639 = vstv %s638
        %v640 = vmul.f32 %v639, %v626
        %v641 = vmul.f32 %v639, %v627
        %v642 = vadd.f32 %v636, %v640
        %v643 = vadd.f32 %v637, %v641
        %s644 = sld [smem:[#allocation2 + $0x21]]
        %v645 = vstv %s644
        %v646 = vadd.f32 %v642, %v645
        %v647 = vadd.f32 %v643, %v645
        %s648 = sld [smem:[#allocation2 + $0x24]]
        %v649 = vtanh.pop %v646
        %v650 = vtanh.pop %v647
        %v651 = vstv %s648
        %v652 = vmul.f32 %v651, %v649
        %v653 = vmul.f32 %v651, %v650
        %v654 = vadd.f32 %v646, %v652
        %v655 = vadd.f32 %v647, %v653
        %s656 = sld [smem:[#allocation2 + $0x1b]]
        %v657 = vstv %s656
        %v658 = vmul.f32 %v657, %v570
        %v659 = vmul.f32 %v657, %v571
        %s660 = sld [smem:[#allocation2 + $0x1c]]
        %v661 = vstv %s660
        %v662 = vmul.f32 %v661, %v598
        %v663 = vmul.f32 %v661, %v599
        %v664 = vadd.f32 %v658, %v662
        %v665 = vadd.f32 %v659, %v663
        %s666 = sld [smem:[#allocation2 + $0x1d]]
        %v667 = vstv %s666
        %v668 = vmul.f32 %v667, %v626
        %v669 = vmul.f32 %v667, %v627
        %v670 = vadd.f32 %v664, %v668
        %v671 = vadd.f32 %v665, %v669
        %s672 = sld [smem:[#allocation2 + $0x22]]
        %v673 = vstv %s672
        %v674 = vadd.f32 %v670, %v673
        %v675 = vadd.f32 %v671, %v673
        %s676 = sld [smem:[#allocation2 + $0x25]]
        %v677 = vtanh.pop %v674
        %v678 = vtanh.pop %v675
        %v679 = vstv %s676
        %v680 = vmul.f32 %v679, %v677
        %v681 = vmul.f32 %v679, %v678
        %v682 = vadd.f32 %v674, %v680
        %v683 = vadd.f32 %v675, %v681
        %s684 = sld [smem:[#allocation2 + $0x1e]]
        %v685 = vstv %s684
        %v686 = vmul.f32 %v685, %v570
        %v687 = vmul.f32 %v685, %v571
        %s688 = sld [smem:[#allocation2 + $0x1f]]
        %v689 = vstv %s688
        %v690 = vmul.f32 %v689, %v598
        %v691 = vmul.f32 %v689, %v599
        %v692 = vadd.f32 %v686, %v690
        %v693 = vadd.f32 %v687, %v691
        %s694 = sld [smem:[#allocation2 + $0x20]]
        %v695 = vstv %s694
        %v696 = vmul.f32 %v695, %v626
        %v697 = vmul.f32 %v695, %v627
        %v698 = vadd.f32 %v692, %v696
        %v699 = vadd.f32 %v693, %v697
        %s700 = sld [smem:[#allocation2 + $0x23]]
        %v701 = vstv %s700
        %v702 = vadd.f32 %v698, %v701
        %v703 = vadd.f32 %v699, %v701
        %s704 = sld [smem:[#allocation2 + $0x26]]
        %v705 = vtanh.pop %v702
        %v706 = vtanh.pop %v703
        %v707 = vstv %s704
        %v708 = vmul.f32 %v707, %v705
        %v709 = vmul.f32 %v707, %v706
        %v710 = vadd.f32 %v702, %v708
        %v711 = vadd.f32 %v703, %v709
        %s712 = sld [smem:[#allocation2 + $0x27]]
        %v713 = vstv %s712
        %v714 = vmul.f32 %v713, %v654
        %v715 = vmul.f32 %v713, %v655
        %s716 = sld [smem:[#allocation2 + $0x28]]
        %v717 = vstv %s716
        %v718 = vmul.f32 %v717, %v682
        %v719 = vmul.f32 %v717, %v683
        %v720 = vadd.f32 %v714, %v718
        %v721 = vadd.f32 %v715, %v719
        %s722 = sld [smem:[#allocation2 + $0x29]]
        %v723 = vstv %s722
        %v724 = vmul.f32 %v723, %v710
        %v725 = vmul.f32 %v723, %v711
        %v726 = vadd.f32 %v720, %v724
        %v727 = vadd.f32 %v721, %v725
        %s728 = sld [smem:[#allocation2 + $0x2a]]
        %v729 = vstv %s728
        %v730 = vadd.f32 %v726, %v729
        %v731 = vadd.f32 %v727, %v729
        %v732 = vand.u32 2147483647, %v730
        %v733 = vand.u32 2147483647, %v731
        %v734 = vsub.f32 0.0, %v732
        %v735 = vsub.f32 0.0, %v733
        %v736 = vmul.f32 %v734, 1.442695
        %v737 = vpow.pop %v736
        %v738 = vmul.f32 %v735, 1.442695
        %v739 = vpow.pop %v738
        %v740 = vadd.f32 %v737, 1.0
        %v741 = vadd.f32 %v739, 1.0
        %v742 = vrcp.pop %v740
        %v743 = vmul.f32 1.0, %v742
        %v744 = vrcp.pop %v741
        %v745 = vmul.f32 1.0, %v744
        %vm746 = vcmp.ge.f32.partialorder %v730, 0.0
        %vm747 = vcmp.ge.f32.partialorder %v731, 0.0
        %v748 = vsub.f32 1.0, %v743
        %v749 = vsub.f32 1.0, %v745
        %v750 = vsel %vm746, %v743, %v748
        %v751 = vsel %vm747, %v745, %v749
        %v752 = vsub.f32 %v750, %v751
        %v753 = vmax.f32 %v752, 1e-09
        %s754 = sld [smem:[#allocation2 + $0x80]]
        %v755 = vstv %s754
        %v756 = vmul.f32 %v755, %v474
        %s757 = sld [smem:[#allocation2 + $0x83]]
        %v758 = vstv %s757
        %v759 = vadd.f32 %v756, %v758
        %s760 = sld [smem:[#allocation2 + $0xac]]
        %v761 = vstv %s760
        %v762 = vadd.f32 %v759, %v761
        %v763 = vsub.f32 %v759, %v761
        %s764 = sld [smem:[#allocation2 + $0x86]]
        %v765 = vtanh.pop %v762
        %v766 = vtanh.pop %v763
        %v767 = vstv %s764
        %v768 = vmul.f32 %v767, %v765
        %v769 = vmul.f32 %v767, %v766
        %v770 = vadd.f32 %v762, %v768
        %v771 = vadd.f32 %v763, %v769
        %s772 = sld [smem:[#allocation2 + $0x81]]
        %v773 = vstv %s772
        %v774 = vmul.f32 %v773, %v474
        %s775 = sld [smem:[#allocation2 + $0x84]]
        %v776 = vstv %s775
        %v777 = vadd.f32 %v774, %v776
        %s778 = sld [smem:[#allocation2 + $0xad]]
        %v779 = vstv %s778
        %v780 = vadd.f32 %v777, %v779
        %v781 = vsub.f32 %v777, %v779
        %s782 = sld [smem:[#allocation2 + $0x87]]
        %v783 = vtanh.pop %v780
        %v784 = vtanh.pop %v781
        %v785 = vstv %s782
        %v786 = vmul.f32 %v785, %v783
        %v787 = vmul.f32 %v785, %v784
        %v788 = vadd.f32 %v780, %v786
        %v789 = vadd.f32 %v781, %v787
        %s790 = sld [smem:[#allocation2 + $0x82]]
        %v791 = vstv %s790
        %v792 = vmul.f32 %v791, %v474
        %s793 = sld [smem:[#allocation2 + $0x85]]
        %v794 = vstv %s793
        %v795 = vadd.f32 %v792, %v794
        %s796 = sld [smem:[#allocation2 + $0xae]]
        %v797 = vstv %s796
        %v798 = vadd.f32 %v795, %v797
        %v799 = vsub.f32 %v795, %v797
        %s800 = sld [smem:[#allocation2 + $0x88]]
        %v801 = vtanh.pop %v798
        %v802 = vtanh.pop %v799
        %v803 = vstv %s800
        %v804 = vmul.f32 %v803, %v801
        %v805 = vmul.f32 %v803, %v802
        %v806 = vadd.f32 %v798, %v804
        %v807 = vadd.f32 %v799, %v805
        %s808 = sld [smem:[#allocation2 + $0x89]]
        %v809 = vstv %s808
        %v810 = vmul.f32 %v809, %v770
        %v811 = vmul.f32 %v809, %v771
        %s812 = sld [smem:[#allocation2 + $0x8a]]
        %v813 = vstv %s812
        %v814 = vmul.f32 %v813, %v788
        %v815 = vmul.f32 %v813, %v789
        %v816 = vadd.f32 %v810, %v814
        %v817 = vadd.f32 %v811, %v815
        %s818 = sld [smem:[#allocation2 + $0x8b]]
        %v819 = vstv %s818
        %v820 = vmul.f32 %v819, %v806
        %v821 = vmul.f32 %v819, %v807
        %v822 = vadd.f32 %v816, %v820
        %v823 = vadd.f32 %v817, %v821
        %s824 = sld [smem:[#allocation2 + $0x92]]
        %v825 = vstv %s824
        %v826 = vadd.f32 %v822, %v825
        %v827 = vadd.f32 %v823, %v825
        %s828 = sld [smem:[#allocation2 + $0x95]]
        %v829 = vtanh.pop %v826
        %v830 = vtanh.pop %v827
        %v831 = vstv %s828
        %v832 = vmul.f32 %v831, %v829
        %v833 = vmul.f32 %v831, %v830
        %v834 = vadd.f32 %v826, %v832
        %v835 = vadd.f32 %v827, %v833
        %s836 = sld [smem:[#allocation2 + $0x8c]]
        %v837 = vstv %s836
        %v838 = vmul.f32 %v837, %v770
        %v839 = vmul.f32 %v837, %v771
        %s840 = sld [smem:[#allocation2 + $0x8d]]
        %v841 = vstv %s840
        %v842 = vmul.f32 %v841, %v788
        %v843 = vmul.f32 %v841, %v789
        %v844 = vadd.f32 %v838, %v842
        %v845 = vadd.f32 %v839, %v843
        %s846 = sld [smem:[#allocation2 + $0x8e]]
        %v847 = vstv %s846
        %v848 = vmul.f32 %v847, %v806
        %v849 = vmul.f32 %v847, %v807
        %v850 = vadd.f32 %v844, %v848
        %v851 = vadd.f32 %v845, %v849
        %s852 = sld [smem:[#allocation2 + $0x93]]
        %v853 = vstv %s852
        %v854 = vadd.f32 %v850, %v853
        %v855 = vadd.f32 %v851, %v853
        %s856 = sld [smem:[#allocation2 + $0x96]]
        %v857 = vtanh.pop %v854
        %v858 = vtanh.pop %v855
        %v859 = vstv %s856
        %v860 = vmul.f32 %v859, %v857
        %v861 = vmul.f32 %v859, %v858
        %v862 = vadd.f32 %v854, %v860
        %v863 = vadd.f32 %v855, %v861
        %s864 = sld [smem:[#allocation2 + $0x8f]]
        %v865 = vstv %s864
        %v866 = vmul.f32 %v865, %v770
        %v867 = vmul.f32 %v865, %v771
        %s868 = sld [smem:[#allocation2 + $0x90]]
        %v869 = vstv %s868
        %v870 = vmul.f32 %v869, %v788
        %v871 = vmul.f32 %v869, %v789
        %v872 = vadd.f32 %v866, %v870
        %v873 = vadd.f32 %v867, %v871
        %s874 = sld [smem:[#allocation2 + $0x91]]
        %v875 = vstv %s874
        %v876 = vmul.f32 %v875, %v806
        %v877 = vmul.f32 %v875, %v807
        %v878 = vadd.f32 %v872, %v876
        %v879 = vadd.f32 %v873, %v877
        %s880 = sld [smem:[#allocation2 + $0x94]]
        %v881 = vstv %s880
        %v882 = vadd.f32 %v878, %v881
        %v883 = vadd.f32 %v879, %v881
        %s884 = sld [smem:[#allocation2 + $0x97]]
        %v885 = vtanh.pop %v882
        %v886 = vtanh.pop %v883
        %v887 = vstv %s884
        %v888 = vmul.f32 %v887, %v885
        %v889 = vmul.f32 %v887, %v886
        %v890 = vadd.f32 %v882, %v888
        %v891 = vadd.f32 %v883, %v889
        %s892 = sld [smem:[#allocation2 + $0x98]]
        %v893 = vstv %s892
        %v894 = vmul.f32 %v893, %v834
        %v895 = vmul.f32 %v893, %v835
        %s896 = sld [smem:[#allocation2 + $0x99]]
        %v897 = vstv %s896
        %v898 = vmul.f32 %v897, %v862
        %v899 = vmul.f32 %v897, %v863
        %v900 = vadd.f32 %v894, %v898
        %v901 = vadd.f32 %v895, %v899
        %s902 = sld [smem:[#allocation2 + $0x9a]]
        %v903 = vstv %s902
        %v904 = vmul.f32 %v903, %v890
        %v905 = vmul.f32 %v903, %v891
        %v906 = vadd.f32 %v900, %v904
        %v907 = vadd.f32 %v901, %v905
        %s908 = sld [smem:[#allocation2 + $0xa1]]
        %v909 = vstv %s908
        %v910 = vadd.f32 %v906, %v909
        %v911 = vadd.f32 %v907, %v909
        %s912 = sld [smem:[#allocation2 + $0xa4]]
        %v913 = vtanh.pop %v910
        %v914 = vtanh.pop %v911
        %v915 = vstv %s912
        %v916 = vmul.f32 %v915, %v913
        %v917 = vmul.f32 %v915, %v914
        %v918 = vadd.f32 %v910, %v916
        %v919 = vadd.f32 %v911, %v917
        %s920 = sld [smem:[#allocation2 + $0x9b]]
        %v921 = vstv %s920
        %v922 = vmul.f32 %v921, %v834
        %v923 = vmul.f32 %v921, %v835
        %s924 = sld [smem:[#allocation2 + $0x9c]]
        %v925 = vstv %s924
        %v926 = vmul.f32 %v925, %v862
        %v927 = vmul.f32 %v925, %v863
        %v928 = vadd.f32 %v922, %v926
        %v929 = vadd.f32 %v923, %v927
        %s930 = sld [smem:[#allocation2 + $0x9d]]
        %v931 = vstv %s930
        %v932 = vmul.f32 %v931, %v890
        %v933 = vmul.f32 %v931, %v891
        %v934 = vadd.f32 %v928, %v932
        %v935 = vadd.f32 %v929, %v933
        %s936 = sld [smem:[#allocation2 + $0xa2]]
        %v937 = vstv %s936
        %v938 = vadd.f32 %v934, %v937
        %v939 = vadd.f32 %v935, %v937
        %s940 = sld [smem:[#allocation2 + $0xa5]]
        %v941 = vtanh.pop %v938
        %v942 = vtanh.pop %v939
        %v943 = vstv %s940
        %v944 = vmul.f32 %v943, %v941
        %v945 = vmul.f32 %v943, %v942
        %v946 = vadd.f32 %v938, %v944
        %v947 = vadd.f32 %v939, %v945
        %s948 = sld [smem:[#allocation2 + $0x9e]]
        %v949 = vstv %s948
        %v950 = vmul.f32 %v949, %v834
        %v951 = vmul.f32 %v949, %v835
        %s952 = sld [smem:[#allocation2 + $0x9f]]
        %v953 = vstv %s952
        %v954 = vmul.f32 %v953, %v862
        %v955 = vmul.f32 %v953, %v863
        %v956 = vadd.f32 %v950, %v954
        %v957 = vadd.f32 %v951, %v955
        %s958 = sld [smem:[#allocation2 + $0xa0]]
        %v959 = vstv %s958
        %v960 = vmul.f32 %v959, %v890
        %v961 = vmul.f32 %v959, %v891
        %v962 = vadd.f32 %v956, %v960
        %v963 = vadd.f32 %v957, %v961
        %s964 = sld [smem:[#allocation2 + $0xa3]]
        %v965 = vstv %s964
        %v966 = vadd.f32 %v962, %v965
        %v967 = vadd.f32 %v963, %v965
        %s968 = sld [smem:[#allocation2 + $0xa6]]
        %v969 = vtanh.pop %v966
        %v970 = vtanh.pop %v967
        %v971 = vstv %s968
        %v972 = vmul.f32 %v971, %v969
        %v973 = vmul.f32 %v971, %v970
        %v974 = vadd.f32 %v966, %v972
        %v975 = vadd.f32 %v967, %v973
        %s976 = sld [smem:[#allocation2 + $0xa7]]
        %v977 = vstv %s976
        %v978 = vmul.f32 %v977, %v918
        %v979 = vmul.f32 %v977, %v919
        %s980 = sld [smem:[#allocation2 + $0xa8]]
        %v981 = vstv %s980
        %v982 = vmul.f32 %v981, %v946
        %v983 = vmul.f32 %v981, %v947
        %v984 = vadd.f32 %v978, %v982
        %v985 = vadd.f32 %v979, %v983
        %s986 = sld [smem:[#allocation2 + $0xa9]]
        %v987 = vstv %s986
        %v988 = vmul.f32 %v987, %v974
        %v989 = vmul.f32 %v987, %v975
        %v990 = vadd.f32 %v984, %v988
        %v991 = vadd.f32 %v985, %v989
        %s992 = sld [smem:[#allocation2 + $0xaa]]
        %v993 = vstv %s992
        %v994 = vadd.f32 %v990, %v993
        %v995 = vadd.f32 %v991, %v993
        %v996 = vand.u32 2147483647, %v994
        %v997 = vand.u32 2147483647, %v995
        %v998 = vsub.f32 0.0, %v996
        %v999 = vsub.f32 0.0, %v997
        %v1000 = vmul.f32 %v998, 1.442695
        %v1001 = vpow.pop %v1000
        %v1002 = vmul.f32 %v999, 1.442695
        %v1003 = vpow.pop %v1002
        %v1004 = vadd.f32 %v1001, 1.0
        %v1005 = vadd.f32 %v1003, 1.0
        %v1006 = vrcp.pop %v1004
        %v1007 = vmul.f32 1.0, %v1006
        %v1008 = vrcp.pop %v1005
        %v1009 = vmul.f32 1.0, %v1008
        %vm1010 = vcmp.ge.f32.partialorder %v994, 0.0
        %vm1011 = vcmp.ge.f32.partialorder %v995, 0.0
        %v1012 = vsub.f32 1.0, %v1007
        %v1013 = vsub.f32 1.0, %v1009
        %v1014 = vsel %vm1010, %v1007, %v1012
        %v1015 = vsel %vm1011, %v1009, %v1013
        %v1016 = vsub.f32 %v1014, %v1015
        %v1017 = vmax.f32 %v1016, 1e-09
        %v1018 = vsub.f32 %v478, %v470
        %v1019 = vand.u32 2147483647, %v1018
        %v1020 = vsub.f32 0.5, %v1019
        %v1021 = vmul.f32 %v1020, %v489
        %v1022 = verf.f32.pop %v1021
        %v1023 = vsub.f32 -0.5, %v1019
        %v1024 = vmul.f32 %v1023, %v489
        %v1025 = verf.f32.pop %v1024
        %v1026 = vsub.f32 %v1022, %v1025
        %v1027 = vmul.f32 %v1026, 0.5
        %v1028 = vmax.f32 %v1027, 1e-09
        %v1029 = vsub.f32 %v481, %v470
        %v1030 = vand.u32 2147483647, %v1029
        %v1031 = vsub.f32 0.5, %v1030
        %v1032 = vmul.f32 %v1031, %v489
        %v1033 = verf.f32.pop %v1032
        %v1034 = vsub.f32 -0.5, %v1030
        %v1035 = vmul.f32 %v1034, %v489
        %v1036 = verf.f32.pop %v1035
        %v1037 = vsub.f32 %v1033, %v1036
        %v1038 = vmul.f32 %v1037, 0.5
        %v1039 = vmax.f32 %v1038, 1e-09
        %v1040 = vmul.f32 %v753, %v1028
        %v1041 = vmul.f32 %v1017, %v1039
        %v1042 = vmul.f32 %v1040, %v1041
        %v1043 = vlog2.pop %v1042
        %v1044 = vmul.f32 %v1043, 0.6931472
        %v1045 = vrcp.pop 0.6931472
        %v1046 = vmul.f32 %v1044, %v1045
        %v1047 = vsub.f32 0.0, %v1046
        %v1048 = vld [vmem:[%s420] sm:$0x3]
        %s1049 = scalar_lea.vmem %s420, 2
        %v1050 = vld [vmem:[%s1049] sm:$0x3]
        %v1051 = vmax.f32 %v1050, 0.1
        %v1052 = vrcp.pop %v1051
        %v1053 = vmul.f32 0.70710677, %v1052
        %s1054 = sld [smem:[#allocation4]]
        %v1055 = vstv %s1054
        %v1056 = vmul.f32 %v1055, %v1048
        %s1057 = sld [smem:[#allocation4 + $0x3]]
        %v1058 = vstv %s1057
        %v1059 = vadd.f32 %v1056, %v1058
        %s1060 = sld [smem:[#allocation4 + $0x2c]]
        %v1061 = vstv %s1060
        %v1062 = vadd.f32 %v1059, %v1061
        %v1063 = vsub.f32 %v1059, %v1061
        %s1064 = sld [smem:[#allocation4 + $0x6]]
        %v1065 = vtanh.pop %v1062
        %v1066 = vtanh.pop %v1063
        %v1067 = vstv %s1064
        %v1068 = vmul.f32 %v1067, %v1065
        %v1069 = vmul.f32 %v1067, %v1066
        %v1070 = vadd.f32 %v1062, %v1068
        %v1071 = vadd.f32 %v1063, %v1069
        %s1072 = sld [smem:[#allocation4 + $0x1]]
        %v1073 = vstv %s1072
        %v1074 = vmul.f32 %v1073, %v1048
        %s1075 = sld [smem:[#allocation4 + $0x4]]
        %v1076 = vstv %s1075
        %v1077 = vadd.f32 %v1074, %v1076
        %s1078 = sld [smem:[#allocation4 + $0x2d]]
        %v1079 = vstv %s1078
        %v1080 = vadd.f32 %v1077, %v1079
        %v1081 = vsub.f32 %v1077, %v1079
        %s1082 = sld [smem:[#allocation4 + $0x7]]
        %v1083 = vtanh.pop %v1080
        %v1084 = vtanh.pop %v1081
        %v1085 = vstv %s1082
        %v1086 = vmul.f32 %v1085, %v1083
        %v1087 = vmul.f32 %v1085, %v1084
        %v1088 = vadd.f32 %v1080, %v1086
        %v1089 = vadd.f32 %v1081, %v1087
        %s1090 = sld [smem:[#allocation4 + $0x2]]
        %v1091 = vstv %s1090
        %v1092 = vmul.f32 %v1091, %v1048
        %s1093 = sld [smem:[#allocation4 + $0x5]]
        %v1094 = vstv %s1093
        %v1095 = vadd.f32 %v1092, %v1094
        %s1096 = sld [smem:[#allocation4 + $0x2e]]
        %v1097 = vstv %s1096
        %v1098 = vadd.f32 %v1095, %v1097
        %v1099 = vsub.f32 %v1095, %v1097
        %s1100 = sld [smem:[#allocation4 + $0x8]]
        %v1101 = vtanh.pop %v1098
        %v1102 = vtanh.pop %v1099
        %v1103 = vstv %s1100
        %v1104 = vmul.f32 %v1103, %v1101
        %v1105 = vmul.f32 %v1103, %v1102
        %v1106 = vadd.f32 %v1098, %v1104
        %v1107 = vadd.f32 %v1099, %v1105
        %s1108 = sld [smem:[#allocation4 + $0x9]]
        %v1109 = vstv %s1108
        %v1110 = vmul.f32 %v1109, %v1070
        %v1111 = vmul.f32 %v1109, %v1071
        %s1112 = sld [smem:[#allocation4 + $0xa]]
        %v1113 = vstv %s1112
        %v1114 = vmul.f32 %v1113, %v1088
        %v1115 = vmul.f32 %v1113, %v1089
        %v1116 = vadd.f32 %v1110, %v1114
        %v1117 = vadd.f32 %v1111, %v1115
        %s1118 = sld [smem:[#allocation4 + $0xb]]
        %v1119 = vstv %s1118
        %v1120 = vmul.f32 %v1119, %v1106
        %v1121 = vmul.f32 %v1119, %v1107
        %v1122 = vadd.f32 %v1116, %v1120
        %v1123 = vadd.f32 %v1117, %v1121
        %s1124 = sld [smem:[#allocation4 + $0x12]]
        %v1125 = vstv %s1124
        %v1126 = vadd.f32 %v1122, %v1125
        %v1127 = vadd.f32 %v1123, %v1125
        %s1128 = sld [smem:[#allocation4 + $0x15]]
        %v1129 = vtanh.pop %v1126
        %v1130 = vtanh.pop %v1127
        %v1131 = vstv %s1128
        %v1132 = vmul.f32 %v1131, %v1129
        %v1133 = vmul.f32 %v1131, %v1130
        %v1134 = vadd.f32 %v1126, %v1132
        %v1135 = vadd.f32 %v1127, %v1133
        %s1136 = sld [smem:[#allocation4 + $0xc]]
        %v1137 = vstv %s1136
        %v1138 = vmul.f32 %v1137, %v1070
        %v1139 = vmul.f32 %v1137, %v1071
        %s1140 = sld [smem:[#allocation4 + $0xd]]
        %v1141 = vstv %s1140
        %v1142 = vmul.f32 %v1141, %v1088
        %v1143 = vmul.f32 %v1141, %v1089
        %v1144 = vadd.f32 %v1138, %v1142
        %v1145 = vadd.f32 %v1139, %v1143
        %s1146 = sld [smem:[#allocation4 + $0xe]]
        %v1147 = vstv %s1146
        %v1148 = vmul.f32 %v1147, %v1106
        %v1149 = vmul.f32 %v1147, %v1107
        %v1150 = vadd.f32 %v1144, %v1148
        %v1151 = vadd.f32 %v1145, %v1149
        %s1152 = sld [smem:[#allocation4 + $0x13]]
        %v1153 = vstv %s1152
        %v1154 = vadd.f32 %v1150, %v1153
        %v1155 = vadd.f32 %v1151, %v1153
        %s1156 = sld [smem:[#allocation4 + $0x16]]
        %v1157 = vtanh.pop %v1154
        %v1158 = vtanh.pop %v1155
        %v1159 = vstv %s1156
        %v1160 = vmul.f32 %v1159, %v1157
        %v1161 = vmul.f32 %v1159, %v1158
        %v1162 = vadd.f32 %v1154, %v1160
        %v1163 = vadd.f32 %v1155, %v1161
        %s1164 = sld [smem:[#allocation4 + $0xf]]
        %v1165 = vstv %s1164
        %v1166 = vmul.f32 %v1165, %v1070
        %v1167 = vmul.f32 %v1165, %v1071
        %s1168 = sld [smem:[#allocation4 + $0x10]]
        %v1169 = vstv %s1168
        %v1170 = vmul.f32 %v1169, %v1088
        %v1171 = vmul.f32 %v1169, %v1089
        %v1172 = vadd.f32 %v1166, %v1170
        %v1173 = vadd.f32 %v1167, %v1171
        %s1174 = sld [smem:[#allocation4 + $0x11]]
        %v1175 = vstv %s1174
        %v1176 = vmul.f32 %v1175, %v1106
        %v1177 = vmul.f32 %v1175, %v1107
        %v1178 = vadd.f32 %v1172, %v1176
        %v1179 = vadd.f32 %v1173, %v1177
        %s1180 = sld [smem:[#allocation4 + $0x14]]
        %v1181 = vstv %s1180
        %v1182 = vadd.f32 %v1178, %v1181
        %v1183 = vadd.f32 %v1179, %v1181
        %s1184 = sld [smem:[#allocation4 + $0x17]]
        %v1185 = vtanh.pop %v1182
        %v1186 = vtanh.pop %v1183
        %v1187 = vstv %s1184
        %v1188 = vmul.f32 %v1187, %v1185
        %v1189 = vmul.f32 %v1187, %v1186
        %v1190 = vadd.f32 %v1182, %v1188
        %v1191 = vadd.f32 %v1183, %v1189
        %s1192 = sld [smem:[#allocation4 + $0x18]]
        %v1193 = vstv %s1192
        %v1194 = vmul.f32 %v1193, %v1134
        %v1195 = vmul.f32 %v1193, %v1135
        %s1196 = sld [smem:[#allocation4 + $0x19]]
        %v1197 = vstv %s1196
        %v1198 = vmul.f32 %v1197, %v1162
        %v1199 = vmul.f32 %v1197, %v1163
        %v1200 = vadd.f32 %v1194, %v1198
        %v1201 = vadd.f32 %v1195, %v1199
        %s1202 = sld [smem:[#allocation4 + $0x1a]]
        %v1203 = vstv %s1202
        %v1204 = vmul.f32 %v1203, %v1190
        %v1205 = vmul.f32 %v1203, %v1191
        %v1206 = vadd.f32 %v1200, %v1204
        %v1207 = vadd.f32 %v1201, %v1205
        %s1208 = sld [smem:[#allocation4 + $0x21]]
        %v1209 = vstv %s1208
        %v1210 = vadd.f32 %v1206, %v1209
        %v1211 = vadd.f32 %v1207, %v1209
        %s1212 = sld [smem:[#allocation4 + $0x24]]
        %v1213 = vtanh.pop %v1210
        %v1214 = vtanh.pop %v1211
        %v1215 = vstv %s1212
        %v1216 = vmul.f32 %v1215, %v1213
        %v1217 = vmul.f32 %v1215, %v1214
        %v1218 = vadd.f32 %v1210, %v1216
        %v1219 = vadd.f32 %v1211, %v1217
        %s1220 = sld [smem:[#allocation4 + $0x1b]]
        %v1221 = vstv %s1220
        %v1222 = vmul.f32 %v1221, %v1134
        %v1223 = vmul.f32 %v1221, %v1135
        %s1224 = sld [smem:[#allocation4 + $0x1c]]
        %v1225 = vstv %s1224
        %v1226 = vmul.f32 %v1225, %v1162
        %v1227 = vmul.f32 %v1225, %v1163
        %v1228 = vadd.f32 %v1222, %v1226
        %v1229 = vadd.f32 %v1223, %v1227
        %s1230 = sld [smem:[#allocation4 + $0x1d]]
        %v1231 = vstv %s1230
        %v1232 = vmul.f32 %v1231, %v1190
        %v1233 = vmul.f32 %v1231, %v1191
        %v1234 = vadd.f32 %v1228, %v1232
        %v1235 = vadd.f32 %v1229, %v1233
        %s1236 = sld [smem:[#allocation4 + $0x22]]
        %v1237 = vstv %s1236
        %v1238 = vadd.f32 %v1234, %v1237
        %v1239 = vadd.f32 %v1235, %v1237
        %s1240 = sld [smem:[#allocation4 + $0x25]]
        %v1241 = vtanh.pop %v1238
        %v1242 = vtanh.pop %v1239
        %v1243 = vstv %s1240
        %v1244 = vmul.f32 %v1243, %v1241
        %v1245 = vmul.f32 %v1243, %v1242
        %v1246 = vadd.f32 %v1238, %v1244
        %v1247 = vadd.f32 %v1239, %v1245
        %s1248 = sld [smem:[#allocation4 + $0x1e]]
        %v1249 = vstv %s1248
        %v1250 = vmul.f32 %v1249, %v1134
        %v1251 = vmul.f32 %v1249, %v1135
        %s1252 = sld [smem:[#allocation4 + $0x1f]]
        %v1253 = vstv %s1252
        %v1254 = vmul.f32 %v1253, %v1162
        %v1255 = vmul.f32 %v1253, %v1163
        %v1256 = vadd.f32 %v1250, %v1254
        %v1257 = vadd.f32 %v1251, %v1255
        %s1258 = sld [smem:[#allocation4 + $0x20]]
        %v1259 = vstv %s1258
        %v1260 = vmul.f32 %v1259, %v1190
        %v1261 = vmul.f32 %v1259, %v1191
        %v1262 = vadd.f32 %v1256, %v1260
        %v1263 = vadd.f32 %v1257, %v1261
        %s1264 = sld [smem:[#allocation4 + $0x23]]
        %v1265 = vstv %s1264
        %v1266 = vadd.f32 %v1262, %v1265
        %v1267 = vadd.f32 %v1263, %v1265
        %s1268 = sld [smem:[#allocation4 + $0x26]]
        %v1269 = vtanh.pop %v1266
        %v1270 = vtanh.pop %v1267
        %v1271 = vstv %s1268
        %v1272 = vmul.f32 %v1271, %v1269
        %v1273 = vmul.f32 %v1271, %v1270
        %v1274 = vadd.f32 %v1266, %v1272
        %v1275 = vadd.f32 %v1267, %v1273
        %s1276 = sld [smem:[#allocation4 + $0x27]]
        %v1277 = vstv %s1276
        %v1278 = vmul.f32 %v1277, %v1218
        %v1279 = vmul.f32 %v1277, %v1219
        %s1280 = sld [smem:[#allocation4 + $0x28]]
        %v1281 = vstv %s1280
        %v1282 = vmul.f32 %v1281, %v1246
        %v1283 = vmul.f32 %v1281, %v1247
        %v1284 = vadd.f32 %v1278, %v1282
        %v1285 = vadd.f32 %v1279, %v1283
        %s1286 = sld [smem:[#allocation4 + $0x29]]
        %v1287 = vstv %s1286
        %v1288 = vmul.f32 %v1287, %v1274
        %v1289 = vmul.f32 %v1287, %v1275
        %v1290 = vadd.f32 %v1284, %v1288
        %v1291 = vadd.f32 %v1285, %v1289
        %s1292 = sld [smem:[#allocation4 + $0x2a]]
        %v1293 = vstv %s1292
        %v1294 = vadd.f32 %v1290, %v1293
        %v1295 = vadd.f32 %v1291, %v1293
        %v1296 = vand.u32 2147483647, %v1294
        %v1297 = vand.u32 2147483647, %v1295
        %v1298 = vsub.f32 0.0, %v1296
        %v1299 = vsub.f32 0.0, %v1297
        %v1300 = vmul.f32 %v1298, 1.442695
        %v1301 = vpow.pop %v1300
        %v1302 = vmul.f32 %v1299, 1.442695
        %v1303 = vpow.pop %v1302
        %v1304 = vadd.f32 %v1301, 1.0
        %v1305 = vadd.f32 %v1303, 1.0
        %v1306 = vrcp.pop %v1304
        %v1307 = vmul.f32 1.0, %v1306
        %v1308 = vrcp.pop %v1305
        %v1309 = vmul.f32 1.0, %v1308
        %vm1310 = vcmp.ge.f32.partialorder %v1294, 0.0
        %vm1311 = vcmp.ge.f32.partialorder %v1295, 0.0
        %v1312 = vsub.f32 1.0, %v1307
        %v1313 = vsub.f32 1.0, %v1309
        %v1314 = vsel %vm1310, %v1307, %v1312
        %v1315 = vsel %vm1311, %v1309, %v1313
        %v1316 = vsub.f32 %v1314, %v1315
        %v1317 = vmax.f32 %v1316, 1e-09
        %s1318 = sld [smem:[#allocation4 + $0x80]]
        %v1319 = vstv %s1318
        %v1320 = vmul.f32 %v1319, %v1050
        %s1321 = sld [smem:[#allocation4 + $0x83]]
        %v1322 = vstv %s1321
        %v1323 = vadd.f32 %v1320, %v1322
        %s1324 = sld [smem:[#allocation4 + $0xac]]
        %v1325 = vstv %s1324
        %v1326 = vadd.f32 %v1323, %v1325
        %v1327 = vsub.f32 %v1323, %v1325
        %s1328 = sld [smem:[#allocation4 + $0x86]]
        %v1329 = vtanh.pop %v1326
        %v1330 = vtanh.pop %v1327
        %v1331 = vstv %s1328
        %v1332 = vmul.f32 %v1331, %v1329
        %v1333 = vmul.f32 %v1331, %v1330
        %v1334 = vadd.f32 %v1326, %v1332
        %v1335 = vadd.f32 %v1327, %v1333
        %s1336 = sld [smem:[#allocation4 + $0x81]]
        %v1337 = vstv %s1336
        %v1338 = vmul.f32 %v1337, %v1050
        %s1339 = sld [smem:[#allocation4 + $0x84]]
        %v1340 = vstv %s1339
        %v1341 = vadd.f32 %v1338, %v1340
        %s1342 = sld [smem:[#allocation4 + $0xad]]
        %v1343 = vstv %s1342
        %v1344 = vadd.f32 %v1341, %v1343
        %v1345 = vsub.f32 %v1341, %v1343
        %s1346 = sld [smem:[#allocation4 + $0x87]]
        %v1347 = vtanh.pop %v1344
        %v1348 = vtanh.pop %v1345
        %v1349 = vstv %s1346
        %v1350 = vmul.f32 %v1349, %v1347
        %v1351 = vmul.f32 %v1349, %v1348
        %v1352 = vadd.f32 %v1344, %v1350
        %v1353 = vadd.f32 %v1345, %v1351
        %s1354 = sld [smem:[#allocation4 + $0x82]]
        %v1355 = vstv %s1354
        %v1356 = vmul.f32 %v1355, %v1050
        %s1357 = sld [smem:[#allocation4 + $0x85]]
        %v1358 = vstv %s1357
        %v1359 = vadd.f32 %v1356, %v1358
        %s1360 = sld [smem:[#allocation4 + $0xae]]
        %v1361 = vstv %s1360
        %v1362 = vadd.f32 %v1359, %v1361
        %v1363 = vsub.f32 %v1359, %v1361
        %s1364 = sld [smem:[#allocation4 + $0x88]]
        %v1365 = vtanh.pop %v1362
        %v1366 = vtanh.pop %v1363
        %v1367 = vstv %s1364
        %v1368 = vmul.f32 %v1367, %v1365
        %v1369 = vmul.f32 %v1367, %v1366
        %v1370 = vadd.f32 %v1362, %v1368
        %v1371 = vadd.f32 %v1363, %v1369
        %s1372 = sld [smem:[#allocation4 + $0x89]]
        %v1373 = vstv %s1372
        %v1374 = vmul.f32 %v1373, %v1334
        %v1375 = vmul.f32 %v1373, %v1335
        %s1376 = sld [smem:[#allocation4 + $0x8a]]
        %v1377 = vstv %s1376
        %v1378 = vmul.f32 %v1377, %v1352
        %v1379 = vmul.f32 %v1377, %v1353
        %v1380 = vadd.f32 %v1374, %v1378
        %v1381 = vadd.f32 %v1375, %v1379
        %s1382 = sld [smem:[#allocation4 + $0x8b]]
        %v1383 = vstv %s1382
        %v1384 = vmul.f32 %v1383, %v1370
        %v1385 = vmul.f32 %v1383, %v1371
        %v1386 = vadd.f32 %v1380, %v1384
        %v1387 = vadd.f32 %v1381, %v1385
        %s1388 = sld [smem:[#allocation4 + $0x92]]
        %v1389 = vstv %s1388
        %v1390 = vadd.f32 %v1386, %v1389
        %v1391 = vadd.f32 %v1387, %v1389
        %s1392 = sld [smem:[#allocation4 + $0x95]]
        %v1393 = vtanh.pop %v1390
        %v1394 = vtanh.pop %v1391
        %v1395 = vstv %s1392
        %v1396 = vmul.f32 %v1395, %v1393
        %v1397 = vmul.f32 %v1395, %v1394
        %v1398 = vadd.f32 %v1390, %v1396
        %v1399 = vadd.f32 %v1391, %v1397
        %s1400 = sld [smem:[#allocation4 + $0x8c]]
        %v1401 = vstv %s1400
        %v1402 = vmul.f32 %v1401, %v1334
        %v1403 = vmul.f32 %v1401, %v1335
        %s1404 = sld [smem:[#allocation4 + $0x8d]]
        %v1405 = vstv %s1404
        %v1406 = vmul.f32 %v1405, %v1352
        %v1407 = vmul.f32 %v1405, %v1353
        %v1408 = vadd.f32 %v1402, %v1406
        %v1409 = vadd.f32 %v1403, %v1407
        %s1410 = sld [smem:[#allocation4 + $0x8e]]
        %v1411 = vstv %s1410
        %v1412 = vmul.f32 %v1411, %v1370
        %v1413 = vmul.f32 %v1411, %v1371
        %v1414 = vadd.f32 %v1408, %v1412
        %v1415 = vadd.f32 %v1409, %v1413
        %s1416 = sld [smem:[#allocation4 + $0x93]]
        %v1417 = vstv %s1416
        %v1418 = vadd.f32 %v1414, %v1417
        %v1419 = vadd.f32 %v1415, %v1417
        %s1420 = sld [smem:[#allocation4 + $0x96]]
        %v1421 = vtanh.pop %v1418
        %v1422 = vtanh.pop %v1419
        %v1423 = vstv %s1420
        %v1424 = vmul.f32 %v1423, %v1421
        %v1425 = vmul.f32 %v1423, %v1422
        %v1426 = vadd.f32 %v1418, %v1424
        %v1427 = vadd.f32 %v1419, %v1425
        %s1428 = sld [smem:[#allocation4 + $0x8f]]
        %v1429 = vstv %s1428
        %v1430 = vmul.f32 %v1429, %v1334
        %v1431 = vmul.f32 %v1429, %v1335
        %s1432 = sld [smem:[#allocation4 + $0x90]]
        %v1433 = vstv %s1432
        %v1434 = vmul.f32 %v1433, %v1352
        %v1435 = vmul.f32 %v1433, %v1353
        %v1436 = vadd.f32 %v1430, %v1434
        %v1437 = vadd.f32 %v1431, %v1435
        %s1438 = sld [smem:[#allocation4 + $0x91]]
        %v1439 = vstv %s1438
        %v1440 = vmul.f32 %v1439, %v1370
        %v1441 = vmul.f32 %v1439, %v1371
        %v1442 = vadd.f32 %v1436, %v1440
        %v1443 = vadd.f32 %v1437, %v1441
        %s1444 = sld [smem:[#allocation4 + $0x94]]
        %v1445 = vstv %s1444
        %v1446 = vadd.f32 %v1442, %v1445
        %v1447 = vadd.f32 %v1443, %v1445
        %s1448 = sld [smem:[#allocation4 + $0x97]]
        %v1449 = vtanh.pop %v1446
        %v1450 = vtanh.pop %v1447
        %v1451 = vstv %s1448
        %v1452 = vmul.f32 %v1451, %v1449
        %v1453 = vmul.f32 %v1451, %v1450
        %v1454 = vadd.f32 %v1446, %v1452
        %v1455 = vadd.f32 %v1447, %v1453
        %s1456 = sld [smem:[#allocation4 + $0x98]]
        %v1457 = vstv %s1456
        %v1458 = vmul.f32 %v1457, %v1398
        %v1459 = vmul.f32 %v1457, %v1399
        %s1460 = sld [smem:[#allocation4 + $0x99]]
        %v1461 = vstv %s1460
        %v1462 = vmul.f32 %v1461, %v1426
        %v1463 = vmul.f32 %v1461, %v1427
        %v1464 = vadd.f32 %v1458, %v1462
        %v1465 = vadd.f32 %v1459, %v1463
        %s1466 = sld [smem:[#allocation4 + $0x9a]]
        %v1467 = vstv %s1466
        %v1468 = vmul.f32 %v1467, %v1454
        %v1469 = vmul.f32 %v1467, %v1455
        %v1470 = vadd.f32 %v1464, %v1468
        %v1471 = vadd.f32 %v1465, %v1469
        %s1472 = sld [smem:[#allocation4 + $0xa1]]
        %v1473 = vstv %s1472
        %v1474 = vadd.f32 %v1470, %v1473
        %v1475 = vadd.f32 %v1471, %v1473
        %s1476 = sld [smem:[#allocation4 + $0xa4]]
        %v1477 = vtanh.pop %v1474
        %v1478 = vtanh.pop %v1475
        %v1479 = vstv %s1476
        %v1480 = vmul.f32 %v1479, %v1477
        %v1481 = vmul.f32 %v1479, %v1478
        %v1482 = vadd.f32 %v1474, %v1480
        %v1483 = vadd.f32 %v1475, %v1481
        %s1484 = sld [smem:[#allocation4 + $0x9b]]
        %v1485 = vstv %s1484
        %v1486 = vmul.f32 %v1485, %v1398
        %v1487 = vmul.f32 %v1485, %v1399
        %s1488 = sld [smem:[#allocation4 + $0x9c]]
        %v1489 = vstv %s1488
        %v1490 = vmul.f32 %v1489, %v1426
        %v1491 = vmul.f32 %v1489, %v1427
        %v1492 = vadd.f32 %v1486, %v1490
        %v1493 = vadd.f32 %v1487, %v1491
        %s1494 = sld [smem:[#allocation4 + $0x9d]]
        %v1495 = vstv %s1494
        %v1496 = vmul.f32 %v1495, %v1454
        %v1497 = vmul.f32 %v1495, %v1455
        %v1498 = vadd.f32 %v1492, %v1496
        %v1499 = vadd.f32 %v1493, %v1497
        %s1500 = sld [smem:[#allocation4 + $0xa2]]
        %v1501 = vstv %s1500
        %v1502 = vadd.f32 %v1498, %v1501
        %v1503 = vadd.f32 %v1499, %v1501
        %s1504 = sld [smem:[#allocation4 + $0xa5]]
        %v1505 = vtanh.pop %v1502
        %v1506 = vtanh.pop %v1503
        %v1507 = vstv %s1504
        %v1508 = vmul.f32 %v1507, %v1505
        %v1509 = vmul.f32 %v1507, %v1506
        %v1510 = vadd.f32 %v1502, %v1508
        %v1511 = vadd.f32 %v1503, %v1509
        %s1512 = sld [smem:[#allocation4 + $0x9e]]
        %v1513 = vstv %s1512
        %v1514 = vmul.f32 %v1513, %v1398
        %v1515 = vmul.f32 %v1513, %v1399
        %s1516 = sld [smem:[#allocation4 + $0x9f]]
        %v1517 = vstv %s1516
        %v1518 = vmul.f32 %v1517, %v1426
        %v1519 = vmul.f32 %v1517, %v1427
        %v1520 = vadd.f32 %v1514, %v1518
        %v1521 = vadd.f32 %v1515, %v1519
        %s1522 = sld [smem:[#allocation4 + $0xa0]]
        %v1523 = vstv %s1522
        %v1524 = vmul.f32 %v1523, %v1454
        %v1525 = vmul.f32 %v1523, %v1455
        %v1526 = vadd.f32 %v1520, %v1524
        %v1527 = vadd.f32 %v1521, %v1525
        %s1528 = sld [smem:[#allocation4 + $0xa3]]
        %v1529 = vstv %s1528
        %v1530 = vadd.f32 %v1526, %v1529
        %v1531 = vadd.f32 %v1527, %v1529
        %s1532 = sld [smem:[#allocation4 + $0xa6]]
        %v1533 = vtanh.pop %v1530
        %v1534 = vtanh.pop %v1531
        %v1535 = vstv %s1532
        %v1536 = vmul.f32 %v1535, %v1533
        %v1537 = vmul.f32 %v1535, %v1534
        %v1538 = vadd.f32 %v1530, %v1536
        %v1539 = vadd.f32 %v1531, %v1537
        %s1540 = sld [smem:[#allocation4 + $0xa7]]
        %v1541 = vstv %s1540
        %v1542 = vmul.f32 %v1541, %v1482
        %v1543 = vmul.f32 %v1541, %v1483
        %s1544 = sld [smem:[#allocation4 + $0xa8]]
        %v1545 = vstv %s1544
        %v1546 = vmul.f32 %v1545, %v1510
        %v1547 = vmul.f32 %v1545, %v1511
        %v1548 = vadd.f32 %v1542, %v1546
        %v1549 = vadd.f32 %v1543, %v1547
        %s1550 = sld [smem:[#allocation4 + $0xa9]]
        %v1551 = vstv %s1550
        %v1552 = vmul.f32 %v1551, %v1538
        %v1553 = vmul.f32 %v1551, %v1539
        %v1554 = vadd.f32 %v1548, %v1552
        %v1555 = vadd.f32 %v1549, %v1553
        %s1556 = sld [smem:[#allocation4 + $0xaa]]
        %v1557 = vstv %s1556
        %v1558 = vadd.f32 %v1554, %v1557
        %v1559 = vadd.f32 %v1555, %v1557
        %v1560 = vand.u32 2147483647, %v1558
        %v1561 = vand.u32 2147483647, %v1559
        %v1562 = vsub.f32 0.0, %v1560
        %v1563 = vsub.f32 0.0, %v1561
        %v1564 = vmul.f32 %v1562, 1.442695
        %v1565 = vpow.pop %v1564
        %v1566 = vmul.f32 %v1563, 1.442695
        %v1567 = vpow.pop %v1566
        %v1568 = vadd.f32 %v1565, 1.0
        %v1569 = vadd.f32 %v1567, 1.0
        %v1570 = vrcp.pop %v1568
        %v1571 = vmul.f32 1.0, %v1570
        %v1572 = vrcp.pop %v1569
        %v1573 = vmul.f32 1.0, %v1572
        %vm1574 = vcmp.ge.f32.partialorder %v1558, 0.0
        %vm1575 = vcmp.ge.f32.partialorder %v1559, 0.0
        %v1576 = vsub.f32 1.0, %v1571
        %v1577 = vsub.f32 1.0, %v1573
        %v1578 = vsel %vm1574, %v1571, %v1576
        %v1579 = vsel %vm1575, %v1573, %v1577
        %v1580 = vsub.f32 %v1578, %v1579
        %v1581 = vmax.f32 %v1580, 1e-09
        %v1582 = vmul.f32 %v1053, 0.5
        %v1583 = verf.f32.pop %v1582
        %v1584 = vmax.f32 %v1583, 1e-09
        %v1585 = vsub.f32 %v1050, %v1048
        %v1586 = vand.u32 2147483647, %v1585
        %v1587 = vsub.f32 0.5, %v1586
        %v1588 = vmul.f32 %v1587, %v1053
        %v1589 = verf.f32.pop %v1588
        %v1590 = vsub.f32 -0.5, %v1586
        %v1591 = vmul.f32 %v1590, %v1053
        %v1592 = verf.f32.pop %v1591
        %v1593 = vsub.f32 %v1589, %v1592
        %v1594 = vmul.f32 %v1593, 0.5
        %v1595 = vmax.f32 %v1594, 1e-09
        %v1596 = vmul.f32 %v1317, %v1584
        %v1597 = vmul.f32 %v1581, %v1595
        %v1598 = vmul.f32 %v1596, %v1597
        %v1599 = vlog2.pop %v1598
        %v1600 = vmul.f32 %v1599, 0.6931472
        %v1601 = vmul.f32 %v1600, %v1045
        %v1602 = vsub.f32 0.0, %v1601
        %v1603 = vld [vmem:[%s448] sm:$0x1]
        %vm1604 = vcmask 1041408
        %v1605 = vsel %vm1604, %v1047, 0.0
        %v1606 = vrot.slane %v1605, 4
        %v1607 = vadd.f32 %v1605, %v1606
        %v1608 = vrot.slane %v1607, 2
        %v1609 = vadd.f32 %v1607, %v1608
        %v1610 = vrot.slane %v1609, 1
        %v1611 = vadd.f32 %v1609, %v1610
        %v1612 = vadd.f32 %v1603, %v1611
        %1613 = vst [vmem:[%s448] sm:$0x1] %v1612
        %v1614 = vld [vmem:[%s455] sm:$0x1]
        %v1615 = vsel %vm1604, %v1602, 0.0
        %v1616 = vrot.slane %v1615, 4
        %v1617 = vadd.f32 %v1615, %v1616
        %v1618 = vrot.slane %v1617, 2
        %v1619 = vadd.f32 %v1617, %v1618
        %v1620 = vrot.slane %v1619, 1
        %v1621 = vadd.f32 %v1619, %v1620
        %v1622 = vadd.f32 %v1614, %v1621
        %1623 = vst [vmem:[%s455] sm:$0x1] %v1622
        %s1624 = sadd.s32 %s27, %s28
        %p1625 = scmp.lt.s32.totalorder %s26, 1
        %s1626 = scalar_select %p1625, %s26, 1
        %p1627 = scmp.lt.s32.totalorder %s1624, 0
        %s1628 = scalar_select %p1627, %s1624, 0
        %s1629 = smul.addr %s1626, 2
        %s1630 = sadd.s32 %s1628, %s1629
        %s1631 = smul.addr %s1630, 2
        %s1632 = scalar_lea.vmem %s4, %s1631
        %s1633 = sadd.s32 %s27, %s28
        %p1634 = scmp.lt.s32.totalorder %s26, 1
        %s1635 = scalar_select %p1634, %s26, 1
        %p1636 = scmp.lt.s32.totalorder %s1633, 0
        %s1637 = scalar_select %p1636, %s1633, 0
        %s1638 = smul.addr %s1635, 2
        %s1639 = sadd.s32 %s1637, %s1638
        %s1640 = smul.addr %s1639, 2
        %s1641 = scalar_lea.vmem %s5, %s1640
        %p1642 = scmp.lt.s32.totalorder %s26, 1
        %s1643 = scalar_select %p1642, %s26, 1
        %p1644 = scmp.lt.s32.totalorder %s27, 0
        %s1645 = scalar_select %p1644, %s27, 0
        %s1646 = sadd.s32 %s1645, %s1643
        %s1647 = smul.addr %s1646, 8
        %s1648 = scalar_lea.vmem %s6, %s1647
        %p1649 = scmp.lt.s32.totalorder %s26, 1
        %s1650 = scalar_select %p1649, %s26, 1
        %p1651 = scmp.lt.s32.totalorder %s27, 0
        %s1652 = scalar_select %p1651, %s27, 0
        %s1653 = sadd.s32 %s1652, %s1650
        %s1654 = smul.addr %s1653, 8
        %s1655 = scalar_lea.vmem %s7, %s1654
        // Predicated region
        $region49: #{compressor_forward.1} parent=35 // pred_check
          %p1656 = pneg %p164
        $region50: #{compressor_forward.1} parent=35 // pred_check_branch
          %1658 = sbr.rel (%p1656) target = $region52
        $region51: #{compressor_forward.1} parent=35 // pred_region
          %s1659 = sadd.s32 %s27, %s28
        $region52: #{compressor_forward.1} parent=35 // pred_fallthru
          _
        // Predicated region
        $region53: #{compressor_forward.1} parent=35 // pred_check
          %p1660 = pneg %p194
        $region54: #{compressor_forward.1} parent=35 // pred_check_branch
          %1662 = sbr.rel (%p1660) target = $region56
        $region55: #{compressor_forward.1} parent=35 // pred_region
          %s1663 = sadd.s32 %s27, %s28
        $region56: #{compressor_forward.1} parent=35 // pred_fallthru
          _
        // Predicated region
        $region57: #{compressor_forward.1} parent=35 // pred_check
          %p1664 = pneg %p222
        $region58: #{compressor_forward.1} parent=35 // pred_check_branch
          %1666 = sbr.rel (%p1664) target = $region60
        $region59: #{compressor_forward.1} parent=35 // pred_region
          _
        $region60: #{compressor_forward.1} parent=35 // pred_fallthru
          _
        // Predicated region
        $region61: #{compressor_forward.1} parent=35 // pred_check
          %p1667 = pneg %p250
        $region62: #{compressor_forward.1} parent=35 // pred_check_branch
          %1669 = sbr.rel (%p1667) target = $region64
        $region63: #{compressor_forward.1} parent=35 // pred_region
          _
        $region64: #{compressor_forward.1} parent=35 // pred_fallthru
          _
      $region36: #{compressor_forward.1} parent=5 // pred_fallthru
        _
      %p1670 = scmp.le.s32.totalorder 2, %s16
      // Predicated region
      $region65: #{compressor_forward.1} parent=5 // pred_check
        %p1671 = pneg %p1670
      $region66: #{compressor_forward.1} parent=5 // pred_check_branch
        %1673 = sbr.rel (%p1671) target = $region68
      $region67: #{compressor_forward.1} parent=5 // pred_region
        %s1674 = ssub.s32 %s16, 2
        // Predicated region
        $region69: #{compressor_forward.1} parent=67 // pred_check
          %p1675 = pneg %p170
        $region70: #{compressor_forward.1} parent=67 // pred_check_branch
          %1677 = sbr.rel (%p1675) target = $region72
        $region71: #{compressor_forward.1} parent=67 // pred_region
          %s1678 = sadd.s32 %s30, %s31
          %p1679 = scmp.lt.s32.totalorder %s29, 1
          %s1680 = scalar_select %p1679, %s29, 1
          %p1681 = scmp.lt.s32.totalorder %s1678, 0
          %s1682 = scalar_select %p1681, %s1678, 0
          %s1683 = smul.addr %s1680, 2
          %s1684 = sadd.s32 %s1682, %s1683
          %s1685 = smul.addr %s1684, 2
          %s1686 = scalar_lea.vmem %s4, %s1685
        $region72: #{compressor_forward.1} parent=67 // pred_fallthru
          _
        // Predicated region
        $region73: #{compressor_forward.1} parent=67 // pred_check
          %p1687 = pneg %p200
        $region74: #{compressor_forward.1} parent=67 // pred_check_branch
          %1689 = sbr.rel (%p1687) target = $region76
        $region75: #{compressor_forward.1} parent=67 // pred_region
          %s1690 = sadd.s32 %s30, %s31
          %p1691 = scmp.lt.s32.totalorder %s29, 1
          %s1692 = scalar_select %p1691, %s29, 1
          %p1693 = scmp.lt.s32.totalorder %s1690, 0
          %s1694 = scalar_select %p1693, %s1690, 0
          %s1695 = smul.addr %s1692, 2
          %s1696 = sadd.s32 %s1694, %s1695
          %s1697 = smul.addr %s1696, 2
          %s1698 = scalar_lea.vmem %s5, %s1697
        $region76: #{compressor_forward.1} parent=67 // pred_fallthru
          _
        // Predicated region
        $region77: #{compressor_forward.1} parent=67 // pred_check
          %p1699 = pneg %p228
        $region78: #{compressor_forward.1} parent=67 // pred_check_branch
          %1701 = sbr.rel (%p1699) target = $region80
        $region79: #{compressor_forward.1} parent=67 // pred_region
          %p1702 = scmp.lt.s32.totalorder %s29, 1
          %s1703 = scalar_select %p1702, %s29, 1
          %p1704 = scmp.lt.s32.totalorder %s30, 0
          %s1705 = scalar_select %p1704, %s30, 0
          %s1706 = sadd.s32 %s1705, %s1703
          %s1707 = smul.addr %s1706, 8
          %s1708 = scalar_lea.vmem %s6, %s1707
        $region80: #{compressor_forward.1} parent=67 // pred_fallthru
          _
        // Predicated region
        $region81: #{compressor_forward.1} parent=67 // pred_check
          %p1709 = pneg %p256
        $region82: #{compressor_forward.1} parent=67 // pred_check_branch
          %1711 = sbr.rel (%p1709) target = $region84
        $region83: #{compressor_forward.1} parent=67 // pred_region
          %p1712 = scmp.lt.s32.totalorder %s29, 1
          %s1713 = scalar_select %p1712, %s29, 1
          %p1714 = scmp.lt.s32.totalorder %s30, 0
          %s1715 = scalar_select %p1714, %s30, 0
          %s1716 = sadd.s32 %s1715, %s1713
          %s1717 = smul.addr %s1716, 8
          %s1718 = scalar_lea.vmem %s7, %s1717
        $region84: #{compressor_forward.1} parent=67 // pred_fallthru
          _
      $region68: #{compressor_forward.1} parent=5 // pred_fallthru
        _
    $region6: #{compressor_forward.1} parent=1 // loop_footer
      %s20 = sadd.s32 1, %s16
    $region7: #{compressor_forward.1} parent=1 // loop_footer_branch
      %15 = sbr.rel target = $region3
    $region8: #{compressor_forward.1} parent=1 // loop_exit
      _
    %1719 = vsyncpa [#allocation3], 1
    %s1720 = scalar_lea.sflag [#allocation3], 1
    %1721 = vsyncpa %s1720, 1
    %1722 = vsyncpa [#allocation5], 1

</llo_original>
